<compile_context>
chip_gen: v6e
topology: v6e:2x2x1
jax: 0.10.0
libtpu: 0.0.40
codegen_flags: <defaults>
</compile_context>

<pallas_src>
import math
import functools

import jax
import jax.numpy as jnp
from jax import lax
from jax.experimental import pallas as pl
from jax.experimental.pallas import tpu as pltpu

TEMPERATURE = 0.07
BASE_TEMPERATURE = 0.07
MARGIN = 0.3
SCALE = 32.0
COS_M = math.cos(MARGIN)
SIN_M = math.sin(MARGIN)
TH = math.cos(math.pi - MARGIN)
MM = math.sin(math.pi - MARGIN) * MARGIN
EPS = 1e-12       # F.normalize eps
NEG_BIG = -1e30   # finite "-inf" so 0 * NEG_BIG stays finite


def _fused_kernel(cf_ref, pmask_ref, f1_ref, wt_ref, wrinv_ref, lab_ref,
                  loss_ref, acc_ref, *, num_classes):
    # ---------------- SupCon part (contrast_mode='all') ----------------
    x = cf_ref[...]                                          # [N, Dc] f32 (un-normalized)
    xn = x * lax.rsqrt(jnp.maximum(jnp.sum(x * x, axis=-1, keepdims=True), EPS * EPS))
    # anchor_dot_contrast = (xn @ xn.T) / temperature  (tiny NxN)
    logits = lax.dot_general(xn, xn, (((1,), (1,)), ((), ())),
                             preferred_element_type=jnp.float32) * (1.0 / TEMPERATURE)
    logits = logits - jnp.max(logits, axis=-1, keepdims=True)

    n = logits.shape[0]
    row = lax.broadcasted_iota(jnp.int32, (n, n), 0)
    col = lax.broadcasted_iota(jnp.int32, (n, n), 1)
    logits_mask = jnp.where(row == col, 0.0, 1.0)            # zero the diagonal
    pos_mask = pmask_ref[...] * logits_mask                  # [N, N] f32

    exp_logits = jnp.exp(logits) * logits_mask
    log_prob = logits - jnp.log(jnp.sum(exp_logits, axis=-1, keepdims=True))
    mean_log_prob_pos = (jnp.sum(pos_mask * log_prob, axis=-1, keepdims=True)
                         / jnp.sum(pos_mask, axis=-1, keepdims=True))     # [N, 1]
    loss1 = (-(TEMPERATURE / BASE_TEMPERATURE) / n) * jnp.sum(
        mean_log_prob_pos, axis=0, keepdims=True)                          # (1, 1)

    # ---------------- AAM-softmax head ----------------
    f = f1_ref[...]                                          # [B, D] f32
    fn = f * lax.rsqrt(jnp.maximum(jnp.sum(f * f, axis=-1, keepdims=True), EPS * EPS))
    # cosine = normalize(f1) @ normalize(weight).T as a transpose-free bf16 MXU
    # matmul with f32 accumulation; per-class inverse norm applied post-matmul.
    cosine = jnp.dot(fn.astype(jnp.bfloat16), wt_ref[...],
                     preferred_element_type=jnp.float32) * wrinv_ref[...]  # [B, Cpad]
    sine = jnp.sqrt(jnp.clip(1.0 - cosine * cosine, 0.0, 1.0))
    phi = cosine * COS_M - sine * SIN_M
    phi = jnp.where(cosine - TH > 0, phi, cosine - MM)

    b, c_pad = cosine.shape
    lab = lab_ref[...]                                       # [B, 1] int32
    ccol = lax.broadcasted_iota(jnp.int32, (b, c_pad), 1)
    one_hot = (ccol == lab).astype(jnp.float32)
    output = (one_hot * phi + (1.0 - one_hot) * cosine) * SCALE
    output = jnp.where(ccol < num_classes, output, NEG_BIG)  # kill padded classes

    # cross entropy (mean reduction)
    zmax = jnp.max(output, axis=-1, keepdims=True)
    z = output - zmax
    lse = jnp.log(jnp.sum(jnp.exp(z), axis=-1, keepdims=True))
    nll = jnp.sum(one_hot * (lse - z), axis=-1, keepdims=True)            # [B, 1]
    loss2 = jnp.sum(nll, axis=0, keepdims=True) * (1.0 / b)               # (1, 1)

    # top-1 accuracy in percent (first index achieving the max, like topk)
    is_max = output == zmax
    pred = jnp.min(jnp.where(is_max, ccol, c_pad), axis=-1, keepdims=True)
    correct = (pred == lab).astype(jnp.float32)                           # [B, 1]
    acc = jnp.sum(correct, axis=0, keepdims=True) * (100.0 / b)           # (1, 1)

    loss_ref[...] = loss1 + loss2
    acc_ref[...] = acc


def supcon_loss_forward(f1, f2, features, labels, weight, w_param):
    """Mirrors SupConLoss.forward (contrast_mode='all', labels supplied).

    Returns (loss, prec1) just like the PyTorch module."""
    del f2  # unused by the reference forward
    bsz, n_views, _ = features.shape
    # torch.cat(torch.unbind(features, dim=1), dim=0) -> view-major flatten
    contrast_feature = jnp.concatenate(
        [features[:, v, :] for v in range(n_views)], axis=0).astype(jnp.float32)
    n = n_views * bsz
    # Positive-pair mask: mask.repeat(anchor_count, contrast_count) of (label==label.T)
    lab_tiled = jnp.tile(labels.astype(jnp.int32), n_views)                # [N]
    pos_mask = (lab_tiled[:, None] == lab_tiled[None, :]).astype(jnp.float32)  # [N, N]

    num_classes, _ = weight.shape
    c_pad = ((num_classes + 127) // 128) * 128               # 2793 -> 2816 (lane-dense)

    w_f32 = weight.astype(jnp.float32)
    # Per-class inverse norms in full f32 precision (F.normalize semantics).
    w_rinv = 1.0 / jnp.maximum(jnp.sqrt(jnp.sum(w_f32 * w_f32, axis=-1)), EPS)
    w_rinv = jnp.pad(w_rinv.reshape(1, num_classes), ((0, 0), (0, c_pad - num_classes)))
    # Pre-transposed, class-padded, bf16 weight: [D, Cpad] (halves the dominant DMA).
    w_t = jnp.pad(weight.astype(jnp.bfloat16).T, ((0, 0), (0, c_pad - num_classes)))

    kernel = functools.partial(_fused_kernel, num_classes=num_classes)
    loss, prec1 = pl.pallas_call(
        kernel,
        out_shape=(
            jax.ShapeDtypeStruct((1, 1), jnp.float32),
            jax.ShapeDtypeStruct((1, 1), jnp.float32),
        ),
        in_specs=[pl.BlockSpec(memory_space=pltpu.MemorySpace.VMEM)] * 6,
        out_specs=(
            pl.BlockSpec(memory_space=pltpu.MemorySpace.VMEM),
            pl.BlockSpec(memory_space=pltpu.MemorySpace.VMEM),
        ),
    )(contrast_feature, pos_mask,
      f1.astype(jnp.float32), w_t, w_rinv,
      labels.astype(jnp.int32).reshape(-1, 1))

    # w1, w2 are computed in the PyTorch forward but never used in the returned loss.
    ew = jnp.exp(w_param)
    _w1 = ew[0] / jnp.sum(ew)
    _w2 = ew[1] / jnp.sum(ew)

    return loss[0, 0], prec1[0, 0]


if __name__ == "__main__":
    key = jax.random.PRNGKey(0)
    k_f1, k_f2, k_feat, k_lab, k_w = jax.random.split(key, 5)

    bsz, n_views, feat_dim = 8, 2, 32
    num_classes, emb_dim = 2793, 192      # fixed by the module's weight parameter

    f1 = jax.random.normal(k_f1, (bsz, emb_dim), dtype=jnp.float32)
    f2 = jax.random.normal(k_f2, (bsz, emb_dim), dtype=jnp.float32)
    features = jax.random.normal(k_feat, (bsz, n_views, feat_dim), dtype=jnp.float32)
    labels = jax.random.randint(k_lab, (bsz,), 0, num_classes, dtype=jnp.int32)

    # xavier_normal_(weight, gain=1): std = sqrt(2 / (fan_in + fan_out))
    xavier_std = math.sqrt(2.0 / (num_classes + emb_dim))
    weight = xavier_std * jax.random.normal(k_w, (num_classes, emb_dim), dtype=jnp.float32)
    w_param = jnp.ones((2,), dtype=jnp.float32)

    loss, prec1 = supcon_loss_forward(f1, f2, features, labels, weight, w_param)
    jax.block_until_ready((loss, prec1))
    assert jnp.isfinite(loss) and jnp.isfinite(prec1)
    print("KERNEL_OK")
</pallas_src>

<mosaic_0001>
module attributes {stable_mosaic.version = 11 : i64} {
  func.func @_fused_kernel(%arg0: memref<16x32xf32, #tpu.memory_space<vmem>>, %arg1: memref<16x16xf32, #tpu.memory_space<vmem>>, %arg2: memref<8x192xf32, #tpu.memory_space<vmem>>, %arg3: memref<192x2816xbf16, #tpu.memory_space<vmem>>, %arg4: memref<1x2816xf32, #tpu.memory_space<vmem>>, %arg5: memref<8x1xi32, #tpu.memory_space<vmem>>, %arg6: memref<1x1xf32, #tpu.memory_space<vmem>>, %arg7: memref<1x1xf32, #tpu.memory_space<vmem>>) attributes {dimension_semantics = [], scalar_prefetch = 0 : i64, scratch_operands = 0 : i64, tpu.core_type = #tpu.core_type<tc>} {
    %c0 = arith.constant 0 : index
    %c0_0 = arith.constant 0 : index
    %0 = vector.load %arg0[%c0, %c0_0] : memref<16x32xf32, #tpu.memory_space<vmem>>, vector<16x32xf32>
    %1 = arith.mulf %0, %0 : vector<16x32xf32>
    %cst = arith.constant dense<0.000000e+00> : vector<16xf32>
    %2 = vector.multi_reduction <add>, %1, %cst [1] : vector<16x32xf32> to vector<16xf32>
    %3 = vector.shape_cast %2 : vector<16xf32> to vector<16x1xf32>
    %cst_1 = arith.constant 1.000000e-24 : f32
    %4 = vector.broadcast %cst_1 : f32 to vector<16x1xf32>
    %5 = arith.maximumf %3, %4 : vector<16x1xf32>
    %6 = math.rsqrt %5 : vector<16x1xf32>
    %7 = vector.broadcast %6 : vector<16x1xf32> to vector<16x32xf32>
    %8 = arith.mulf %0, %7 : vector<16x32xf32>
    %cst_2 = arith.constant dense<0.000000e+00> : vector<16x16xf32>
    %9 = tpu.matmul %8, %8, %cst_2 {dimension_numbers = #tpu.dot_dimension_numbers<[1], [1], [0], [0], [0, 0, 1, 0], [], []>} : vector<16x32xf32>, vector<16x32xf32>, vector<16x16xf32> -> vector<16x16xf32>
    %cst_3 = arith.constant 14.2857141 : f32
    %10 = vector.broadcast %cst_3 : f32 to vector<16x16xf32>
    %11 = arith.mulf %9, %10 : vector<16x16xf32>
    %cst_4 = arith.constant dense<0xFF800000> : vector<16xf32>
    %12 = vector.multi_reduction <maximumf>, %11, %cst_4 [1] : vector<16x16xf32> to vector<16xf32>
    %13 = vector.shape_cast %12 : vector<16xf32> to vector<16x1xf32>
    %14 = vector.broadcast %13 : vector<16x1xf32> to vector<16x16xf32>
    %15 = arith.subf %11, %14 : vector<16x16xf32>
    %16 = tpu.iota {dimensions = array<i32: 0>} : vector<16x16xi32>
    %17 = tpu.iota {dimensions = array<i32: 1>} : vector<16x16xi32>
    %18 = arith.cmpi eq, %16, %17 : vector<16x16xi32>
    %cst_5 = arith.constant 0.000000e+00 : f32
    %cst_6 = arith.constant 1.000000e+00 : f32
    %19 = vector.broadcast %cst_5 : f32 to vector<16x16xf32>
    %20 = vector.broadcast %cst_6 : f32 to vector<16x16xf32>
    %21 = arith.select %18, %19, %20 : vector<16x16xi1>, vector<16x16xf32>
    %c0_7 = arith.constant 0 : index
    %c0_8 = arith.constant 0 : index
    %22 = vector.load %arg1[%c0_7, %c0_8] : memref<16x16xf32, #tpu.memory_space<vmem>>, vector<16x16xf32>
    %23 = arith.mulf %22, %21 : vector<16x16xf32>
    %24 = math.exp %15 : vector<16x16xf32>
    %25 = arith.mulf %24, %21 : vector<16x16xf32>
    %cst_9 = arith.constant dense<0.000000e+00> : vector<16xf32>
    %26 = vector.multi_reduction <add>, %25, %cst_9 [1] : vector<16x16xf32> to vector<16xf32>
    %27 = vector.shape_cast %26 : vector<16xf32> to vector<16x1xf32>
    %28 = math.log %27 : vector<16x1xf32>
    %29 = vector.broadcast %28 : vector<16x1xf32> to vector<16x16xf32>
    %30 = arith.subf %15, %29 : vector<16x16xf32>
    %31 = arith.mulf %23, %30 : vector<16x16xf32>
    %cst_10 = arith.constant dense<0.000000e+00> : vector<16xf32>
    %32 = vector.multi_reduction <add>, %31, %cst_10 [1] : vector<16x16xf32> to vector<16xf32>
    %33 = vector.shape_cast %32 : vector<16xf32> to vector<16x1xf32>
    %cst_11 = arith.constant dense<0.000000e+00> : vector<16xf32>
    %34 = vector.multi_reduction <add>, %23, %cst_11 [1] : vector<16x16xf32> to vector<16xf32>
    %35 = vector.shape_cast %34 : vector<16xf32> to vector<16x1xf32>
    %36 = arith.divf %33, %35 : vector<16x1xf32>
    %cst_12 = arith.constant dense<0.000000e+00> : vector<1xf32>
    %37 = vector.multi_reduction <add>, %36, %cst_12 [0] : vector<16x1xf32> to vector<1xf32>
    %38 = vector.shape_cast %37 : vector<1xf32> to vector<1x1xf32>
    %cst_13 = arith.constant -6.250000e-02 : f32
    %39 = vector.broadcast %cst_13 : f32 to vector<1x1xf32>
    %40 = arith.mulf %39, %38 : vector<1x1xf32>
    %c0_14 = arith.constant 0 : index
    %c0_15 = arith.constant 0 : index
    %41 = vector.load %arg2[%c0_14, %c0_15] : memref<8x192xf32, #tpu.memory_space<vmem>>, vector<8x192xf32>
    %42 = arith.mulf %41, %41 : vector<8x192xf32>
    %cst_16 = arith.constant dense<0.000000e+00> : vector<8xf32>
    %43 = vector.multi_reduction <add>, %42, %cst_16 [1] : vector<8x192xf32> to vector<8xf32>
    %44 = vector.shape_cast %43 : vector<8xf32> to vector<8x1xf32>
    %cst_17 = arith.constant 1.000000e-24 : f32
    %45 = vector.broadcast %cst_17 : f32 to vector<8x1xf32>
    %46 = arith.maximumf %44, %45 : vector<8x1xf32>
    %47 = math.rsqrt %46 : vector<8x1xf32>
    %48 = vector.broadcast %47 : vector<8x1xf32> to vector<8x192xf32>
    %49 = arith.mulf %41, %48 : vector<8x192xf32>
    %50 = arith.truncf %49 : vector<8x192xf32> to vector<8x192xbf16>
    %c0_18 = arith.constant 0 : index
    %c0_19 = arith.constant 0 : index
    %51 = vector.load %arg3[%c0_18, %c0_19] : memref<192x2816xbf16, #tpu.memory_space<vmem>>, vector<192x2816xbf16>
    %cst_20 = arith.constant dense<0.000000e+00> : vector<8x2816xf32>
    %52 = tpu.matmul %50, %51, %cst_20 {dimension_numbers = #tpu.dot_dimension_numbers<[1], [0], [0], [1], [0, 0, 1, 1], [], []>} : vector<8x192xbf16>, vector<192x2816xbf16>, vector<8x2816xf32> -> vector<8x2816xf32>
    %c0_21 = arith.constant 0 : index
    %c0_22 = arith.constant 0 : index
    %53 = vector.load %arg4[%c0_21, %c0_22] : memref<1x2816xf32, #tpu.memory_space<vmem>>, vector<1x2816xf32>
    %54 = vector.broadcast %53 : vector<1x2816xf32> to vector<8x2816xf32>
    %55 = arith.mulf %52, %54 : vector<8x2816xf32>
    %56 = arith.mulf %55, %55 : vector<8x2816xf32>
    %cst_23 = arith.constant 1.000000e+00 : f32
    %57 = vector.broadcast %cst_23 : f32 to vector<8x2816xf32>
    %58 = arith.subf %57, %56 : vector<8x2816xf32>
    %cst_24 = arith.constant 0.000000e+00 : f32
    %cst_25 = arith.constant 1.000000e+00 : f32
    %59 = vector.broadcast %cst_24 : f32 to vector<8x2816xf32>
    %60 = arith.maximumf %59, %58 : vector<8x2816xf32>
    %61 = vector.broadcast %cst_25 : f32 to vector<8x2816xf32>
    %62 = arith.minimumf %61, %60 : vector<8x2816xf32>
    %63 = math.sqrt %62 : vector<8x2816xf32>
    %cst_26 = arith.constant 0.955336511 : f32
    %64 = vector.broadcast %cst_26 : f32 to vector<8x2816xf32>
    %65 = arith.mulf %55, %64 : vector<8x2816xf32>
    %cst_27 = arith.constant 0.295520216 : f32
    %66 = vector.broadcast %cst_27 : f32 to vector<8x2816xf32>
    %67 = arith.mulf %63, %66 : vector<8x2816xf32>
    %68 = arith.subf %65, %67 : vector<8x2816xf32>
    %cst_28 = arith.constant -0.955336511 : f32
    %69 = vector.broadcast %cst_28 : f32 to vector<8x2816xf32>
    %70 = arith.subf %55, %69 : vector<8x2816xf32>
    %cst_29 = arith.constant 0.000000e+00 : f32
    %71 = vector.broadcast %cst_29 : f32 to vector<8x2816xf32>
    %72 = arith.cmpf ogt, %70, %71 : vector<8x2816xf32>
    %cst_30 = arith.constant 0.0886560603 : f32
    %73 = vector.broadcast %cst_30 : f32 to vector<8x2816xf32>
    %74 = arith.subf %55, %73 : vector<8x2816xf32>
    %75 = arith.select %72, %68, %74 : vector<8x2816xi1>, vector<8x2816xf32>
    %c0_31 = arith.constant 0 : index
    %c0_32 = arith.constant 0 : index
    %76 = vector.load %arg5[%c0_31, %c0_32] : memref<8x1xi32, #tpu.memory_space<vmem>>, vector<8x1xi32>
    %77 = tpu.iota {dimensions = array<i32: 1>} : vector<8x2816xi32>
    %78 = vector.broadcast %76 : vector<8x1xi32> to vector<8x2816xi32>
    %79 = arith.cmpi eq, %77, %78 : vector<8x2816xi32>
    %80 = arith.extui %79 : vector<8x2816xi1> to vector<8x2816xi32>
    %81 = arith.sitofp %80 : vector<8x2816xi32> to vector<8x2816xf32>
    %82 = arith.mulf %81, %75 : vector<8x2816xf32>
    %cst_33 = arith.constant 1.000000e+00 : f32
    %83 = vector.broadcast %cst_33 : f32 to vector<8x2816xf32>
    %84 = arith.subf %83, %81 : vector<8x2816xf32>
    %85 = arith.mulf %84, %55 : vector<8x2816xf32>
    %86 = arith.addf %82, %85 : vector<8x2816xf32>
    %cst_34 = arith.constant 3.200000e+01 : f32
    %87 = vector.broadcast %cst_34 : f32 to vector<8x2816xf32>
    %88 = arith.mulf %86, %87 : vector<8x2816xf32>
    %c2793_i32 = arith.constant 2793 : i32
    %89 = vector.broadcast %c2793_i32 : i32 to vector<8x2816xi32>
    %90 = arith.cmpi slt, %77, %89 : vector<8x2816xi32>
    %cst_35 = arith.constant -1.000000e+30 : f32
    %91 = vector.broadcast %cst_35 : f32 to vector<8x2816xf32>
    %92 = arith.select %90, %88, %91 : vector<8x2816xi1>, vector<8x2816xf32>
    %cst_36 = arith.constant dense<0xFF800000> : vector<8xf32>
    %93 = vector.multi_reduction <maximumf>, %92, %cst_36 [1] : vector<8x2816xf32> to vector<8xf32>
    %94 = vector.shape_cast %93 : vector<8xf32> to vector<8x1xf32>
    %95 = vector.broadcast %94 : vector<8x1xf32> to vector<8x2816xf32>
    %96 = arith.subf %92, %95 : vector<8x2816xf32>
    %97 = math.exp %96 : vector<8x2816xf32>
    %cst_37 = arith.constant dense<0.000000e+00> : vector<8xf32>
    %98 = vector.multi_reduction <add>, %97, %cst_37 [1] : vector<8x2816xf32> to vector<8xf32>
    %99 = vector.shape_cast %98 : vector<8xf32> to vector<8x1xf32>
    %100 = math.log %99 : vector<8x1xf32>
    %101 = vector.broadcast %100 : vector<8x1xf32> to vector<8x2816xf32>
    %102 = arith.subf %101, %96 : vector<8x2816xf32>
    %103 = arith.mulf %81, %102 : vector<8x2816xf32>
    %cst_38 = arith.constant dense<0.000000e+00> : vector<8xf32>
    %104 = vector.multi_reduction <add>, %103, %cst_38 [1] : vector<8x2816xf32> to vector<8xf32>
    %105 = vector.shape_cast %104 : vector<8xf32> to vector<8x1xf32>
    %cst_39 = arith.constant dense<0.000000e+00> : vector<1xf32>
    %106 = vector.multi_reduction <add>, %105, %cst_39 [0] : vector<8x1xf32> to vector<1xf32>
    %107 = vector.shape_cast %106 : vector<1xf32> to vector<1x1xf32>
    %cst_40 = arith.constant 1.250000e-01 : f32
    %108 = vector.broadcast %cst_40 : f32 to vector<1x1xf32>
    %109 = arith.mulf %107, %108 : vector<1x1xf32>
    %110 = vector.broadcast %94 : vector<8x1xf32> to vector<8x2816xf32>
    %111 = arith.cmpf oeq, %92, %110 : vector<8x2816xf32>
    %c2816_i32 = arith.constant 2816 : i32
    %112 = vector.broadcast %c2816_i32 : i32 to vector<8x2816xi32>
    %113 = arith.select %111, %77, %112 : vector<8x2816xi1>, vector<8x2816xi32>
    %cst_41 = arith.constant dense<2147483647> : vector<8xi32>
    %114 = vector.multi_reduction <minsi>, %113, %cst_41 [1] : vector<8x2816xi32> to vector<8xi32>
    %115 = vector.shape_cast %114 : vector<8xi32> to vector<8x1xi32>
    %116 = arith.cmpi eq, %115, %76 : vector<8x1xi32>
    %117 = arith.extui %116 : vector<8x1xi1> to vector<8x1xi32>
    %118 = arith.sitofp %117 : vector<8x1xi32> to vector<8x1xf32>
    %cst_42 = arith.constant dense<0.000000e+00> : vector<1xf32>
    %119 = vector.multi_reduction <add>, %118, %cst_42 [0] : vector<8x1xf32> to vector<1xf32>
    %120 = vector.shape_cast %119 : vector<1xf32> to vector<1x1xf32>
    %cst_43 = arith.constant 1.250000e+01 : f32
    %121 = vector.broadcast %cst_43 : f32 to vector<1x1xf32>
    %122 = arith.mulf %120, %121 : vector<1x1xf32>
    %123 = arith.addf %40, %109 : vector<1x1xf32>
    %c0_44 = arith.constant 0 : index
    %c0_45 = arith.constant 0 : index
    %124 = vector.load %arg6[%c0_44, %c0_45] : memref<1x1xf32, #tpu.memory_space<vmem>>, vector<1x1xf32>
    tpu.vector_store %arg6[%c0_44, %c0_45], %123 {strides = array<i32>} : memref<1x1xf32, #tpu.memory_space<vmem>>, vector<1x1xf32>,
    %c0_46 = arith.constant 0 : index
    %c0_47 = arith.constant 0 : index
    %125 = vector.load %arg7[%c0_46, %c0_47] : memref<1x1xf32, #tpu.memory_space<vmem>>, vector<1x1xf32>
    tpu.vector_store %arg7[%c0_46, %c0_47], %122 {strides = array<i32>} : memref<1x1xf32, #tpu.memory_space<vmem>>, vector<1x1xf32>,
    return
  }
}

</mosaic_0001>

<llo_original>
// kernel: tpu_custom_call.1
$region0: #{tpu_custom_call.1}
  #allocation0 [shape = 'u32[]', space=smem, size = 0x4, offset = 0x4, fixed_abs, tag = 'smem constant byte address 0x4 - core index']
  #allocation1 [shape = 'u32[144,128]{1,0:T(1,128)}', space=vmem, size = 0x12000, scoped, tag = 'internal scratch']
  %s0 = inlined_call_operand.hbm [shape: f32[16,32], index: 0, kind: input, shape index: {}]
  %s1 = inlined_call_operand.hbm [shape: f32[16,16], index: 1, kind: input, shape index: {}]
  %s2 = inlined_call_operand.hbm [shape: f32[8,192], index: 2, kind: input, shape index: {}]
  %s3 = inlined_call_operand.hbm [shape: bf16[192,2816], index: 3, kind: input, shape index: {}]
  %s4 = inlined_call_operand.hbm [shape: f32[1,2816], index: 4, kind: input, shape index: {}]
  %s5 = inlined_call_operand.vmem [shape: s32[8,1], index: 5, kind: input, shape index: {}]
  %s6 = inlined_call_operand.hbm [shape: f32[1,1], index: 6, kind: output, shape index: {0}]
  %s7 = inlined_call_operand.hbm [shape: f32[1,1], index: 7, kind: output, shape index: {1}]
  %8 = xla_tuple %s6, %s7
  %s9 = sld [smem:[#allocation0]]
  $region62: #{tpu_custom_call.1} parent=0
    _
  %s11 = ssub.s32 1, %s9
  %s12 = scalar_select 0, %s11, %s9
  $region1: #{tpu_custom_call.1} parent=0
    #allocation2 [shape = 'u8[8192]{0}', space=vmem, size = 0x2000, scoped, tag = 'input window, operand 0, single buffered']
    #allocation3 [shape = 's32[1]{0}', space=sflag, size = 0x4, scoped, tag = 'scoped memory for tpu_custom_call.1']
    #allocation4 [shape = 's32[1]{0}', space=sflag, size = 0x4, scoped, tag = 'scoped memory for tpu_custom_call.1']
    #allocation5 [shape = 'u8[8192]{0}', space=vmem, size = 0x2000, scoped, tag = 'input window, operand 1, single buffered']
    #allocation6 [shape = 's32[1]{0}', space=sflag, size = 0x4, scoped, tag = 'scoped memory for tpu_custom_call.1']
    #allocation7 [shape = 'u8[8192]{0}', space=vmem, size = 0x2000, scoped, tag = 'input window, operand 2, single buffered']
    #allocation8 [shape = 'u8[1081344]{0}', space=vmem, size = 0x108000, scoped, tag = 'input window, operand 3, single buffered']
    #allocation9 [shape = 's32[1]{0}', space=sflag, size = 0x4, scoped, tag = 'scoped memory for tpu_custom_call.1']
    #allocation10 [shape = 'u8[11264]{0}', space=vmem, size = 0x2c00, scoped, tag = 'input window, operand 4, single buffered']
    #allocation11 [shape = 'u8[512]{0}', space=vmem, size = 0x400, scoped, tag = 'output window, operand 0, single buffered']
    #allocation12 [shape = 'u8[512]{0}', space=vmem, size = 0x400, scoped, tag = 'output window, operand 1, single buffered']
    #allocation13 [shape = 's32[1]{0}', space=sflag, size = 0x4, scoped, tag = 'scoped memory for tpu_custom_call.1']
    %13 = vsyncpa [#allocation3], 0
    %14 = vsyncpa [#allocation6], 0
    %15 = vsyncpa [#allocation9], 0
    %16 = vsyncpa [#allocation4], 0
    %17 = vsyncpa [#allocation13], 0
    // Predicated region
    $region2: #{tpu_custom_call.1} parent=1 // pred_check
      _
    $region3: #{tpu_custom_call.1} parent=1 // pred_check_branch
      %19 = sbr.rel (0) target = $region5
    $region4: #{tpu_custom_call.1} parent=1 // pred_region
      %s21 = ssub.s32 256, 256
      %22 = vsyncadd [#allocation3], %s21
      %s23 = sshll.u32 [#allocation2], 4
      %s24 = int_to_ptr.vmem [resolvable:$true] %s23
      %29 = dma.hbm_to_vmem [thread:$0]  %s0, 256, %s24, [#allocation3], 128, 128, 8
    $region5: #{tpu_custom_call.1} parent=1 // pred_fallthru
      _
    // Predicated region
    $region6: #{tpu_custom_call.1} parent=1 // pred_check
      _
    $region7: #{tpu_custom_call.1} parent=1 // pred_check_branch
      %31 = sbr.rel (0) target = $region9
    $region8: #{tpu_custom_call.1} parent=1 // pred_region
      %s33 = ssub.s32 256, 256
      %34 = vsyncadd [#allocation6], %s33
      %s35 = sshll.u32 [#allocation5], 4
      %s36 = int_to_ptr.vmem [resolvable:$true] %s35
      %41 = dma.hbm_to_vmem [thread:$0]  %s1, 256, %s36, [#allocation6], 128, 128, 8
    $region9: #{tpu_custom_call.1} parent=1 // pred_fallthru
      _
    // Predicated region
    $region10: #{tpu_custom_call.1} parent=1 // pred_check
      _
    $region11: #{tpu_custom_call.1} parent=1 // pred_check_branch
      %43 = sbr.rel (0) target = $region13
    $region12: #{tpu_custom_call.1} parent=1 // pred_region
      %s45 = ssub.s32 256, 256
      %46 = vsyncadd [#allocation6], %s45
      %s48 = sshll.u32 [#allocation7], 4
      %s49 = int_to_ptr.vmem [resolvable:$true] %s48
      %51 = dma.hbm_to_vmem [thread:$0]  %s2, 256, %s49, [#allocation6]
    $region13: #{tpu_custom_call.1} parent=1 // pred_fallthru
      _
    // Predicated region
    $region14: #{tpu_custom_call.1} parent=1 // pred_check
      _
    $region15: #{tpu_custom_call.1} parent=1 // pred_check_branch
      %53 = sbr.rel (0) target = $region17
    $region16: #{tpu_custom_call.1} parent=1 // pred_region
      %s55 = ssub.s32 33792, 33792
      %56 = vsyncadd [#allocation9], %s55
      %s57 = sshll.u32 [#allocation8], 4
      %s58 = int_to_ptr.vmem [resolvable:$true] %s57
      %63 = dma.hbm_to_vmem [thread:$0]  %s3, 33792, %s58, [#allocation9], 1408, 1408, 88
    $region17: #{tpu_custom_call.1} parent=1 // pred_fallthru
      _
    // Predicated region
    $region18: #{tpu_custom_call.1} parent=1 // pred_check
      _
    $region19: #{tpu_custom_call.1} parent=1 // pred_check_branch
      %65 = sbr.rel (0) target = $region21
    $region20: #{tpu_custom_call.1} parent=1 // pred_region
      %s67 = ssub.s32 352, 352
      %68 = vsyncadd [#allocation9], %s67
      %s70 = sshll.u32 [#allocation10], 4
      %s71 = int_to_ptr.vmem [resolvable:$true] %s70
      %73 = dma.hbm_to_vmem [thread:$0]  %s4, 352, %s71, [#allocation9]
    $region21: #{tpu_custom_call.1} parent=1 // pred_fallthru
      _
    // Predicated region
    $region22: #{tpu_custom_call.1} parent=1 // pred_check
      _
    $region23: #{tpu_custom_call.1} parent=1 // pred_check_branch
      %75 = sbr.rel (0) target = $region25
    $region24: #{tpu_custom_call.1} parent=1 // pred_region
      _
    $region25: #{tpu_custom_call.1} parent=1 // pred_fallthru
      _
    // Predicated region
    $region26: #{tpu_custom_call.1} parent=1 // pred_check
      _
    $region27: #{tpu_custom_call.1} parent=1 // pred_check_branch
      %77 = sbr.rel (0) target = $region29
    $region28: #{tpu_custom_call.1} parent=1 // pred_region
      %78 = dma.done [#allocation3], 256
    $region29: #{tpu_custom_call.1} parent=1 // pred_fallthru
      _
    // Predicated region
    $region30: #{tpu_custom_call.1} parent=1 // pred_check
      _
    $region31: #{tpu_custom_call.1} parent=1 // pred_check_branch
      %80 = sbr.rel (0) target = $region33
    $region32: #{tpu_custom_call.1} parent=1 // pred_region
      %81 = dma.done [#allocation6], 256
    $region33: #{tpu_custom_call.1} parent=1 // pred_fallthru
      _
    // Predicated region
    $region34: #{tpu_custom_call.1} parent=1 // pred_check
      _
    $region35: #{tpu_custom_call.1} parent=1 // pred_check_branch
      %83 = sbr.rel (0) target = $region37
    $region36: #{tpu_custom_call.1} parent=1 // pred_region
      %84 = dma.done [#allocation6], 256
    $region37: #{tpu_custom_call.1} parent=1 // pred_fallthru
      _
    // Predicated region
    $region38: #{tpu_custom_call.1} parent=1 // pred_check
      _
    $region39: #{tpu_custom_call.1} parent=1 // pred_check_branch
      %86 = sbr.rel (0) target = $region41
    $region40: #{tpu_custom_call.1} parent=1 // pred_region
      %87 = dma.done [#allocation9], 33792
    $region41: #{tpu_custom_call.1} parent=1 // pred_fallthru
      _
    // Predicated region
    $region42: #{tpu_custom_call.1} parent=1 // pred_check
      _
    $region43: #{tpu_custom_call.1} parent=1 // pred_check_branch
      %89 = sbr.rel (0) target = $region45
    $region44: #{tpu_custom_call.1} parent=1 // pred_region
      %90 = dma.done [#allocation9], 352
    $region45: #{tpu_custom_call.1} parent=1 // pred_fallthru
      _
    %v92 = vld [vmem:[#allocation2] sm:$0xff]
    %v93 = vld [vmem:[#allocation2 + $0x8] sm:$0xff]
    %v94 = vmul.f32 %v92, %v92
    %v95 = vmul.f32 %v93, %v93
    %vm96 = vcmask 261120
    %v97 = vsel %vm96, %v94, 0.0
    %98 = vadd.xlane.f32.xlu0 %v97
    %v99 = vpop.xlane.xlu0 %98
    %v100 = vsel %vm96, %v95, 0.0
    %101 = vadd.xlane.f32.xlu0 %v100
    %v102 = vpop.xlane.xlu0 %101
    %v103 = vmax.f32 %v99, 1e-24
    %v104 = vmax.f32 %v102, 1e-24
    %v105 = vrsqrt.pop %v103
    %v106 = vrsqrt.pop %v104
    %v107 = vmul.f32 %v92, %v105
    %v108 = vmul.f32 %v93, %v106
    %v110 = vsel %vm96, %v107, 0
    %v113 = vsel %vm96, %v108, 0
    %115 = vmatprep.subr.mxu0 0.0
    %116 = vmatpush1.xpose.msra.mxu0 0.0
    %117 = vmatprep.subr.mxu0 0.0
    %118 = vmatpush1.xpose.msra.mxu0 0.0
    %119 = vmatprep.subr.mxu0 0.0
    %120 = vmatpush1.xpose.msra.mxu0 0.0
    %121 = vmatprep.subr.mxu0 0.0
    %122 = vmatpush1.xpose.msra.mxu0 0.0
    %123 = vmatprep.subr.mxu0 0.0
    %124 = vmatpush1.xpose.msra.mxu0 0.0
    %125 = vmatprep.subr.mxu0 0.0
    %126 = vmatpush1.xpose.msra.mxu0 0.0
    %127 = vmatprep.subr.mxu0 0.0
    %128 = vmatpush1.xpose.msra.mxu0 0.0
    %129 = vmatprep.subr.mxu0 0.0
    %130 = vmatpush1.xpose.msra.mxu0 0.0
    %131 = vmatprep.subr.mxu0 0.0
    %132 = vmatpush1.xpose.msra.mxu0 0.0
    %133 = vmatprep.subr.mxu0 0.0
    %134 = vmatpush1.xpose.msra.mxu0 0.0
    %135 = vmatprep.subr.mxu0 0.0
    %136 = vmatpush1.xpose.msra.mxu0 0.0
    %137 = vmatprep.subr.mxu0 0.0
    %138 = vmatpush1.xpose.msra.mxu0 0.0
    %139 = vmatprep.subr.mxu0 0.0
    %140 = vmatpush1.xpose.msra.mxu0 0.0
    %141 = vmatprep.subr.mxu0 0.0
    %142 = vmatpush1.xpose.msra.mxu0 0.0
    %143 = vmatprep.subr.mxu0 0.0
    %144 = vmatpush1.xpose.msra.mxu0 %v113
    %145 = vmatprep.subr.mxu0 0.0
    %146 = vmatpush1.xpose.msra.mxu0 %v110
    %147 = vmatprep.subr.mxu0 0.0
    %148 = vmatpush2.xpose.msra.mxu0 0.0
    %149 = vmatprep.subr.mxu0 0.0
    %150 = vmatpush2.xpose.msra.mxu0 0.0
    %151 = vmatprep.subr.mxu0 0.0
    %152 = vmatpush2.xpose.msra.mxu0 0.0
    %153 = vmatprep.subr.mxu0 0.0
    %154 = vmatpush2.xpose.msra.mxu0 0.0
    %155 = vmatprep.subr.mxu0 0.0
    %156 = vmatpush2.xpose.msra.mxu0 0.0
    %157 = vmatprep.subr.mxu0 0.0
    %158 = vmatpush2.xpose.msra.mxu0 0.0
    %159 = vmatprep.subr.mxu0 0.0
    %160 = vmatpush2.xpose.msra.mxu0 0.0
    %161 = vmatprep.subr.mxu0 0.0
    %162 = vmatpush2.xpose.msra.mxu0 0.0
    %163 = vmatprep.subr.mxu0 0.0
    %164 = vmatpush2.xpose.msra.mxu0 0.0
    %165 = vmatprep.subr.mxu0 0.0
    %166 = vmatpush2.xpose.msra.mxu0 0.0
    %167 = vmatprep.subr.mxu0 0.0
    %168 = vmatpush2.xpose.msra.mxu0 0.0
    %169 = vmatprep.subr.mxu0 0.0
    %170 = vmatpush2.xpose.msra.mxu0 0.0
    %171 = vmatprep.subr.mxu0 0.0
    %172 = vmatpush2.xpose.msra.mxu0 0.0
    %173 = vmatprep.subr.mxu0 0.0
    %174 = vmatpush2.xpose.msra.mxu0 0.0
    %175 = vmatprep.subr.mxu0 0.0
    %176 = vmatpush2.xpose.msra.mxu0 0.0
    %177 = vmatprep.subr.mxu0 0.0
    %178 = vmatpush2.xpose.msra.mxu0 0.0
    %179 = vmatprep.mubr.f32.mxu0 0.0
    %180 = vmatmul.mubr.f32.gmra.mxu0 %v110
    %v181 = vpop.f32.mrf.mxu0
    %v182 = vadd.f32 0.0, %v181
    %v183 = vpop.f32.mrf.mxu0
    %184 = vmatprep.mubr.f32.mxu0 0.0
    %185 = vmatmul.mubr.f32.gmra.mxu0 %v113
    %v186 = vpop.f32.mrf.mxu0
    %v187 = vadd.f32 0.0, %v186
    %v188 = vpop.f32.mrf.mxu0
    %189 = vdwg.mxu0
    %v190 = vmul.f32 %v182, 14.285714
    %v191 = vmul.f32 %v187, 14.285714
    %vm192 = vcmask 130048
    %v193 = vsel %vm192, %v190, -inf
    %194 = vmax.xlane.f32.xlu0 %v193
    %v195 = vpop.xlane.xlu0 %194
    %v196 = vsel %vm192, %v191, -inf
    %197 = vmax.xlane.f32.xlu0 %v196
    %v198 = vpop.xlane.xlu0 %197
    %v199 = vsub.f32 %v190, %v195
    %v200 = vsub.f32 %v191, %v198
    %v201 = vlaneseq
    %v202 = vshrl.u32 %v201, 7
    %v203 = vadd.s32 %v202, 8
    %v204 = vlaneseq
    %v205 = vand.u32 %v204, 127
    %vm206 = vcmp.eq.s32.totalorder %v202, %v205
    %vm207 = vcmp.eq.s32.totalorder %v203, %v205
    %v208 = vsel %vm206, 0.0, 1.0
    %v209 = vsel %vm207, 0.0, 1.0
    %v210 = vld [vmem:[#allocation5] sm:$0xff]
    %v211 = vld [vmem:[#allocation5 + $0x8] sm:$0xff]
    %v212 = vmul.f32 %v210, %v208
    %v213 = vmul.f32 %v211, %v209
    %v214 = vmul.f32 %v199, 1.442695
    %v215 = vpow.pop %v214
    %v216 = vmul.f32 %v200, 1.442695
    %v217 = vpow.pop %v216
    %v218 = vmul.f32 %v215, %v208
    %v219 = vmul.f32 %v217, %v209
    %v220 = vsel %vm192, %v218, 0.0
    %221 = vadd.xlane.f32.xlu0 %v220
    %v222 = vpop.xlane.xlu0 %221
    %v223 = vsel %vm192, %v219, 0.0
    %224 = vadd.xlane.f32.xlu0 %v223
    %v225 = vpop.xlane.xlu0 %224
    %v226 = vlog2.pop %v222
    %v227 = vmul.f32 %v226, 0.6931472
    %v228 = vlog2.pop %v225
    %v229 = vmul.f32 %v228, 0.6931472
    %v230 = vsub.f32 %v199, %v227
    %v231 = vsub.f32 %v200, %v229
    %v232 = vmul.f32 %v212, %v230
    %v233 = vmul.f32 %v213, %v231
    %v234 = vsel %vm192, %v232, 0.0
    %235 = vadd.xlane.f32.xlu0 %v234
    %v236 = vpop.xlane.xlu0 %235
    %v237 = vsel %vm192, %v233, 0.0
    %238 = vadd.xlane.f32.xlu0 %v237
    %v239 = vpop.xlane.xlu0 %238
    %v240 = vsel %vm192, %v212, 0.0
    %241 = vadd.xlane.f32.xlu0 %v240
    %v242 = vpop.xlane.xlu0 %241
    %v243 = vsel %vm192, %v213, 0.0
    %244 = vadd.xlane.f32.xlu0 %v243
    %v245 = vpop.xlane.xlu0 %244
    %v246 = vrcp.pop %v242
    %v247 = vmul.f32 %v236, %v246
    %v248 = vrcp.pop %v245
    %v249 = vmul.f32 %v239, %v248
    %v250 = vadd.f32 %v247, %v249
    %v251 = vrot.slane %v250, 4
    %v252 = vadd.f32 %v250, %v251
    %v253 = vrot.slane %v252, 2
    %v254 = vadd.f32 %v252, %v253
    %v255 = vrot.slane %v254, 1
    %v256 = vadd.f32 %v254, %v255
    %v257 = vmul.f32 %v256, -0.0625
    %v258 = vld [vmem:[#allocation7] sm:$0xff]
    %v259 = vld [vmem:[#allocation7 + $0x8] sm:$0xff]
    %v260 = vmul.f32 %v258, %v258
    %v261 = vmul.f32 %v259, %v259
    %vm262 = vcmask 523264
    %v263 = vsel %vm262, %v261, 0.0
    %v264 = vadd.f32 %v260, %v263
    %265 = vadd.xlane.f32.xlu0 %v264
    %v266 = vpop.xlane.xlu0 %265
    %v267 = vmax.f32 %v266, 1e-24
    %v268 = vrsqrt.pop %v267
    %v269 = vmul.f32 %v258, %v268
    %v270 = vmul.f32 %v259, %v268
    %v271 = vpack.c.bf16 %v269, %v269
    %v272 = vpack.c.bf16 %v270, %v270
    %v273 = vld [vmem:[#allocation8] sm:$0xff]
    %v274 = vld [vmem:[#allocation8 + $0x8] sm:$0xff]
    %v275 = vld [vmem:[#allocation8 + $0x10] sm:$0xff]
    %v276 = vld [vmem:[#allocation8 + $0x18] sm:$0xff]
    %v277 = vld [vmem:[#allocation8 + $0x20] sm:$0xff]
    %v278 = vld [vmem:[#allocation8 + $0x28] sm:$0xff]
    %v279 = vld [vmem:[#allocation8 + $0x30] sm:$0xff]
    %v280 = vld [vmem:[#allocation8 + $0x38] sm:$0xff]
    %v281 = vld [vmem:[#allocation8 + $0x40] sm:$0xff]
    %v282 = vld [vmem:[#allocation8 + $0x48] sm:$0xff]
    %v283 = vld [vmem:[#allocation8 + $0x50] sm:$0xff]
    %v284 = vld [vmem:[#allocation8 + $0x58] sm:$0xff]
    %v285 = vld [vmem:[#allocation8 + $0x60] sm:$0xff]
    %v286 = vld [vmem:[#allocation8 + $0x68] sm:$0xff]
    %v287 = vld [vmem:[#allocation8 + $0x70] sm:$0xff]
    %v288 = vld [vmem:[#allocation8 + $0x78] sm:$0xff]
    %v289 = vld [vmem:[#allocation8 + $0x80] sm:$0xff]
    %v290 = vld [vmem:[#allocation8 + $0x88] sm:$0xff]
    %v291 = vld [vmem:[#allocation8 + $0x90] sm:$0xff]
    %v292 = vld [vmem:[#allocation8 + $0x98] sm:$0xff]
    %v293 = vld [vmem:[#allocation8 + $0xa0] sm:$0xff]
    %v294 = vld [vmem:[#allocation8 + $0xa8] sm:$0xff]
    %v295 = vld [vmem:[#allocation8 + $0xb0] sm:$0xff]
    %v296 = vld [vmem:[#allocation8 + $0xb8] sm:$0xff]
    %v297 = vld [vmem:[#allocation8 + $0xc0] sm:$0xff]
    %v298 = vld [vmem:[#allocation8 + $0xc8] sm:$0xff]
    %v299 = vld [vmem:[#allocation8 + $0xd0] sm:$0xff]
    %v300 = vld [vmem:[#allocation8 + $0xd8] sm:$0xff]
    %v301 = vld [vmem:[#allocation8 + $0xe0] sm:$0xff]
    %v302 = vld [vmem:[#allocation8 + $0xe8] sm:$0xff]
    %v303 = vld [vmem:[#allocation8 + $0xf0] sm:$0xff]
    %v304 = vld [vmem:[#allocation8 + $0xf8] sm:$0xff]
    %v305 = vld [vmem:[#allocation8 + $0x100] sm:$0xff]
    %v306 = vld [vmem:[#allocation8 + $0x108] sm:$0xff]
    %v307 = vld [vmem:[#allocation8 + $0x110] sm:$0xff]
    %v308 = vld [vmem:[#allocation8 + $0x118] sm:$0xff]
    %v309 = vld [vmem:[#allocation8 + $0x120] sm:$0xff]
    %v310 = vld [vmem:[#allocation8 + $0x128] sm:$0xff]
    %v311 = vld [vmem:[#allocation8 + $0x130] sm:$0xff]
    %v312 = vld [vmem:[#allocation8 + $0x138] sm:$0xff]
    %v313 = vld [vmem:[#allocation8 + $0x140] sm:$0xff]
    %v314 = vld [vmem:[#allocation8 + $0x148] sm:$0xff]
    %v315 = vld [vmem:[#allocation8 + $0x150] sm:$0xff]
    %v316 = vld [vmem:[#allocation8 + $0x158] sm:$0xff]
    %v317 = vld [vmem:[#allocation8 + $0x160] sm:$0xff]
    %v318 = vld [vmem:[#allocation8 + $0x168] sm:$0xff]
    %v319 = vld [vmem:[#allocation8 + $0x170] sm:$0xff]
    %v320 = vld [vmem:[#allocation8 + $0x178] sm:$0xff]
    %v321 = vld [vmem:[#allocation8 + $0x180] sm:$0xff]
    %v322 = vld [vmem:[#allocation8 + $0x188] sm:$0xff]
    %v323 = vld [vmem:[#allocation8 + $0x190] sm:$0xff]
    %v324 = vld [vmem:[#allocation8 + $0x198] sm:$0xff]
    %v325 = vld [vmem:[#allocation8 + $0x1a0] sm:$0xff]
    %v326 = vld [vmem:[#allocation8 + $0x1a8] sm:$0xff]
    %v327 = vld [vmem:[#allocation8 + $0x1b0] sm:$0xff]
    %v328 = vld [vmem:[#allocation8 + $0x1b8] sm:$0xff]
    %v329 = vld [vmem:[#allocation8 + $0x1c0] sm:$0xff]
    %v330 = vld [vmem:[#allocation8 + $0x1c8] sm:$0xff]
    %v331 = vld [vmem:[#allocation8 + $0x1d0] sm:$0xff]
    %v332 = vld [vmem:[#allocation8 + $0x1d8] sm:$0xff]
    %v333 = vld [vmem:[#allocation8 + $0x1e0] sm:$0xff]
    %v334 = vld [vmem:[#allocation8 + $0x1e8] sm:$0xff]
    %v335 = vld [vmem:[#allocation8 + $0x1f0] sm:$0xff]
    %v336 = vld [vmem:[#allocation8 + $0x1f8] sm:$0xff]
    %v337 = vld [vmem:[#allocation8 + $0x200] sm:$0xff]
    %v338 = vld [vmem:[#allocation8 + $0x208] sm:$0xff]
    %v339 = vld [vmem:[#allocation8 + $0x210] sm:$0xff]
    %v340 = vld [vmem:[#allocation8 + $0x218] sm:$0xff]
    %v341 = vld [vmem:[#allocation8 + $0x220] sm:$0xff]
    %v342 = vld [vmem:[#allocation8 + $0x228] sm:$0xff]
    %v343 = vld [vmem:[#allocation8 + $0x230] sm:$0xff]
    %v344 = vld [vmem:[#allocation8 + $0x238] sm:$0xff]
    %v345 = vld [vmem:[#allocation8 + $0x240] sm:$0xff]
    %v346 = vld [vmem:[#allocation8 + $0x248] sm:$0xff]
    %v347 = vld [vmem:[#allocation8 + $0x250] sm:$0xff]
    %v348 = vld [vmem:[#allocation8 + $0x258] sm:$0xff]
    %v349 = vld [vmem:[#allocation8 + $0x260] sm:$0xff]
    %v350 = vld [vmem:[#allocation8 + $0x268] sm:$0xff]
    %v351 = vld [vmem:[#allocation8 + $0x270] sm:$0xff]
    %v352 = vld [vmem:[#allocation8 + $0x278] sm:$0xff]
    %v353 = vld [vmem:[#allocation8 + $0x280] sm:$0xff]
    %v354 = vld [vmem:[#allocation8 + $0x288] sm:$0xff]
    %v355 = vld [vmem:[#allocation8 + $0x290] sm:$0xff]
    %v356 = vld [vmem:[#allocation8 + $0x298] sm:$0xff]
    %v357 = vld [vmem:[#allocation8 + $0x2a0] sm:$0xff]
    %v358 = vld [vmem:[#allocation8 + $0x2a8] sm:$0xff]
    %v359 = vld [vmem:[#allocation8 + $0x2b0] sm:$0xff]
    %v360 = vld [vmem:[#allocation8 + $0x2b8] sm:$0xff]
    %v361 = vld [vmem:[#allocation8 + $0x2c0] sm:$0xff]
    %v362 = vld [vmem:[#allocation8 + $0x2c8] sm:$0xff]
    %v363 = vld [vmem:[#allocation8 + $0x2d0] sm:$0xff]
    %v364 = vld [vmem:[#allocation8 + $0x2d8] sm:$0xff]
    %v365 = vld [vmem:[#allocation8 + $0x2e0] sm:$0xff]
    %v366 = vld [vmem:[#allocation8 + $0x2e8] sm:$0xff]
    %v367 = vld [vmem:[#allocation8 + $0x2f0] sm:$0xff]
    %v368 = vld [vmem:[#allocation8 + $0x2f8] sm:$0xff]
    %v369 = vld [vmem:[#allocation8 + $0x300] sm:$0xff]
    %v370 = vld [vmem:[#allocation8 + $0x308] sm:$0xff]
    %v371 = vld [vmem:[#allocation8 + $0x310] sm:$0xff]
    %v372 = vld [vmem:[#allocation8 + $0x318] sm:$0xff]
    %v373 = vld [vmem:[#allocation8 + $0x320] sm:$0xff]
    %v374 = vld [vmem:[#allocation8 + $0x328] sm:$0xff]
    %v375 = vld [vmem:[#allocation8 + $0x330] sm:$0xff]
    %v376 = vld [vmem:[#allocation8 + $0x338] sm:$0xff]
    %v377 = vld [vmem:[#allocation8 + $0x340] sm:$0xff]
    %v378 = vld [vmem:[#allocation8 + $0x348] sm:$0xff]
    %v379 = vld [vmem:[#allocation8 + $0x350] sm:$0xff]
    %v380 = vld [vmem:[#allocation8 + $0x358] sm:$0xff]
    %v381 = vld [vmem:[#allocation8 + $0x360] sm:$0xff]
    %v382 = vld [vmem:[#allocation8 + $0x368] sm:$0xff]
    %v383 = vld [vmem:[#allocation8 + $0x370] sm:$0xff]
    %v384 = vld [vmem:[#allocation8 + $0x378] sm:$0xff]
    %v385 = vld [vmem:[#allocation8 + $0x380] sm:$0xff]
    %v386 = vld [vmem:[#allocation8 + $0x388] sm:$0xff]
    %v387 = vld [vmem:[#allocation8 + $0x390] sm:$0xff]
    %v388 = vld [vmem:[#allocation8 + $0x398] sm:$0xff]
    %v389 = vld [vmem:[#allocation8 + $0x3a0] sm:$0xff]
    %v390 = vld [vmem:[#allocation8 + $0x3a8] sm:$0xff]
    %v391 = vld [vmem:[#allocation8 + $0x3b0] sm:$0xff]
    %v392 = vld [vmem:[#allocation8 + $0x3b8] sm:$0xff]
    %v393 = vld [vmem:[#allocation8 + $0x3c0] sm:$0xff]
    %v394 = vld [vmem:[#allocation8 + $0x3c8] sm:$0xff]
    %v395 = vld [vmem:[#allocation8 + $0x3d0] sm:$0xff]
    %v396 = vld [vmem:[#allocation8 + $0x3d8] sm:$0xff]
    %v397 = vld [vmem:[#allocation8 + $0x3e0] sm:$0xff]
    %v398 = vld [vmem:[#allocation8 + $0x3e8] sm:$0xff]
    %v399 = vld [vmem:[#allocation8 + $0x3f0] sm:$0xff]
    %v400 = vld [vmem:[#allocation8 + $0x3f8] sm:$0xff]
    %v401 = vld [vmem:[#allocation8 + $0x400] sm:$0xff]
    %v402 = vld [vmem:[#allocation8 + $0x408] sm:$0xff]
    %v403 = vld [vmem:[#allocation8 + $0x410] sm:$0xff]
    %v404 = vld [vmem:[#allocation8 + $0x418] sm:$0xff]
    %v405 = vld [vmem:[#allocation8 + $0x420] sm:$0xff]
    %v406 = vld [vmem:[#allocation8 + $0x428] sm:$0xff]
    %v407 = vld [vmem:[#allocation8 + $0x430] sm:$0xff]
    %v408 = vld [vmem:[#allocation8 + $0x438] sm:$0xff]
    %v409 = vld [vmem:[#allocation8 + $0x440] sm:$0xff]
    %v410 = vld [vmem:[#allocation8 + $0x448] sm:$0xff]
    %v411 = vld [vmem:[#allocation8 + $0x450] sm:$0xff]
    %v412 = vld [vmem:[#allocation8 + $0x458] sm:$0xff]
    %v413 = vld [vmem:[#allocation8 + $0x460] sm:$0xff]
    %v414 = vld [vmem:[#allocation8 + $0x468] sm:$0xff]
    %v415 = vld [vmem:[#allocation8 + $0x470] sm:$0xff]
    %v416 = vld [vmem:[#allocation8 + $0x478] sm:$0xff]
    %v417 = vld [vmem:[#allocation8 + $0x480] sm:$0xff]
    %v418 = vld [vmem:[#allocation8 + $0x488] sm:$0xff]
    %v419 = vld [vmem:[#allocation8 + $0x490] sm:$0xff]
    %v420 = vld [vmem:[#allocation8 + $0x498] sm:$0xff]
    %v421 = vld [vmem:[#allocation8 + $0x4a0] sm:$0xff]
    %v422 = vld [vmem:[#allocation8 + $0x4a8] sm:$0xff]
    %v423 = vld [vmem:[#allocation8 + $0x4b0] sm:$0xff]
    %v424 = vld [vmem:[#allocation8 + $0x4b8] sm:$0xff]
    %v425 = vld [vmem:[#allocation8 + $0x4c0] sm:$0xff]
    %v426 = vld [vmem:[#allocation8 + $0x4c8] sm:$0xff]
    %v427 = vld [vmem:[#allocation8 + $0x4d0] sm:$0xff]
    %v428 = vld [vmem:[#allocation8 + $0x4d8] sm:$0xff]
    %v429 = vld [vmem:[#allocation8 + $0x4e0] sm:$0xff]
    %v430 = vld [vmem:[#allocation8 + $0x4e8] sm:$0xff]
    %v431 = vld [vmem:[#allocation8 + $0x4f0] sm:$0xff]
    %v432 = vld [vmem:[#allocation8 + $0x4f8] sm:$0xff]
    %v433 = vld [vmem:[#allocation8 + $0x500] sm:$0xff]
    %v434 = vld [vmem:[#allocation8 + $0x508] sm:$0xff]
    %v435 = vld [vmem:[#allocation8 + $0x510] sm:$0xff]
    %v436 = vld [vmem:[#allocation8 + $0x518] sm:$0xff]
    %v437 = vld [vmem:[#allocation8 + $0x520] sm:$0xff]
    %v438 = vld [vmem:[#allocation8 + $0x528] sm:$0xff]
    %v439 = vld [vmem:[#allocation8 + $0x530] sm:$0xff]
    %v440 = vld [vmem:[#allocation8 + $0x538] sm:$0xff]
    %v441 = vld [vmem:[#allocation8 + $0x540] sm:$0xff]
    %v442 = vld [vmem:[#allocation8 + $0x548] sm:$0xff]
    %v443 = vld [vmem:[#allocation8 + $0x550] sm:$0xff]
    %v444 = vld [vmem:[#allocation8 + $0x558] sm:$0xff]
    %v445 = vld [vmem:[#allocation8 + $0x560] sm:$0xff]
    %v446 = vld [vmem:[#allocation8 + $0x568] sm:$0xff]
    %v447 = vld [vmem:[#allocation8 + $0x570] sm:$0xff]
    %v448 = vld [vmem:[#allocation8 + $0x578] sm:$0xff]
    %v449 = vld [vmem:[#allocation8 + $0x580] sm:$0xff]
    %v450 = vld [vmem:[#allocation8 + $0x588] sm:$0xff]
    %v451 = vld [vmem:[#allocation8 + $0x590] sm:$0xff]
    %v452 = vld [vmem:[#allocation8 + $0x598] sm:$0xff]
    %v453 = vld [vmem:[#allocation8 + $0x5a0] sm:$0xff]
    %v454 = vld [vmem:[#allocation8 + $0x5a8] sm:$0xff]
    %v455 = vld [vmem:[#allocation8 + $0x5b0] sm:$0xff]
    %v456 = vld [vmem:[#allocation8 + $0x5b8] sm:$0xff]
    %v457 = vld [vmem:[#allocation8 + $0x5c0] sm:$0xff]
    %v458 = vld [vmem:[#allocation8 + $0x5c8] sm:$0xff]
    %v459 = vld [vmem:[#allocation8 + $0x5d0] sm:$0xff]
    %v460 = vld [vmem:[#allocation8 + $0x5d8] sm:$0xff]
    %v461 = vld [vmem:[#allocation8 + $0x5e0] sm:$0xff]
    %v462 = vld [vmem:[#allocation8 + $0x5e8] sm:$0xff]
    %v463 = vld [vmem:[#allocation8 + $0x5f0] sm:$0xff]
    %v464 = vld [vmem:[#allocation8 + $0x5f8] sm:$0xff]
    %v465 = vld [vmem:[#allocation8 + $0x600] sm:$0xff]
    %v466 = vld [vmem:[#allocation8 + $0x608] sm:$0xff]
    %v467 = vld [vmem:[#allocation8 + $0x610] sm:$0xff]
    %v468 = vld [vmem:[#allocation8 + $0x618] sm:$0xff]
    %v469 = vld [vmem:[#allocation8 + $0x620] sm:$0xff]
    %v470 = vld [vmem:[#allocation8 + $0x628] sm:$0xff]
    %v471 = vld [vmem:[#allocation8 + $0x630] sm:$0xff]
    %v472 = vld [vmem:[#allocation8 + $0x638] sm:$0xff]
    %v473 = vld [vmem:[#allocation8 + $0x640] sm:$0xff]
    %v474 = vld [vmem:[#allocation8 + $0x648] sm:$0xff]
    %v475 = vld [vmem:[#allocation8 + $0x650] sm:$0xff]
    %v476 = vld [vmem:[#allocation8 + $0x658] sm:$0xff]
    %v477 = vld [vmem:[#allocation8 + $0x660] sm:$0xff]
    %v478 = vld [vmem:[#allocation8 + $0x668] sm:$0xff]
    %v479 = vld [vmem:[#allocation8 + $0x670] sm:$0xff]
    %v480 = vld [vmem:[#allocation8 + $0x678] sm:$0xff]
    %v481 = vld [vmem:[#allocation8 + $0x680] sm:$0xff]
    %v482 = vld [vmem:[#allocation8 + $0x688] sm:$0xff]
    %v483 = vld [vmem:[#allocation8 + $0x690] sm:$0xff]
    %v484 = vld [vmem:[#allocation8 + $0x698] sm:$0xff]
    %v485 = vld [vmem:[#allocation8 + $0x6a0] sm:$0xff]
    %v486 = vld [vmem:[#allocation8 + $0x6a8] sm:$0xff]
    %v487 = vld [vmem:[#allocation8 + $0x6b0] sm:$0xff]
    %v488 = vld [vmem:[#allocation8 + $0x6b8] sm:$0xff]
    %v489 = vld [vmem:[#allocation8 + $0x6c0] sm:$0xff]
    %v490 = vld [vmem:[#allocation8 + $0x6c8] sm:$0xff]
    %v491 = vld [vmem:[#allocation8 + $0x6d0] sm:$0xff]
    %v492 = vld [vmem:[#allocation8 + $0x6d8] sm:$0xff]
    %v493 = vld [vmem:[#allocation8 + $0x6e0] sm:$0xff]
    %v494 = vld [vmem:[#allocation8 + $0x6e8] sm:$0xff]
    %v495 = vld [vmem:[#allocation8 + $0x6f0] sm:$0xff]
    %v496 = vld [vmem:[#allocation8 + $0x6f8] sm:$0xff]
    %v497 = vld [vmem:[#allocation8 + $0x700] sm:$0xff]
    %v498 = vld [vmem:[#allocation8 + $0x708] sm:$0xff]
    %v499 = vld [vmem:[#allocation8 + $0x710] sm:$0xff]
    %v500 = vld [vmem:[#allocation8 + $0x718] sm:$0xff]
    %v501 = vld [vmem:[#allocation8 + $0x720] sm:$0xff]
    %v502 = vld [vmem:[#allocation8 + $0x728] sm:$0xff]
    %v503 = vld [vmem:[#allocation8 + $0x730] sm:$0xff]
    %v504 = vld [vmem:[#allocation8 + $0x738] sm:$0xff]
    %v505 = vld [vmem:[#allocation8 + $0x740] sm:$0xff]
    %v506 = vld [vmem:[#allocation8 + $0x748] sm:$0xff]
    %v507 = vld [vmem:[#allocation8 + $0x750] sm:$0xff]
    %v508 = vld [vmem:[#allocation8 + $0x758] sm:$0xff]
    %v509 = vld [vmem:[#allocation8 + $0x760] sm:$0xff]
    %v510 = vld [vmem:[#allocation8 + $0x768] sm:$0xff]
    %v511 = vld [vmem:[#allocation8 + $0x770] sm:$0xff]
    %v512 = vld [vmem:[#allocation8 + $0x778] sm:$0xff]
    %v513 = vld [vmem:[#allocation8 + $0x780] sm:$0xff]
    %v514 = vld [vmem:[#allocation8 + $0x788] sm:$0xff]
    %v515 = vld [vmem:[#allocation8 + $0x790] sm:$0xff]
    %v516 = vld [vmem:[#allocation8 + $0x798] sm:$0xff]
    %v517 = vld [vmem:[#allocation8 + $0x7a0] sm:$0xff]
    %v518 = vld [vmem:[#allocation8 + $0x7a8] sm:$0xff]
    %v519 = vld [vmem:[#allocation8 + $0x7b0] sm:$0xff]
    %v520 = vld [vmem:[#allocation8 + $0x7b8] sm:$0xff]
    %v521 = vld [vmem:[#allocation8 + $0x7c0] sm:$0xff]
    %v522 = vld [vmem:[#allocation8 + $0x7c8] sm:$0xff]
    %v523 = vld [vmem:[#allocation8 + $0x7d0] sm:$0xff]
    %v524 = vld [vmem:[#allocation8 + $0x7d8] sm:$0xff]
    %v525 = vld [vmem:[#allocation8 + $0x7e0] sm:$0xff]
    %v526 = vld [vmem:[#allocation8 + $0x7e8] sm:$0xff]
    %v527 = vld [vmem:[#allocation8 + $0x7f0] sm:$0xff]
    %v528 = vld [vmem:[#allocation8 + $0x7f8] sm:$0xff]
    %v529 = vld [vmem:[#allocation8 + $0x800] sm:$0xff]
    %v530 = vld [vmem:[#allocation8 + $0x808] sm:$0xff]
    %v531 = vld [vmem:[#allocation8 + $0x810] sm:$0xff]
    %v532 = vld [vmem:[#allocation8 + $0x818] sm:$0xff]
    %v533 = vld [vmem:[#allocation8 + $0x820] sm:$0xff]
    %v534 = vld [vmem:[#allocation8 + $0x828] sm:$0xff]
    %v535 = vld [vmem:[#allocation8 + $0x830] sm:$0xff]
    %v536 = vld [vmem:[#allocation8 + $0x838] sm:$0xff]
    %v801 = vunpack.c.l.b16 %v273
    %v802 = vunpack.c.h.b16 %v273
    %v803 = vunpack.c.l.b16 %v274
    %v804 = vunpack.c.h.b16 %v274
    %v805 = vunpack.c.l.b16 %v275
    %v806 = vunpack.c.h.b16 %v275
    %v807 = vunpack.c.l.b16 %v276
    %v808 = vunpack.c.h.b16 %v276
    %v809 = vunpack.c.l.b16 %v277
    %v810 = vunpack.c.h.b16 %v277
    %v811 = vunpack.c.l.b16 %v278
    %v812 = vunpack.c.h.b16 %v278
    %v813 = vunpack.c.l.b16 %v279
    %v814 = vunpack.c.h.b16 %v279
    %v815 = vunpack.c.l.b16 %v280
    %v816 = vunpack.c.h.b16 %v280
    %v817 = vunpack.c.l.b16 %v281
    %v818 = vunpack.c.h.b16 %v281
    %v819 = vunpack.c.l.b16 %v282
    %v820 = vunpack.c.h.b16 %v282
    %v821 = vunpack.c.l.b16 %v283
    %v822 = vunpack.c.h.b16 %v283
    %v823 = vunpack.c.l.b16 %v284
    %v824 = vunpack.c.h.b16 %v284
    %v825 = vunpack.c.l.b16 %v285
    %v826 = vunpack.c.h.b16 %v285
    %v827 = vunpack.c.l.b16 %v286
    %v828 = vunpack.c.h.b16 %v286
    %v829 = vunpack.c.l.b16 %v287
    %v830 = vunpack.c.h.b16 %v287
    %v831 = vunpack.c.l.b16 %v288
    %v832 = vunpack.c.h.b16 %v288
    %v833 = vunpack.c.l.b16 %v289
    %v834 = vunpack.c.h.b16 %v289
    %v835 = vunpack.c.l.b16 %v290
    %v836 = vunpack.c.h.b16 %v290
    %v837 = vunpack.c.l.b16 %v291
    %v838 = vunpack.c.h.b16 %v291
    %v839 = vunpack.c.l.b16 %v292
    %v840 = vunpack.c.h.b16 %v292
    %v841 = vunpack.c.l.b16 %v293
    %v842 = vunpack.c.h.b16 %v293
    %v843 = vunpack.c.l.b16 %v294
    %v844 = vunpack.c.h.b16 %v294
    %v845 = vunpack.c.l.b16 %v295
    %v846 = vunpack.c.h.b16 %v295
    %v847 = vunpack.c.l.b16 %v296
    %v848 = vunpack.c.h.b16 %v296
    %v849 = vunpack.c.l.b16 %v297
    %v850 = vunpack.c.h.b16 %v297
    %v851 = vunpack.c.l.b16 %v298
    %v852 = vunpack.c.h.b16 %v298
    %v853 = vunpack.c.l.b16 %v299
    %v854 = vunpack.c.h.b16 %v299
    %v855 = vunpack.c.l.b16 %v300
    %v856 = vunpack.c.h.b16 %v300
    %v857 = vunpack.c.l.b16 %v301
    %v858 = vunpack.c.h.b16 %v301
    %v859 = vunpack.c.l.b16 %v302
    %v860 = vunpack.c.h.b16 %v302
    %v861 = vunpack.c.l.b16 %v303
    %v862 = vunpack.c.h.b16 %v303
    %v863 = vunpack.c.l.b16 %v304
    %v864 = vunpack.c.h.b16 %v304
    %v865 = vunpack.c.l.b16 %v305
    %v866 = vunpack.c.h.b16 %v305
    %v867 = vunpack.c.l.b16 %v306
    %v868 = vunpack.c.h.b16 %v306
    %v869 = vunpack.c.l.b16 %v307
    %v870 = vunpack.c.h.b16 %v307
    %v871 = vunpack.c.l.b16 %v308
    %v872 = vunpack.c.h.b16 %v308
    %v873 = vunpack.c.l.b16 %v309
    %v874 = vunpack.c.h.b16 %v309
    %v875 = vunpack.c.l.b16 %v310
    %v876 = vunpack.c.h.b16 %v310
    %v877 = vunpack.c.l.b16 %v311
    %v878 = vunpack.c.h.b16 %v311
    %v879 = vunpack.c.l.b16 %v312
    %v880 = vunpack.c.h.b16 %v312
    %v881 = vunpack.c.l.b16 %v313
    %v882 = vunpack.c.h.b16 %v313
    %v883 = vunpack.c.l.b16 %v314
    %v884 = vunpack.c.h.b16 %v314
    %v885 = vunpack.c.l.b16 %v315
    %v886 = vunpack.c.h.b16 %v315
    %v887 = vunpack.c.l.b16 %v316
    %v888 = vunpack.c.h.b16 %v316
    %v889 = vunpack.c.l.b16 %v317
    %v890 = vunpack.c.h.b16 %v317
    %v891 = vunpack.c.l.b16 %v318
    %v892 = vunpack.c.h.b16 %v318
    %v893 = vunpack.c.l.b16 %v319
    %v894 = vunpack.c.h.b16 %v319
    %v895 = vunpack.c.l.b16 %v320
    %v896 = vunpack.c.h.b16 %v320
    %v897 = vunpack.c.l.b16 %v321
    %v898 = vunpack.c.h.b16 %v321
    %v899 = vunpack.c.l.b16 %v322
    %v900 = vunpack.c.h.b16 %v322
    %v901 = vunpack.c.l.b16 %v323
    %v902 = vunpack.c.h.b16 %v323
    %v903 = vunpack.c.l.b16 %v324
    %v904 = vunpack.c.h.b16 %v324
    %v905 = vunpack.c.l.b16 %v325
    %v906 = vunpack.c.h.b16 %v325
    %v907 = vunpack.c.l.b16 %v326
    %v908 = vunpack.c.h.b16 %v326
    %v909 = vunpack.c.l.b16 %v327
    %v910 = vunpack.c.h.b16 %v327
    %v911 = vunpack.c.l.b16 %v328
    %v912 = vunpack.c.h.b16 %v328
    %v913 = vunpack.c.l.b16 %v329
    %v914 = vunpack.c.h.b16 %v329
    %v915 = vunpack.c.l.b16 %v330
    %v916 = vunpack.c.h.b16 %v330
    %v917 = vunpack.c.l.b16 %v331
    %v918 = vunpack.c.h.b16 %v331
    %v919 = vunpack.c.l.b16 %v332
    %v920 = vunpack.c.h.b16 %v332
    %v921 = vunpack.c.l.b16 %v333
    %v922 = vunpack.c.h.b16 %v333
    %v923 = vunpack.c.l.b16 %v334
    %v924 = vunpack.c.h.b16 %v334
    %v925 = vunpack.c.l.b16 %v335
    %v926 = vunpack.c.h.b16 %v335
    %v927 = vunpack.c.l.b16 %v336
    %v928 = vunpack.c.h.b16 %v336
    %v929 = vunpack.c.l.b16 %v337
    %v930 = vunpack.c.h.b16 %v337
    %v931 = vunpack.c.l.b16 %v338
    %v932 = vunpack.c.h.b16 %v338
    %v933 = vunpack.c.l.b16 %v339
    %v934 = vunpack.c.h.b16 %v339
    %v935 = vunpack.c.l.b16 %v340
    %v936 = vunpack.c.h.b16 %v340
    %v937 = vunpack.c.l.b16 %v341
    %v938 = vunpack.c.h.b16 %v341
    %v939 = vunpack.c.l.b16 %v342
    %v940 = vunpack.c.h.b16 %v342
    %v941 = vunpack.c.l.b16 %v343
    %v942 = vunpack.c.h.b16 %v343
    %v943 = vunpack.c.l.b16 %v344
    %v944 = vunpack.c.h.b16 %v344
    %v945 = vunpack.c.l.b16 %v345
    %v946 = vunpack.c.h.b16 %v345
    %v947 = vunpack.c.l.b16 %v346
    %v948 = vunpack.c.h.b16 %v346
    %v949 = vunpack.c.l.b16 %v347
    %v950 = vunpack.c.h.b16 %v347
    %v951 = vunpack.c.l.b16 %v348
    %v952 = vunpack.c.h.b16 %v348
    %v953 = vunpack.c.l.b16 %v349
    %v954 = vunpack.c.h.b16 %v349
    %v955 = vunpack.c.l.b16 %v350
    %v956 = vunpack.c.h.b16 %v350
    %v957 = vunpack.c.l.b16 %v351
    %v958 = vunpack.c.h.b16 %v351
    %v959 = vunpack.c.l.b16 %v352
    %v960 = vunpack.c.h.b16 %v352
    %v961 = vunpack.c.l.b16 %v353
    %v962 = vunpack.c.h.b16 %v353
    %v963 = vunpack.c.l.b16 %v354
    %v964 = vunpack.c.h.b16 %v354
    %v965 = vunpack.c.l.b16 %v355
    %v966 = vunpack.c.h.b16 %v355
    %v967 = vunpack.c.l.b16 %v356
    %v968 = vunpack.c.h.b16 %v356
    %v969 = vunpack.c.l.b16 %v357
    %v970 = vunpack.c.h.b16 %v357
    %v971 = vunpack.c.l.b16 %v358
    %v972 = vunpack.c.h.b16 %v358
    %v973 = vunpack.c.l.b16 %v359
    %v974 = vunpack.c.h.b16 %v359
    %v975 = vunpack.c.l.b16 %v360
    %v976 = vunpack.c.h.b16 %v360
    %v977 = vunpack.c.l.b16 %v361
    %v978 = vunpack.c.h.b16 %v361
    %v979 = vunpack.c.l.b16 %v362
    %v980 = vunpack.c.h.b16 %v362
    %v981 = vunpack.c.l.b16 %v363
    %v982 = vunpack.c.h.b16 %v363
    %v983 = vunpack.c.l.b16 %v364
    %v984 = vunpack.c.h.b16 %v364
    %v985 = vunpack.c.l.b16 %v365
    %v986 = vunpack.c.h.b16 %v365
    %v987 = vunpack.c.l.b16 %v366
    %v988 = vunpack.c.h.b16 %v366
    %v989 = vunpack.c.l.b16 %v367
    %v990 = vunpack.c.h.b16 %v367
    %v991 = vunpack.c.l.b16 %v368
    %v992 = vunpack.c.h.b16 %v368
    %v993 = vunpack.c.l.b16 %v369
    %v994 = vunpack.c.h.b16 %v369
    %v995 = vunpack.c.l.b16 %v370
    %v996 = vunpack.c.h.b16 %v370
    %v997 = vunpack.c.l.b16 %v371
    %v998 = vunpack.c.h.b16 %v371
    %v999 = vunpack.c.l.b16 %v372
    %v1000 = vunpack.c.h.b16 %v372
    %v1001 = vunpack.c.l.b16 %v373
    %v1002 = vunpack.c.h.b16 %v373
    %v1003 = vunpack.c.l.b16 %v374
    %v1004 = vunpack.c.h.b16 %v374
    %v1005 = vunpack.c.l.b16 %v375
    %v1006 = vunpack.c.h.b16 %v375
    %v1007 = vunpack.c.l.b16 %v376
    %v1008 = vunpack.c.h.b16 %v376
    %v1009 = vunpack.c.l.b16 %v377
    %v1010 = vunpack.c.h.b16 %v377
    %v1011 = vunpack.c.l.b16 %v378
    %v1012 = vunpack.c.h.b16 %v378
    %v1013 = vunpack.c.l.b16 %v379
    %v1014 = vunpack.c.h.b16 %v379
    %v1015 = vunpack.c.l.b16 %v380
    %v1016 = vunpack.c.h.b16 %v380
    %v1017 = vunpack.c.l.b16 %v381
    %v1018 = vunpack.c.h.b16 %v381
    %v1019 = vunpack.c.l.b16 %v382
    %v1020 = vunpack.c.h.b16 %v382
    %v1021 = vunpack.c.l.b16 %v383
    %v1022 = vunpack.c.h.b16 %v383
    %v1023 = vunpack.c.l.b16 %v384
    %v1024 = vunpack.c.h.b16 %v384
    %v1025 = vunpack.c.l.b16 %v385
    %v1026 = vunpack.c.h.b16 %v385
    %v1027 = vunpack.c.l.b16 %v386
    %v1028 = vunpack.c.h.b16 %v386
    %v1029 = vunpack.c.l.b16 %v387
    %v1030 = vunpack.c.h.b16 %v387
    %v1031 = vunpack.c.l.b16 %v388
    %v1032 = vunpack.c.h.b16 %v388
    %v1033 = vunpack.c.l.b16 %v389
    %v1034 = vunpack.c.h.b16 %v389
    %v1035 = vunpack.c.l.b16 %v390
    %v1036 = vunpack.c.h.b16 %v390
    %v1037 = vunpack.c.l.b16 %v391
    %v1038 = vunpack.c.h.b16 %v391
    %v1039 = vunpack.c.l.b16 %v392
    %v1040 = vunpack.c.h.b16 %v392
    %v1041 = vunpack.c.l.b16 %v393
    %v1042 = vunpack.c.h.b16 %v393
    %v1043 = vunpack.c.l.b16 %v394
    %v1044 = vunpack.c.h.b16 %v394
    %v1045 = vunpack.c.l.b16 %v395
    %v1046 = vunpack.c.h.b16 %v395
    %v1047 = vunpack.c.l.b16 %v396
    %v1048 = vunpack.c.h.b16 %v396
    %v1049 = vunpack.c.l.b16 %v397
    %v1050 = vunpack.c.h.b16 %v397
    %v1051 = vunpack.c.l.b16 %v398
    %v1052 = vunpack.c.h.b16 %v398
    %v1053 = vunpack.c.l.b16 %v399
    %v1054 = vunpack.c.h.b16 %v399
    %v1055 = vunpack.c.l.b16 %v400
    %v1056 = vunpack.c.h.b16 %v400
    %v1057 = vunpack.c.l.b16 %v401
    %v1058 = vunpack.c.h.b16 %v401
    %v1059 = vunpack.c.l.b16 %v402
    %v1060 = vunpack.c.h.b16 %v402
    %v1061 = vunpack.c.l.b16 %v403
    %v1062 = vunpack.c.h.b16 %v403
    %v1063 = vunpack.c.l.b16 %v404
    %v1064 = vunpack.c.h.b16 %v404
    %v1065 = vunpack.c.l.b16 %v405
    %v1066 = vunpack.c.h.b16 %v405
    %v1067 = vunpack.c.l.b16 %v406
    %v1068 = vunpack.c.h.b16 %v406
    %v1069 = vunpack.c.l.b16 %v407
    %v1070 = vunpack.c.h.b16 %v407
    %v1071 = vunpack.c.l.b16 %v408
    %v1072 = vunpack.c.h.b16 %v408
    %v1073 = vunpack.c.l.b16 %v409
    %v1074 = vunpack.c.h.b16 %v409
    %v1075 = vunpack.c.l.b16 %v410
    %v1076 = vunpack.c.h.b16 %v410
    %v1077 = vunpack.c.l.b16 %v411
    %v1078 = vunpack.c.h.b16 %v411
    %v1079 = vunpack.c.l.b16 %v412
    %v1080 = vunpack.c.h.b16 %v412
    %v1081 = vunpack.c.l.b16 %v413
    %v1082 = vunpack.c.h.b16 %v413
    %v1083 = vunpack.c.l.b16 %v414
    %v1084 = vunpack.c.h.b16 %v414
    %v1085 = vunpack.c.l.b16 %v415
    %v1086 = vunpack.c.h.b16 %v415
    %v1087 = vunpack.c.l.b16 %v416
    %v1088 = vunpack.c.h.b16 %v416
    %v1089 = vunpack.c.l.b16 %v417
    %v1090 = vunpack.c.h.b16 %v417
    %v1091 = vunpack.c.l.b16 %v418
    %v1092 = vunpack.c.h.b16 %v418
    %v1093 = vunpack.c.l.b16 %v419
    %v1094 = vunpack.c.h.b16 %v419
    %v1095 = vunpack.c.l.b16 %v420
    %v1096 = vunpack.c.h.b16 %v420
    %v1097 = vunpack.c.l.b16 %v421
    %v1098 = vunpack.c.h.b16 %v421
    %v1099 = vunpack.c.l.b16 %v422
    %v1100 = vunpack.c.h.b16 %v422
    %v1101 = vunpack.c.l.b16 %v423
    %v1102 = vunpack.c.h.b16 %v423
    %v1103 = vunpack.c.l.b16 %v424
    %v1104 = vunpack.c.h.b16 %v424
    %v1105 = vunpack.c.l.b16 %v425
    %v1106 = vunpack.c.h.b16 %v425
    %v1107 = vunpack.c.l.b16 %v426
    %v1108 = vunpack.c.h.b16 %v426
    %v1109 = vunpack.c.l.b16 %v427
    %v1110 = vunpack.c.h.b16 %v427
    %v1111 = vunpack.c.l.b16 %v428
    %v1112 = vunpack.c.h.b16 %v428
    %v1113 = vunpack.c.l.b16 %v429
    %v1114 = vunpack.c.h.b16 %v429
    %v1115 = vunpack.c.l.b16 %v430
    %v1116 = vunpack.c.h.b16 %v430
    %v1117 = vunpack.c.l.b16 %v431
    %v1118 = vunpack.c.h.b16 %v431
    %v1119 = vunpack.c.l.b16 %v432
    %v1120 = vunpack.c.h.b16 %v432
    %v1121 = vunpack.c.l.b16 %v433
    %v1122 = vunpack.c.h.b16 %v433
    %v1123 = vunpack.c.l.b16 %v434
    %v1124 = vunpack.c.h.b16 %v434
    %v1125 = vunpack.c.l.b16 %v435
    %v1126 = vunpack.c.h.b16 %v435
    %v1127 = vunpack.c.l.b16 %v436
    %v1128 = vunpack.c.h.b16 %v436
    %v1129 = vunpack.c.l.b16 %v437
    %v1130 = vunpack.c.h.b16 %v437
    %v1131 = vunpack.c.l.b16 %v438
    %v1132 = vunpack.c.h.b16 %v438
    %v1133 = vunpack.c.l.b16 %v439
    %v1134 = vunpack.c.h.b16 %v439
    %v1135 = vunpack.c.l.b16 %v440
    %v1136 = vunpack.c.h.b16 %v440
    %v1137 = vunpack.c.l.b16 %v441
    %v1138 = vunpack.c.h.b16 %v441
    %v1139 = vunpack.c.l.b16 %v442
    %v1140 = vunpack.c.h.b16 %v442
    %v1141 = vunpack.c.l.b16 %v443
    %v1142 = vunpack.c.h.b16 %v443
    %v1143 = vunpack.c.l.b16 %v444
    %v1144 = vunpack.c.h.b16 %v444
    %v1145 = vunpack.c.l.b16 %v445
    %v1146 = vunpack.c.h.b16 %v445
    %v1147 = vunpack.c.l.b16 %v446
    %v1148 = vunpack.c.h.b16 %v446
    %v1149 = vunpack.c.l.b16 %v447
    %v1150 = vunpack.c.h.b16 %v447
    %v1151 = vunpack.c.l.b16 %v448
    %v1152 = vunpack.c.h.b16 %v448
    %v1153 = vunpack.c.l.b16 %v449
    %v1154 = vunpack.c.h.b16 %v449
    %v1155 = vunpack.c.l.b16 %v450
    %v1156 = vunpack.c.h.b16 %v450
    %v1157 = vunpack.c.l.b16 %v451
    %v1158 = vunpack.c.h.b16 %v451
    %v1159 = vunpack.c.l.b16 %v452
    %v1160 = vunpack.c.h.b16 %v452
    %v1161 = vunpack.c.l.b16 %v453
    %v1162 = vunpack.c.h.b16 %v453
    %v1163 = vunpack.c.l.b16 %v454
    %v1164 = vunpack.c.h.b16 %v454
    %v1165 = vunpack.c.l.b16 %v455
    %v1166 = vunpack.c.h.b16 %v455
    %v1167 = vunpack.c.l.b16 %v456
    %v1168 = vunpack.c.h.b16 %v456
    %v1169 = vunpack.c.l.b16 %v457
    %v1170 = vunpack.c.h.b16 %v457
    %v1171 = vunpack.c.l.b16 %v458
    %v1172 = vunpack.c.h.b16 %v458
    %v1173 = vunpack.c.l.b16 %v459
    %v1174 = vunpack.c.h.b16 %v459
    %v1175 = vunpack.c.l.b16 %v460
    %v1176 = vunpack.c.h.b16 %v460
    %v1177 = vunpack.c.l.b16 %v461
    %v1178 = vunpack.c.h.b16 %v461
    %v1179 = vunpack.c.l.b16 %v462
    %v1180 = vunpack.c.h.b16 %v462
    %v1181 = vunpack.c.l.b16 %v463
    %v1182 = vunpack.c.h.b16 %v463
    %v1183 = vunpack.c.l.b16 %v464
    %v1184 = vunpack.c.h.b16 %v464
    %v1185 = vunpack.c.l.b16 %v465
    %v1186 = vunpack.c.h.b16 %v465
    %v1187 = vunpack.c.l.b16 %v466
    %v1188 = vunpack.c.h.b16 %v466
    %v1189 = vunpack.c.l.b16 %v467
    %v1190 = vunpack.c.h.b16 %v467
    %v1191 = vunpack.c.l.b16 %v468
    %v1192 = vunpack.c.h.b16 %v468
    %v1193 = vunpack.c.l.b16 %v469
    %v1194 = vunpack.c.h.b16 %v469
    %v1195 = vunpack.c.l.b16 %v470
    %v1196 = vunpack.c.h.b16 %v470
    %v1197 = vunpack.c.l.b16 %v471
    %v1198 = vunpack.c.h.b16 %v471
    %v1199 = vunpack.c.l.b16 %v472
    %v1200 = vunpack.c.h.b16 %v472
    %v1201 = vunpack.c.l.b16 %v473
    %v1202 = vunpack.c.h.b16 %v473
    %v1203 = vunpack.c.l.b16 %v474
    %v1204 = vunpack.c.h.b16 %v474
    %v1205 = vunpack.c.l.b16 %v475
    %v1206 = vunpack.c.h.b16 %v475
    %v1207 = vunpack.c.l.b16 %v476
    %v1208 = vunpack.c.h.b16 %v476
    %v1209 = vunpack.c.l.b16 %v477
    %v1210 = vunpack.c.h.b16 %v477
    %v1211 = vunpack.c.l.b16 %v478
    %v1212 = vunpack.c.h.b16 %v478
    %v1213 = vunpack.c.l.b16 %v479
    %v1214 = vunpack.c.h.b16 %v479
    %v1215 = vunpack.c.l.b16 %v480
    %v1216 = vunpack.c.h.b16 %v480
    %v1217 = vunpack.c.l.b16 %v481
    %v1218 = vunpack.c.h.b16 %v481
    %v1219 = vunpack.c.l.b16 %v482
    %v1220 = vunpack.c.h.b16 %v482
    %v1221 = vunpack.c.l.b16 %v483
    %v1222 = vunpack.c.h.b16 %v483
    %v1223 = vunpack.c.l.b16 %v484
    %v1224 = vunpack.c.h.b16 %v484
    %v1225 = vunpack.c.l.b16 %v485
    %v1226 = vunpack.c.h.b16 %v485
    %v1227 = vunpack.c.l.b16 %v486
    %v1228 = vunpack.c.h.b16 %v486
    %v1229 = vunpack.c.l.b16 %v487
    %v1230 = vunpack.c.h.b16 %v487
    %v1231 = vunpack.c.l.b16 %v488
    %v1232 = vunpack.c.h.b16 %v488
    %v1233 = vunpack.c.l.b16 %v489
    %v1234 = vunpack.c.h.b16 %v489
    %v1235 = vunpack.c.l.b16 %v490
    %v1236 = vunpack.c.h.b16 %v490
    %v1237 = vunpack.c.l.b16 %v491
    %v1238 = vunpack.c.h.b16 %v491
    %v1239 = vunpack.c.l.b16 %v492
    %v1240 = vunpack.c.h.b16 %v492
    %v1241 = vunpack.c.l.b16 %v493
    %v1242 = vunpack.c.h.b16 %v493
    %v1243 = vunpack.c.l.b16 %v494
    %v1244 = vunpack.c.h.b16 %v494
    %v1245 = vunpack.c.l.b16 %v495
    %v1246 = vunpack.c.h.b16 %v495
    %v1247 = vunpack.c.l.b16 %v496
    %v1248 = vunpack.c.h.b16 %v496
    %v1249 = vunpack.c.l.b16 %v497
    %v1250 = vunpack.c.h.b16 %v497
    %v1251 = vunpack.c.l.b16 %v498
    %v1252 = vunpack.c.h.b16 %v498
    %v1253 = vunpack.c.l.b16 %v499
    %v1254 = vunpack.c.h.b16 %v499
    %v1255 = vunpack.c.l.b16 %v500
    %v1256 = vunpack.c.h.b16 %v500
    %v1257 = vunpack.c.l.b16 %v501
    %v1258 = vunpack.c.h.b16 %v501
    %v1259 = vunpack.c.l.b16 %v502
    %v1260 = vunpack.c.h.b16 %v502
    %v1261 = vunpack.c.l.b16 %v503
    %v1262 = vunpack.c.h.b16 %v503
    %v1263 = vunpack.c.l.b16 %v504
    %v1264 = vunpack.c.h.b16 %v504
    %v1265 = vunpack.c.l.b16 %v505
    %v1266 = vunpack.c.h.b16 %v505
    %v1267 = vunpack.c.l.b16 %v506
    %v1268 = vunpack.c.h.b16 %v506
    %v1269 = vunpack.c.l.b16 %v507
    %v1270 = vunpack.c.h.b16 %v507
    %v1271 = vunpack.c.l.b16 %v508
    %v1272 = vunpack.c.h.b16 %v508
    %v1273 = vunpack.c.l.b16 %v509
    %v1274 = vunpack.c.h.b16 %v509
    %v1275 = vunpack.c.l.b16 %v510
    %v1276 = vunpack.c.h.b16 %v510
    %v1277 = vunpack.c.l.b16 %v511
    %v1278 = vunpack.c.h.b16 %v511
    %v1279 = vunpack.c.l.b16 %v512
    %v1280 = vunpack.c.h.b16 %v512
    %v1281 = vunpack.c.l.b16 %v513
    %v1282 = vunpack.c.h.b16 %v513
    %v1283 = vunpack.c.l.b16 %v514
    %v1284 = vunpack.c.h.b16 %v514
    %v1285 = vunpack.c.l.b16 %v515
    %v1286 = vunpack.c.h.b16 %v515
    %v1287 = vunpack.c.l.b16 %v516
    %v1288 = vunpack.c.h.b16 %v516
    %v1289 = vunpack.c.l.b16 %v517
    %v1290 = vunpack.c.h.b16 %v517
    %v1291 = vunpack.c.l.b16 %v518
    %v1292 = vunpack.c.h.b16 %v518
    %v1293 = vunpack.c.l.b16 %v519
    %v1294 = vunpack.c.h.b16 %v519
    %v1295 = vunpack.c.l.b16 %v520
    %v1296 = vunpack.c.h.b16 %v520
    %v1297 = vunpack.c.l.b16 %v521
    %v1298 = vunpack.c.h.b16 %v521
    %v1299 = vunpack.c.l.b16 %v522
    %v1300 = vunpack.c.h.b16 %v522
    %v1301 = vunpack.c.l.b16 %v523
    %v1302 = vunpack.c.h.b16 %v523
    %v1303 = vunpack.c.l.b16 %v524
    %v1304 = vunpack.c.h.b16 %v524
    %v1305 = vunpack.c.l.b16 %v525
    %v1306 = vunpack.c.h.b16 %v525
    %v1307 = vunpack.c.l.b16 %v526
    %v1308 = vunpack.c.h.b16 %v526
    %v1309 = vunpack.c.l.b16 %v527
    %v1310 = vunpack.c.h.b16 %v527
    %v1311 = vunpack.c.l.b16 %v528
    %v1312 = vunpack.c.h.b16 %v528
    %v1313 = vunpack.c.l.b16 %v529
    %v1314 = vunpack.c.h.b16 %v529
    %v1315 = vunpack.c.l.b16 %v530
    %v1316 = vunpack.c.h.b16 %v530
    %v1317 = vunpack.c.l.b16 %v531
    %v1318 = vunpack.c.h.b16 %v531
    %v1319 = vunpack.c.l.b16 %v532
    %v1320 = vunpack.c.h.b16 %v532
    %v1321 = vunpack.c.l.b16 %v533
    %v1322 = vunpack.c.h.b16 %v533
    %v1323 = vunpack.c.l.b16 %v534
    %v1324 = vunpack.c.h.b16 %v534
    %v1325 = vunpack.c.l.b16 %v535
    %v1326 = vunpack.c.h.b16 %v535
    %v1327 = vunpack.c.l.b16 %v536
    %v1328 = vunpack.c.h.b16 %v536
    %v1329 = vpack.c.b16 %v823, %v801
    %v1330 = vpack.c.b16 %v824, %v802
    %v1331 = vpack.c.b16 %v825, %v803
    %v1332 = vpack.c.b16 %v826, %v804
    %v1333 = vpack.c.b16 %v827, %v805
    %v1334 = vpack.c.b16 %v828, %v806
    %v1335 = vpack.c.b16 %v829, %v807
    %v1336 = vpack.c.b16 %v830, %v808
    %v1337 = vpack.c.b16 %v831, %v809
    %v1338 = vpack.c.b16 %v832, %v810
    %v1339 = vpack.c.b16 %v833, %v811
    %v1340 = vpack.c.b16 %v834, %v812
    %v1341 = vpack.c.b16 %v835, %v813
    %v1342 = vpack.c.b16 %v836, %v814
    %v1343 = vpack.c.b16 %v837, %v815
    %v1344 = vpack.c.b16 %v838, %v816
    %v1345 = vpack.c.b16 %v839, %v817
    %v1346 = vpack.c.b16 %v840, %v818
    %v1347 = vpack.c.b16 %v841, %v819
    %v1348 = vpack.c.b16 %v842, %v820
    %v1349 = vpack.c.b16 %v843, %v821
    %v1350 = vpack.c.b16 %v844, %v822
    %v1351 = vpack.c.b16 %v867, %v845
    %v1352 = vpack.c.b16 %v868, %v846
    %v1353 = vpack.c.b16 %v869, %v847
    %v1354 = vpack.c.b16 %v870, %v848
    %v1355 = vpack.c.b16 %v871, %v849
    %v1356 = vpack.c.b16 %v872, %v850
    %v1357 = vpack.c.b16 %v873, %v851
    %v1358 = vpack.c.b16 %v874, %v852
    %v1359 = vpack.c.b16 %v875, %v853
    %v1360 = vpack.c.b16 %v876, %v854
    %v1361 = vpack.c.b16 %v877, %v855
    %v1362 = vpack.c.b16 %v878, %v856
    %v1363 = vpack.c.b16 %v879, %v857
    %v1364 = vpack.c.b16 %v880, %v858
    %v1365 = vpack.c.b16 %v881, %v859
    %v1366 = vpack.c.b16 %v882, %v860
    %v1367 = vpack.c.b16 %v883, %v861
    %v1368 = vpack.c.b16 %v884, %v862
    %v1369 = vpack.c.b16 %v885, %v863
    %v1370 = vpack.c.b16 %v886, %v864
    %v1371 = vpack.c.b16 %v887, %v865
    %v1372 = vpack.c.b16 %v888, %v866
    %v1373 = vpack.c.b16 %v911, %v889
    %v1374 = vpack.c.b16 %v912, %v890
    %v1375 = vpack.c.b16 %v913, %v891
    %v1376 = vpack.c.b16 %v914, %v892
    %v1377 = vpack.c.b16 %v915, %v893
    %v1378 = vpack.c.b16 %v916, %v894
    %v1379 = vpack.c.b16 %v917, %v895
    %v1380 = vpack.c.b16 %v918, %v896
    %v1381 = vpack.c.b16 %v919, %v897
    %v1382 = vpack.c.b16 %v920, %v898
    %v1383 = vpack.c.b16 %v921, %v899
    %v1384 = vpack.c.b16 %v922, %v900
    %v1385 = vpack.c.b16 %v923, %v901
    %v1386 = vpack.c.b16 %v924, %v902
    %v1387 = vpack.c.b16 %v925, %v903
    %v1388 = vpack.c.b16 %v926, %v904
    %v1389 = vpack.c.b16 %v927, %v905
    %v1390 = vpack.c.b16 %v928, %v906
    %v1391 = vpack.c.b16 %v929, %v907
    %v1392 = vpack.c.b16 %v930, %v908
    %v1393 = vpack.c.b16 %v931, %v909
    %v1394 = vpack.c.b16 %v932, %v910
    %v1395 = vpack.c.b16 %v955, %v933
    %v1396 = vpack.c.b16 %v956, %v934
    %v1397 = vpack.c.b16 %v957, %v935
    %v1398 = vpack.c.b16 %v958, %v936
    %v1399 = vpack.c.b16 %v959, %v937
    %v1400 = vpack.c.b16 %v960, %v938
    %v1401 = vpack.c.b16 %v961, %v939
    %v1402 = vpack.c.b16 %v962, %v940
    %v1403 = vpack.c.b16 %v963, %v941
    %v1404 = vpack.c.b16 %v964, %v942
    %v1405 = vpack.c.b16 %v965, %v943
    %v1406 = vpack.c.b16 %v966, %v944
    %v1407 = vpack.c.b16 %v967, %v945
    %v1408 = vpack.c.b16 %v968, %v946
    %v1409 = vpack.c.b16 %v969, %v947
    %v1410 = vpack.c.b16 %v970, %v948
    %v1411 = vpack.c.b16 %v971, %v949
    %v1412 = vpack.c.b16 %v972, %v950
    %v1413 = vpack.c.b16 %v973, %v951
    %v1414 = vpack.c.b16 %v974, %v952
    %v1415 = vpack.c.b16 %v975, %v953
    %v1416 = vpack.c.b16 %v976, %v954
    %v1417 = vpack.c.b16 %v999, %v977
    %v1418 = vpack.c.b16 %v1000, %v978
    %v1419 = vpack.c.b16 %v1001, %v979
    %v1420 = vpack.c.b16 %v1002, %v980
    %v1421 = vpack.c.b16 %v1003, %v981
    %v1422 = vpack.c.b16 %v1004, %v982
    %v1423 = vpack.c.b16 %v1005, %v983
    %v1424 = vpack.c.b16 %v1006, %v984
    %v1425 = vpack.c.b16 %v1007, %v985
    %v1426 = vpack.c.b16 %v1008, %v986
    %v1427 = vpack.c.b16 %v1009, %v987
    %v1428 = vpack.c.b16 %v1010, %v988
    %v1429 = vpack.c.b16 %v1011, %v989
    %v1430 = vpack.c.b16 %v1012, %v990
    %v1431 = vpack.c.b16 %v1013, %v991
    %v1432 = vpack.c.b16 %v1014, %v992
    %v1433 = vpack.c.b16 %v1015, %v993
    %v1434 = vpack.c.b16 %v1016, %v994
    %v1435 = vpack.c.b16 %v1017, %v995
    %v1436 = vpack.c.b16 %v1018, %v996
    %v1437 = vpack.c.b16 %v1019, %v997
    %v1438 = vpack.c.b16 %v1020, %v998
    %v1439 = vpack.c.b16 %v1043, %v1021
    %v1440 = vpack.c.b16 %v1044, %v1022
    %v1441 = vpack.c.b16 %v1045, %v1023
    %v1442 = vpack.c.b16 %v1046, %v1024
    %v1443 = vpack.c.b16 %v1047, %v1025
    %v1444 = vpack.c.b16 %v1048, %v1026
    %v1445 = vpack.c.b16 %v1049, %v1027
    %v1446 = vpack.c.b16 %v1050, %v1028
    %v1447 = vpack.c.b16 %v1051, %v1029
    %v1448 = vpack.c.b16 %v1052, %v1030
    %v1449 = vpack.c.b16 %v1053, %v1031
    %v1450 = vpack.c.b16 %v1054, %v1032
    %v1451 = vpack.c.b16 %v1055, %v1033
    %v1452 = vpack.c.b16 %v1056, %v1034
    %v1453 = vpack.c.b16 %v1057, %v1035
    %v1454 = vpack.c.b16 %v1058, %v1036
    %v1455 = vpack.c.b16 %v1059, %v1037
    %v1456 = vpack.c.b16 %v1060, %v1038
    %v1457 = vpack.c.b16 %v1061, %v1039
    %v1458 = vpack.c.b16 %v1062, %v1040
    %v1459 = vpack.c.b16 %v1063, %v1041
    %v1460 = vpack.c.b16 %v1064, %v1042
    %v1461 = vpack.c.b16 %v1087, %v1065
    %v1462 = vpack.c.b16 %v1088, %v1066
    %v1463 = vpack.c.b16 %v1089, %v1067
    %v1464 = vpack.c.b16 %v1090, %v1068
    %v1465 = vpack.c.b16 %v1091, %v1069
    %v1466 = vpack.c.b16 %v1092, %v1070
    %v1467 = vpack.c.b16 %v1093, %v1071
    %v1468 = vpack.c.b16 %v1094, %v1072
    %v1469 = vpack.c.b16 %v1095, %v1073
    %v1470 = vpack.c.b16 %v1096, %v1074
    %v1471 = vpack.c.b16 %v1097, %v1075
    %v1472 = vpack.c.b16 %v1098, %v1076
    %v1473 = vpack.c.b16 %v1099, %v1077
    %v1474 = vpack.c.b16 %v1100, %v1078
    %v1475 = vpack.c.b16 %v1101, %v1079
    %v1476 = vpack.c.b16 %v1102, %v1080
    %v1477 = vpack.c.b16 %v1103, %v1081
    %v1478 = vpack.c.b16 %v1104, %v1082
    %v1479 = vpack.c.b16 %v1105, %v1083
    %v1480 = vpack.c.b16 %v1106, %v1084
    %v1481 = vpack.c.b16 %v1107, %v1085
    %v1482 = vpack.c.b16 %v1108, %v1086
    %v1483 = vpack.c.b16 %v1131, %v1109
    %v1484 = vpack.c.b16 %v1132, %v1110
    %v1485 = vpack.c.b16 %v1133, %v1111
    %v1486 = vpack.c.b16 %v1134, %v1112
    %v1487 = vpack.c.b16 %v1135, %v1113
    %v1488 = vpack.c.b16 %v1136, %v1114
    %v1489 = vpack.c.b16 %v1137, %v1115
    %v1490 = vpack.c.b16 %v1138, %v1116
    %v1491 = vpack.c.b16 %v1139, %v1117
    %v1492 = vpack.c.b16 %v1140, %v1118
    %v1493 = vpack.c.b16 %v1141, %v1119
    %v1494 = vpack.c.b16 %v1142, %v1120
    %v1495 = vpack.c.b16 %v1143, %v1121
    %v1496 = vpack.c.b16 %v1144, %v1122
    %v1497 = vpack.c.b16 %v1145, %v1123
    %v1498 = vpack.c.b16 %v1146, %v1124
    %v1499 = vpack.c.b16 %v1147, %v1125
    %v1500 = vpack.c.b16 %v1148, %v1126
    %v1501 = vpack.c.b16 %v1149, %v1127
    %v1502 = vpack.c.b16 %v1150, %v1128
    %v1503 = vpack.c.b16 %v1151, %v1129
    %v1504 = vpack.c.b16 %v1152, %v1130
    %v1505 = vpack.c.b16 %v1175, %v1153
    %v1506 = vpack.c.b16 %v1176, %v1154
    %v1507 = vpack.c.b16 %v1177, %v1155
    %v1508 = vpack.c.b16 %v1178, %v1156
    %v1509 = vpack.c.b16 %v1179, %v1157
    %v1510 = vpack.c.b16 %v1180, %v1158
    %v1511 = vpack.c.b16 %v1181, %v1159
    %v1512 = vpack.c.b16 %v1182, %v1160
    %v1513 = vpack.c.b16 %v1183, %v1161
    %v1514 = vpack.c.b16 %v1184, %v1162
    %v1515 = vpack.c.b16 %v1185, %v1163
    %v1516 = vpack.c.b16 %v1186, %v1164
    %v1517 = vpack.c.b16 %v1187, %v1165
    %v1518 = vpack.c.b16 %v1188, %v1166
    %v1519 = vpack.c.b16 %v1189, %v1167
    %v1520 = vpack.c.b16 %v1190, %v1168
    %v1521 = vpack.c.b16 %v1191, %v1169
    %v1522 = vpack.c.b16 %v1192, %v1170
    %v1523 = vpack.c.b16 %v1193, %v1171
    %v1524 = vpack.c.b16 %v1194, %v1172
    %v1525 = vpack.c.b16 %v1195, %v1173
    %v1526 = vpack.c.b16 %v1196, %v1174
    %v1527 = vpack.c.b16 %v1219, %v1197
    %v1528 = vpack.c.b16 %v1220, %v1198
    %v1529 = vpack.c.b16 %v1221, %v1199
    %v1530 = vpack.c.b16 %v1222, %v1200
    %v1531 = vpack.c.b16 %v1223, %v1201
    %v1532 = vpack.c.b16 %v1224, %v1202
    %v1533 = vpack.c.b16 %v1225, %v1203
    %v1534 = vpack.c.b16 %v1226, %v1204
    %v1535 = vpack.c.b16 %v1227, %v1205
    %v1536 = vpack.c.b16 %v1228, %v1206
    %v1537 = vpack.c.b16 %v1229, %v1207
    %v1538 = vpack.c.b16 %v1230, %v1208
    %v1539 = vpack.c.b16 %v1231, %v1209
    %v1540 = vpack.c.b16 %v1232, %v1210
    %v1541 = vpack.c.b16 %v1233, %v1211
    %v1542 = vpack.c.b16 %v1234, %v1212
    %v1543 = vpack.c.b16 %v1235, %v1213
    %v1544 = vpack.c.b16 %v1236, %v1214
    %v1545 = vpack.c.b16 %v1237, %v1215
    %v1546 = vpack.c.b16 %v1238, %v1216
    %v1547 = vpack.c.b16 %v1239, %v1217
    %v1548 = vpack.c.b16 %v1240, %v1218
    %v1549 = vpack.c.b16 %v1263, %v1241
    %v1550 = vpack.c.b16 %v1264, %v1242
    %v1551 = vpack.c.b16 %v1265, %v1243
    %v1552 = vpack.c.b16 %v1266, %v1244
    %v1553 = vpack.c.b16 %v1267, %v1245
    %v1554 = vpack.c.b16 %v1268, %v1246
    %v1555 = vpack.c.b16 %v1269, %v1247
    %v1556 = vpack.c.b16 %v1270, %v1248
    %v1557 = vpack.c.b16 %v1271, %v1249
    %v1558 = vpack.c.b16 %v1272, %v1250
    %v1559 = vpack.c.b16 %v1273, %v1251
    %v1560 = vpack.c.b16 %v1274, %v1252
    %v1561 = vpack.c.b16 %v1275, %v1253
    %v1562 = vpack.c.b16 %v1276, %v1254
    %v1563 = vpack.c.b16 %v1277, %v1255
    %v1564 = vpack.c.b16 %v1278, %v1256
    %v1565 = vpack.c.b16 %v1279, %v1257
    %v1566 = vpack.c.b16 %v1280, %v1258
    %v1567 = vpack.c.b16 %v1281, %v1259
    %v1568 = vpack.c.b16 %v1282, %v1260
    %v1569 = vpack.c.b16 %v1283, %v1261
    %v1570 = vpack.c.b16 %v1284, %v1262
    %v1571 = vpack.c.b16 %v1307, %v1285
    %v1572 = vpack.c.b16 %v1308, %v1286
    %v1573 = vpack.c.b16 %v1309, %v1287
    %v1574 = vpack.c.b16 %v1310, %v1288
    %v1575 = vpack.c.b16 %v1311, %v1289
    %v1576 = vpack.c.b16 %v1312, %v1290
    %v1577 = vpack.c.b16 %v1313, %v1291
    %v1578 = vpack.c.b16 %v1314, %v1292
    %v1579 = vpack.c.b16 %v1315, %v1293
    %v1580 = vpack.c.b16 %v1316, %v1294
    %v1581 = vpack.c.b16 %v1317, %v1295
    %v1582 = vpack.c.b16 %v1318, %v1296
    %v1583 = vpack.c.b16 %v1319, %v1297
    %v1584 = vpack.c.b16 %v1320, %v1298
    %v1585 = vpack.c.b16 %v1321, %v1299
    %v1586 = vpack.c.b16 %v1322, %v1300
    %v1587 = vpack.c.b16 %v1323, %v1301
    %v1588 = vpack.c.b16 %v1324, %v1302
    %v1589 = vpack.c.b16 %v1325, %v1303
    %v1590 = vpack.c.b16 %v1326, %v1304
    %v1591 = vpack.c.b16 %v1327, %v1305
    %v1592 = vpack.c.b16 %v1328, %v1306
    %v1858 = vsel %vm262, %v272, 0
    %1860 = vmatprep.subr.bf16.mxu0 %v1484
    %1861 = vmatpush1.bf16.msra.mxu0 %v1483
    %1862 = vmatprep.subr.bf16.mxu0 %v1462
    %1863 = vmatpush1.bf16.msra.mxu0 %v1461
    %1864 = vmatprep.subr.bf16.mxu0 %v1440
    %1865 = vmatpush1.bf16.msra.mxu0 %v1439
    %1866 = vmatprep.subr.bf16.mxu0 %v1418
    %1867 = vmatpush1.bf16.msra.mxu0 %v1417
    %1868 = vmatprep.subr.bf16.mxu0 %v1396
    %1869 = vmatpush1.bf16.msra.mxu0 %v1395
    %1870 = vmatprep.subr.bf16.mxu0 %v1374
    %1871 = vmatpush1.bf16.msra.mxu0 %v1373
    %1872 = vmatprep.subr.bf16.mxu0 %v1352
    %1873 = vmatpush1.bf16.msra.mxu0 %v1351
    %1874 = vmatprep.subr.bf16.mxu0 %v1330
    %1875 = vmatpush1.bf16.msra.mxu0 %v1329
    %1876 = vmatprep.subr.bf16.mxu0 0
    %1877 = vmatpush2.bf16.msra.mxu0 0
    %1878 = vmatprep.subr.bf16.mxu0 0
    %1879 = vmatpush2.bf16.msra.mxu0 0
    %1880 = vmatprep.subr.bf16.mxu0 0
    %1881 = vmatpush2.bf16.msra.mxu0 0
    %1882 = vmatprep.subr.bf16.mxu0 0
    %1883 = vmatpush2.bf16.msra.mxu0 0
    %1884 = vmatprep.subr.bf16.mxu0 %v1572
    %1885 = vmatpush2.bf16.msra.mxu0 %v1571
    %1886 = vmatprep.subr.bf16.mxu0 %v1550
    %1887 = vmatpush2.bf16.msra.mxu0 %v1549
    %1888 = vmatprep.subr.bf16.mxu0 %v1528
    %1889 = vmatpush2.bf16.msra.mxu0 %v1527
    %1890 = vmatprep.subr.bf16.mxu0 %v1506
    %1891 = vmatpush2.bf16.msra.mxu0 %v1505
    %1892 = vmatprep.mubr.bf16.mxu0 %v1858
    %1893 = vmatmul.mubr.bf16.gmra.mxu0 %v271
    %v1894 = vpop.f32.mrf.mxu0
    %v1895 = vadd.f32 0.0, %v1894
    %v1896 = vpop.f32.mrf.mxu0
    %v1897 = vadd.f32 0.0, %v1896
    %v1898 = vpop.f32.mrf.mxu0
    %v1899 = vpop.f32.mrf.mxu0
    %1900 = vdwg.mxu0
    %1901 = vmatprep.subr.bf16.mxu0 %v1486
    %1902 = vmatpush1.bf16.msra.mxu0 %v1485
    %1903 = vmatprep.subr.bf16.mxu0 %v1464
    %1904 = vmatpush1.bf16.msra.mxu0 %v1463
    %1905 = vmatprep.subr.bf16.mxu0 %v1442
    %1906 = vmatpush1.bf16.msra.mxu0 %v1441
    %1907 = vmatprep.subr.bf16.mxu0 %v1420
    %1908 = vmatpush1.bf16.msra.mxu0 %v1419
    %1909 = vmatprep.subr.bf16.mxu0 %v1398
    %1910 = vmatpush1.bf16.msra.mxu0 %v1397
    %1911 = vmatprep.subr.bf16.mxu0 %v1376
    %1912 = vmatpush1.bf16.msra.mxu0 %v1375
    %1913 = vmatprep.subr.bf16.mxu0 %v1354
    %1914 = vmatpush1.bf16.msra.mxu0 %v1353
    %1915 = vmatprep.subr.bf16.mxu0 %v1332
    %1916 = vmatpush1.bf16.msra.mxu0 %v1331
    %1917 = vmatprep.subr.bf16.mxu0 0
    %1918 = vmatpush2.bf16.msra.mxu0 0
    %1919 = vmatprep.subr.bf16.mxu0 0
    %1920 = vmatpush2.bf16.msra.mxu0 0
    %1921 = vmatprep.subr.bf16.mxu0 0
    %1922 = vmatpush2.bf16.msra.mxu0 0
    %1923 = vmatprep.subr.bf16.mxu0 0
    %1924 = vmatpush2.bf16.msra.mxu0 0
    %1925 = vmatprep.subr.bf16.mxu0 %v1574
    %1926 = vmatpush2.bf16.msra.mxu0 %v1573
    %1927 = vmatprep.subr.bf16.mxu0 %v1552
    %1928 = vmatpush2.bf16.msra.mxu0 %v1551
    %1929 = vmatprep.subr.bf16.mxu0 %v1530
    %1930 = vmatpush2.bf16.msra.mxu0 %v1529
    %1931 = vmatprep.subr.bf16.mxu0 %v1508
    %1932 = vmatpush2.bf16.msra.mxu0 %v1507
    %1933 = vmatprep.mubr.bf16.mxu0 %v1858
    %1934 = vmatmul.mubr.bf16.gmra.mxu0 %v271
    %v1935 = vpop.f32.mrf.mxu0
    %v1936 = vadd.f32 0.0, %v1935
    %v1937 = vpop.f32.mrf.mxu0
    %v1938 = vadd.f32 0.0, %v1937
    %v1939 = vpop.f32.mrf.mxu0
    %v1940 = vpop.f32.mrf.mxu0
    %1941 = vdwg.mxu0
    %1942 = vmatprep.subr.bf16.mxu0 %v1488
    %1943 = vmatpush1.bf16.msra.mxu0 %v1487
    %1944 = vmatprep.subr.bf16.mxu0 %v1466
    %1945 = vmatpush1.bf16.msra.mxu0 %v1465
    %1946 = vmatprep.subr.bf16.mxu0 %v1444
    %1947 = vmatpush1.bf16.msra.mxu0 %v1443
    %1948 = vmatprep.subr.bf16.mxu0 %v1422
    %1949 = vmatpush1.bf16.msra.mxu0 %v1421
    %1950 = vmatprep.subr.bf16.mxu0 %v1400
    %1951 = vmatpush1.bf16.msra.mxu0 %v1399
    %1952 = vmatprep.subr.bf16.mxu0 %v1378
    %1953 = vmatpush1.bf16.msra.mxu0 %v1377
    %1954 = vmatprep.subr.bf16.mxu0 %v1356
    %1955 = vmatpush1.bf16.msra.mxu0 %v1355
    %1956 = vmatprep.subr.bf16.mxu0 %v1334
    %1957 = vmatpush1.bf16.msra.mxu0 %v1333
    %1958 = vmatprep.subr.bf16.mxu0 0
    %1959 = vmatpush2.bf16.msra.mxu0 0
    %1960 = vmatprep.subr.bf16.mxu0 0
    %1961 = vmatpush2.bf16.msra.mxu0 0
    %1962 = vmatprep.subr.bf16.mxu0 0
    %1963 = vmatpush2.bf16.msra.mxu0 0
    %1964 = vmatprep.subr.bf16.mxu0 0
    %1965 = vmatpush2.bf16.msra.mxu0 0
    %1966 = vmatprep.subr.bf16.mxu0 %v1576
    %1967 = vmatpush2.bf16.msra.mxu0 %v1575
    %1968 = vmatprep.subr.bf16.mxu0 %v1554
    %1969 = vmatpush2.bf16.msra.mxu0 %v1553
    %1970 = vmatprep.subr.bf16.mxu0 %v1532
    %1971 = vmatpush2.bf16.msra.mxu0 %v1531
    %1972 = vmatprep.subr.bf16.mxu0 %v1510
    %1973 = vmatpush2.bf16.msra.mxu0 %v1509
    %1974 = vmatprep.mubr.bf16.mxu0 %v1858
    %1975 = vmatmul.mubr.bf16.gmra.mxu0 %v271
    %v1976 = vpop.f32.mrf.mxu0
    %v1977 = vadd.f32 0.0, %v1976
    %v1978 = vpop.f32.mrf.mxu0
    %v1979 = vadd.f32 0.0, %v1978
    %v1980 = vpop.f32.mrf.mxu0
    %v1981 = vpop.f32.mrf.mxu0
    %1982 = vdwg.mxu0
    %1983 = vmatprep.subr.bf16.mxu0 %v1490
    %1984 = vmatpush1.bf16.msra.mxu0 %v1489
    %1985 = vmatprep.subr.bf16.mxu0 %v1468
    %1986 = vmatpush1.bf16.msra.mxu0 %v1467
    %1987 = vmatprep.subr.bf16.mxu0 %v1446
    %1988 = vmatpush1.bf16.msra.mxu0 %v1445
    %1989 = vmatprep.subr.bf16.mxu0 %v1424
    %1990 = vmatpush1.bf16.msra.mxu0 %v1423
    %1991 = vmatprep.subr.bf16.mxu0 %v1402
    %1992 = vmatpush1.bf16.msra.mxu0 %v1401
    %1993 = vmatprep.subr.bf16.mxu0 %v1380
    %1994 = vmatpush1.bf16.msra.mxu0 %v1379
    %1995 = vmatprep.subr.bf16.mxu0 %v1358
    %1996 = vmatpush1.bf16.msra.mxu0 %v1357
    %1997 = vmatprep.subr.bf16.mxu0 %v1336
    %1998 = vmatpush1.bf16.msra.mxu0 %v1335
    %1999 = vmatprep.subr.bf16.mxu0 0
    %2000 = vmatpush2.bf16.msra.mxu0 0
    %2001 = vmatprep.subr.bf16.mxu0 0
    %2002 = vmatpush2.bf16.msra.mxu0 0
    %2003 = vmatprep.subr.bf16.mxu0 0
    %2004 = vmatpush2.bf16.msra.mxu0 0
    %2005 = vmatprep.subr.bf16.mxu0 0
    %2006 = vmatpush2.bf16.msra.mxu0 0
    %2007 = vmatprep.subr.bf16.mxu0 %v1578
    %2008 = vmatpush2.bf16.msra.mxu0 %v1577
    %2009 = vmatprep.subr.bf16.mxu0 %v1556
    %2010 = vmatpush2.bf16.msra.mxu0 %v1555
    %2011 = vmatprep.subr.bf16.mxu0 %v1534
    %2012 = vmatpush2.bf16.msra.mxu0 %v1533
    %2013 = vmatprep.subr.bf16.mxu0 %v1512
    %2014 = vmatpush2.bf16.msra.mxu0 %v1511
    %2015 = vmatprep.mubr.bf16.mxu0 %v1858
    %2016 = vmatmul.mubr.bf16.gmra.mxu0 %v271
    %v2017 = vpop.f32.mrf.mxu0
    %v2018 = vadd.f32 0.0, %v2017
    %v2019 = vpop.f32.mrf.mxu0
    %v2020 = vadd.f32 0.0, %v2019
    %v2021 = vpop.f32.mrf.mxu0
    %v2022 = vpop.f32.mrf.mxu0
    %2023 = vdwg.mxu0
    %2024 = vmatprep.subr.bf16.mxu0 %v1492
    %2025 = vmatpush1.bf16.msra.mxu0 %v1491
    %2026 = vmatprep.subr.bf16.mxu0 %v1470
    %2027 = vmatpush1.bf16.msra.mxu0 %v1469
    %2028 = vmatprep.subr.bf16.mxu0 %v1448
    %2029 = vmatpush1.bf16.msra.mxu0 %v1447
    %2030 = vmatprep.subr.bf16.mxu0 %v1426
    %2031 = vmatpush1.bf16.msra.mxu0 %v1425
    %2032 = vmatprep.subr.bf16.mxu0 %v1404
    %2033 = vmatpush1.bf16.msra.mxu0 %v1403
    %2034 = vmatprep.subr.bf16.mxu0 %v1382
    %2035 = vmatpush1.bf16.msra.mxu0 %v1381
    %2036 = vmatprep.subr.bf16.mxu0 %v1360
    %2037 = vmatpush1.bf16.msra.mxu0 %v1359
    %2038 = vmatprep.subr.bf16.mxu0 %v1338
    %2039 = vmatpush1.bf16.msra.mxu0 %v1337
    %2040 = vmatprep.subr.bf16.mxu0 0
    %2041 = vmatpush2.bf16.msra.mxu0 0
    %2042 = vmatprep.subr.bf16.mxu0 0
    %2043 = vmatpush2.bf16.msra.mxu0 0
    %2044 = vmatprep.subr.bf16.mxu0 0
    %2045 = vmatpush2.bf16.msra.mxu0 0
    %2046 = vmatprep.subr.bf16.mxu0 0
    %2047 = vmatpush2.bf16.msra.mxu0 0
    %2048 = vmatprep.subr.bf16.mxu0 %v1580
    %2049 = vmatpush2.bf16.msra.mxu0 %v1579
    %2050 = vmatprep.subr.bf16.mxu0 %v1558
    %2051 = vmatpush2.bf16.msra.mxu0 %v1557
    %2052 = vmatprep.subr.bf16.mxu0 %v1536
    %2053 = vmatpush2.bf16.msra.mxu0 %v1535
    %2054 = vmatprep.subr.bf16.mxu0 %v1514
    %2055 = vmatpush2.bf16.msra.mxu0 %v1513
    %2056 = vmatprep.mubr.bf16.mxu0 %v1858
    %2057 = vmatmul.mubr.bf16.gmra.mxu0 %v271
    %v2058 = vpop.f32.mrf.mxu0
    %v2059 = vadd.f32 0.0, %v2058
    %v2060 = vpop.f32.mrf.mxu0
    %v2061 = vadd.f32 0.0, %v2060
    %v2062 = vpop.f32.mrf.mxu0
    %v2063 = vpop.f32.mrf.mxu0
    %2064 = vdwg.mxu0
    %2065 = vmatprep.subr.bf16.mxu0 %v1494
    %2066 = vmatpush1.bf16.msra.mxu0 %v1493
    %2067 = vmatprep.subr.bf16.mxu0 %v1472
    %2068 = vmatpush1.bf16.msra.mxu0 %v1471
    %2069 = vmatprep.subr.bf16.mxu0 %v1450
    %2070 = vmatpush1.bf16.msra.mxu0 %v1449
    %2071 = vmatprep.subr.bf16.mxu0 %v1428
    %2072 = vmatpush1.bf16.msra.mxu0 %v1427
    %2073 = vmatprep.subr.bf16.mxu0 %v1406
    %2074 = vmatpush1.bf16.msra.mxu0 %v1405
    %2075 = vmatprep.subr.bf16.mxu0 %v1384
    %2076 = vmatpush1.bf16.msra.mxu0 %v1383
    %2077 = vmatprep.subr.bf16.mxu0 %v1362
    %2078 = vmatpush1.bf16.msra.mxu0 %v1361
    %2079 = vmatprep.subr.bf16.mxu0 %v1340
    %2080 = vmatpush1.bf16.msra.mxu0 %v1339
    %2081 = vmatprep.subr.bf16.mxu0 0
    %2082 = vmatpush2.bf16.msra.mxu0 0
    %2083 = vmatprep.subr.bf16.mxu0 0
    %2084 = vmatpush2.bf16.msra.mxu0 0
    %2085 = vmatprep.subr.bf16.mxu0 0
    %2086 = vmatpush2.bf16.msra.mxu0 0
    %2087 = vmatprep.subr.bf16.mxu0 0
    %2088 = vmatpush2.bf16.msra.mxu0 0
    %2089 = vmatprep.subr.bf16.mxu0 %v1582
    %2090 = vmatpush2.bf16.msra.mxu0 %v1581
    %2091 = vmatprep.subr.bf16.mxu0 %v1560
    %2092 = vmatpush2.bf16.msra.mxu0 %v1559
    %2093 = vmatprep.subr.bf16.mxu0 %v1538
    %2094 = vmatpush2.bf16.msra.mxu0 %v1537
    %2095 = vmatprep.subr.bf16.mxu0 %v1516
    %2096 = vmatpush2.bf16.msra.mxu0 %v1515
    %2097 = vmatprep.mubr.bf16.mxu0 %v1858
    %2098 = vmatmul.mubr.bf16.gmra.mxu0 %v271
    %v2099 = vpop.f32.mrf.mxu0
    %v2100 = vadd.f32 0.0, %v2099
    %v2101 = vpop.f32.mrf.mxu0
    %v2102 = vadd.f32 0.0, %v2101
    %v2103 = vpop.f32.mrf.mxu0
    %v2104 = vpop.f32.mrf.mxu0
    %2105 = vdwg.mxu0
    %2106 = vmatprep.subr.bf16.mxu0 %v1496
    %2107 = vmatpush1.bf16.msra.mxu0 %v1495
    %2108 = vmatprep.subr.bf16.mxu0 %v1474
    %2109 = vmatpush1.bf16.msra.mxu0 %v1473
    %2110 = vmatprep.subr.bf16.mxu0 %v1452
    %2111 = vmatpush1.bf16.msra.mxu0 %v1451
    %2112 = vmatprep.subr.bf16.mxu0 %v1430
    %2113 = vmatpush1.bf16.msra.mxu0 %v1429
    %2114 = vmatprep.subr.bf16.mxu0 %v1408
    %2115 = vmatpush1.bf16.msra.mxu0 %v1407
    %2116 = vmatprep.subr.bf16.mxu0 %v1386
    %2117 = vmatpush1.bf16.msra.mxu0 %v1385
    %2118 = vmatprep.subr.bf16.mxu0 %v1364
    %2119 = vmatpush1.bf16.msra.mxu0 %v1363
    %2120 = vmatprep.subr.bf16.mxu0 %v1342
    %2121 = vmatpush1.bf16.msra.mxu0 %v1341
    %2122 = vmatprep.subr.bf16.mxu0 0
    %2123 = vmatpush2.bf16.msra.mxu0 0
    %2124 = vmatprep.subr.bf16.mxu0 0
    %2125 = vmatpush2.bf16.msra.mxu0 0
    %2126 = vmatprep.subr.bf16.mxu0 0
    %2127 = vmatpush2.bf16.msra.mxu0 0
    %2128 = vmatprep.subr.bf16.mxu0 0
    %2129 = vmatpush2.bf16.msra.mxu0 0
    %2130 = vmatprep.subr.bf16.mxu0 %v1584
    %2131 = vmatpush2.bf16.msra.mxu0 %v1583
    %2132 = vmatprep.subr.bf16.mxu0 %v1562
    %2133 = vmatpush2.bf16.msra.mxu0 %v1561
    %2134 = vmatprep.subr.bf16.mxu0 %v1540
    %2135 = vmatpush2.bf16.msra.mxu0 %v1539
    %2136 = vmatprep.subr.bf16.mxu0 %v1518
    %2137 = vmatpush2.bf16.msra.mxu0 %v1517
    %2138 = vmatprep.mubr.bf16.mxu0 %v1858
    %2139 = vmatmul.mubr.bf16.gmra.mxu0 %v271
    %v2140 = vpop.f32.mrf.mxu0
    %v2141 = vadd.f32 0.0, %v2140
    %v2142 = vpop.f32.mrf.mxu0
    %v2143 = vadd.f32 0.0, %v2142
    %v2144 = vpop.f32.mrf.mxu0
    %v2145 = vpop.f32.mrf.mxu0
    %2146 = vdwg.mxu0
    %2147 = vmatprep.subr.bf16.mxu0 %v1498
    %2148 = vmatpush1.bf16.msra.mxu0 %v1497
    %2149 = vmatprep.subr.bf16.mxu0 %v1476
    %2150 = vmatpush1.bf16.msra.mxu0 %v1475
    %2151 = vmatprep.subr.bf16.mxu0 %v1454
    %2152 = vmatpush1.bf16.msra.mxu0 %v1453
    %2153 = vmatprep.subr.bf16.mxu0 %v1432
    %2154 = vmatpush1.bf16.msra.mxu0 %v1431
    %2155 = vmatprep.subr.bf16.mxu0 %v1410
    %2156 = vmatpush1.bf16.msra.mxu0 %v1409
    %2157 = vmatprep.subr.bf16.mxu0 %v1388
    %2158 = vmatpush1.bf16.msra.mxu0 %v1387
    %2159 = vmatprep.subr.bf16.mxu0 %v1366
    %2160 = vmatpush1.bf16.msra.mxu0 %v1365
    %2161 = vmatprep.subr.bf16.mxu0 %v1344
    %2162 = vmatpush1.bf16.msra.mxu0 %v1343
    %2163 = vmatprep.subr.bf16.mxu0 0
    %2164 = vmatpush2.bf16.msra.mxu0 0
    %2165 = vmatprep.subr.bf16.mxu0 0
    %2166 = vmatpush2.bf16.msra.mxu0 0
    %2167 = vmatprep.subr.bf16.mxu0 0
    %2168 = vmatpush2.bf16.msra.mxu0 0
    %2169 = vmatprep.subr.bf16.mxu0 0
    %2170 = vmatpush2.bf16.msra.mxu0 0
    %2171 = vmatprep.subr.bf16.mxu0 %v1586
    %2172 = vmatpush2.bf16.msra.mxu0 %v1585
    %2173 = vmatprep.subr.bf16.mxu0 %v1564
    %2174 = vmatpush2.bf16.msra.mxu0 %v1563
    %2175 = vmatprep.subr.bf16.mxu0 %v1542
    %2176 = vmatpush2.bf16.msra.mxu0 %v1541
    %2177 = vmatprep.subr.bf16.mxu0 %v1520
    %2178 = vmatpush2.bf16.msra.mxu0 %v1519
    %2179 = vmatprep.mubr.bf16.mxu0 %v1858
    %2180 = vmatmul.mubr.bf16.gmra.mxu0 %v271
    %v2181 = vpop.f32.mrf.mxu0
    %v2182 = vadd.f32 0.0, %v2181
    %v2183 = vpop.f32.mrf.mxu0
    %v2184 = vadd.f32 0.0, %v2183
    %v2185 = vpop.f32.mrf.mxu0
    %v2186 = vpop.f32.mrf.mxu0
    %2187 = vdwg.mxu0
    %2188 = vmatprep.subr.bf16.mxu0 %v1500
    %2189 = vmatpush1.bf16.msra.mxu0 %v1499
    %2190 = vmatprep.subr.bf16.mxu0 %v1478
    %2191 = vmatpush1.bf16.msra.mxu0 %v1477
    %2192 = vmatprep.subr.bf16.mxu0 %v1456
    %2193 = vmatpush1.bf16.msra.mxu0 %v1455
    %2194 = vmatprep.subr.bf16.mxu0 %v1434
    %2195 = vmatpush1.bf16.msra.mxu0 %v1433
    %2196 = vmatprep.subr.bf16.mxu0 %v1412
    %2197 = vmatpush1.bf16.msra.mxu0 %v1411
    %2198 = vmatprep.subr.bf16.mxu0 %v1390
    %2199 = vmatpush1.bf16.msra.mxu0 %v1389
    %2200 = vmatprep.subr.bf16.mxu0 %v1368
    %2201 = vmatpush1.bf16.msra.mxu0 %v1367
    %2202 = vmatprep.subr.bf16.mxu0 %v1346
    %2203 = vmatpush1.bf16.msra.mxu0 %v1345
    %2204 = vmatprep.subr.bf16.mxu0 0
    %2205 = vmatpush2.bf16.msra.mxu0 0
    %2206 = vmatprep.subr.bf16.mxu0 0
    %2207 = vmatpush2.bf16.msra.mxu0 0
    %2208 = vmatprep.subr.bf16.mxu0 0
    %2209 = vmatpush2.bf16.msra.mxu0 0
    %2210 = vmatprep.subr.bf16.mxu0 0
    %2211 = vmatpush2.bf16.msra.mxu0 0
    %2212 = vmatprep.subr.bf16.mxu0 %v1588
    %2213 = vmatpush2.bf16.msra.mxu0 %v1587
    %2214 = vmatprep.subr.bf16.mxu0 %v1566
    %2215 = vmatpush2.bf16.msra.mxu0 %v1565
    %2216 = vmatprep.subr.bf16.mxu0 %v1544
    %2217 = vmatpush2.bf16.msra.mxu0 %v1543
    %2218 = vmatprep.subr.bf16.mxu0 %v1522
    %2219 = vmatpush2.bf16.msra.mxu0 %v1521
    %2220 = vmatprep.mubr.bf16.mxu0 %v1858
    %2221 = vmatmul.mubr.bf16.gmra.mxu0 %v271
    %v2222 = vpop.f32.mrf.mxu0
    %v2223 = vadd.f32 0.0, %v2222
    %v2224 = vpop.f32.mrf.mxu0
    %v2225 = vadd.f32 0.0, %v2224
    %v2226 = vpop.f32.mrf.mxu0
    %v2227 = vpop.f32.mrf.mxu0
    %2228 = vdwg.mxu0
    %2229 = vmatprep.subr.bf16.mxu0 %v1502
    %2230 = vmatpush1.bf16.msra.mxu0 %v1501
    %2231 = vmatprep.subr.bf16.mxu0 %v1480
    %2232 = vmatpush1.bf16.msra.mxu0 %v1479
    %2233 = vmatprep.subr.bf16.mxu0 %v1458
    %2234 = vmatpush1.bf16.msra.mxu0 %v1457
    %2235 = vmatprep.subr.bf16.mxu0 %v1436
    %2236 = vmatpush1.bf16.msra.mxu0 %v1435
    %2237 = vmatprep.subr.bf16.mxu0 %v1414
    %2238 = vmatpush1.bf16.msra.mxu0 %v1413
    %2239 = vmatprep.subr.bf16.mxu0 %v1392
    %2240 = vmatpush1.bf16.msra.mxu0 %v1391
    %2241 = vmatprep.subr.bf16.mxu0 %v1370
    %2242 = vmatpush1.bf16.msra.mxu0 %v1369
    %2243 = vmatprep.subr.bf16.mxu0 %v1348
    %2244 = vmatpush1.bf16.msra.mxu0 %v1347
    %2245 = vmatprep.subr.bf16.mxu0 0
    %2246 = vmatpush2.bf16.msra.mxu0 0
    %2247 = vmatprep.subr.bf16.mxu0 0
    %2248 = vmatpush2.bf16.msra.mxu0 0
    %2249 = vmatprep.subr.bf16.mxu0 0
    %2250 = vmatpush2.bf16.msra.mxu0 0
    %2251 = vmatprep.subr.bf16.mxu0 0
    %2252 = vmatpush2.bf16.msra.mxu0 0
    %2253 = vmatprep.subr.bf16.mxu0 %v1590
    %2254 = vmatpush2.bf16.msra.mxu0 %v1589
    %2255 = vmatprep.subr.bf16.mxu0 %v1568
    %2256 = vmatpush2.bf16.msra.mxu0 %v1567
    %2257 = vmatprep.subr.bf16.mxu0 %v1546
    %2258 = vmatpush2.bf16.msra.mxu0 %v1545
    %2259 = vmatprep.subr.bf16.mxu0 %v1524
    %2260 = vmatpush2.bf16.msra.mxu0 %v1523
    %2261 = vmatprep.mubr.bf16.mxu0 %v1858
    %2262 = vmatmul.mubr.bf16.gmra.mxu0 %v271
    %v2263 = vpop.f32.mrf.mxu0
    %v2264 = vadd.f32 0.0, %v2263
    %v2265 = vpop.f32.mrf.mxu0
    %v2266 = vadd.f32 0.0, %v2265
    %v2267 = vpop.f32.mrf.mxu0
    %v2268 = vpop.f32.mrf.mxu0
    %2269 = vdwg.mxu0
    %2270 = vmatprep.subr.bf16.mxu0 %v1504
    %2271 = vmatpush1.bf16.msra.mxu0 %v1503
    %2272 = vmatprep.subr.bf16.mxu0 %v1482
    %2273 = vmatpush1.bf16.msra.mxu0 %v1481
    %2274 = vmatprep.subr.bf16.mxu0 %v1460
    %2275 = vmatpush1.bf16.msra.mxu0 %v1459
    %2276 = vmatprep.subr.bf16.mxu0 %v1438
    %2277 = vmatpush1.bf16.msra.mxu0 %v1437
    %2278 = vmatprep.subr.bf16.mxu0 %v1416
    %2279 = vmatpush1.bf16.msra.mxu0 %v1415
    %2280 = vmatprep.subr.bf16.mxu0 %v1394
    %2281 = vmatpush1.bf16.msra.mxu0 %v1393
    %2282 = vmatprep.subr.bf16.mxu0 %v1372
    %2283 = vmatpush1.bf16.msra.mxu0 %v1371
    %2284 = vmatprep.subr.bf16.mxu0 %v1350
    %2285 = vmatpush1.bf16.msra.mxu0 %v1349
    %2286 = vmatprep.subr.bf16.mxu0 0
    %2287 = vmatpush2.bf16.msra.mxu0 0
    %2288 = vmatprep.subr.bf16.mxu0 0
    %2289 = vmatpush2.bf16.msra.mxu0 0
    %2290 = vmatprep.subr.bf16.mxu0 0
    %2291 = vmatpush2.bf16.msra.mxu0 0
    %2292 = vmatprep.subr.bf16.mxu0 0
    %2293 = vmatpush2.bf16.msra.mxu0 0
    %2294 = vmatprep.subr.bf16.mxu0 %v1592
    %2295 = vmatpush2.bf16.msra.mxu0 %v1591
    %2296 = vmatprep.subr.bf16.mxu0 %v1570
    %2297 = vmatpush2.bf16.msra.mxu0 %v1569
    %2298 = vmatprep.subr.bf16.mxu0 %v1548
    %2299 = vmatpush2.bf16.msra.mxu0 %v1547
    %2300 = vmatprep.subr.bf16.mxu0 %v1526
    %2301 = vmatpush2.bf16.msra.mxu0 %v1525
    %2302 = vmatprep.mubr.bf16.mxu0 %v1858
    %2303 = vmatmul.mubr.bf16.gmra.mxu0 %v271
    %v2304 = vpop.f32.mrf.mxu0
    %v2305 = vadd.f32 0.0, %v2304
    %v2306 = vpop.f32.mrf.mxu0
    %v2307 = vadd.f32 0.0, %v2306
    %v2308 = vpop.f32.mrf.mxu0
    %v2309 = vpop.f32.mrf.mxu0
    %2310 = vdwg.mxu0
    %v2311 = vld [vmem:[#allocation10] sm:$0xff]
    %v2312 = vld [vmem:[#allocation10 + $0x8] sm:$0xff]
    %v2313 = vld [vmem:[#allocation10 + $0x10] sm:$0x3f]
    %v2317 = vlaneseq
    %v2318 = vshrl.u32 %v2317, 7
    %v2319 = vsub.s32 0, %v2318
    %v2320 = vrot.slane %v2311, %v2319
    %v2321 = vlaneseq
    %v2322 = vshrl.u32 %v2321, 7
    %v2323 = vsub.s32 1, %v2322
    %v2324 = vrot.slane %v2311, %v2323
    %v2325 = vlaneseq
    %v2326 = vshrl.u32 %v2325, 7
    %v2327 = vsub.s32 2, %v2326
    %v2328 = vrot.slane %v2311, %v2327
    %v2329 = vlaneseq
    %v2330 = vshrl.u32 %v2329, 7
    %v2331 = vsub.s32 3, %v2330
    %v2332 = vrot.slane %v2311, %v2331
    %v2333 = vlaneseq
    %v2334 = vshrl.u32 %v2333, 7
    %v2335 = vsub.s32 4, %v2334
    %v2336 = vrot.slane %v2311, %v2335
    %v2337 = vlaneseq
    %v2338 = vshrl.u32 %v2337, 7
    %v2339 = vsub.s32 5, %v2338
    %v2340 = vrot.slane %v2311, %v2339
    %v2341 = vlaneseq
    %v2342 = vshrl.u32 %v2341, 7
    %v2343 = vsub.s32 6, %v2342
    %v2344 = vrot.slane %v2311, %v2343
    %v2345 = vlaneseq
    %v2346 = vshrl.u32 %v2345, 7
    %v2347 = vsub.s32 7, %v2346
    %v2348 = vrot.slane %v2311, %v2347
    %v2349 = vlaneseq
    %v2350 = vshrl.u32 %v2349, 7
    %v2351 = vsub.s32 0, %v2350
    %v2352 = vrot.slane %v2312, %v2351
    %v2353 = vlaneseq
    %v2354 = vshrl.u32 %v2353, 7
    %v2355 = vsub.s32 1, %v2354
    %v2356 = vrot.slane %v2312, %v2355
    %v2357 = vlaneseq
    %v2358 = vshrl.u32 %v2357, 7
    %v2359 = vsub.s32 2, %v2358
    %v2360 = vrot.slane %v2312, %v2359
    %v2361 = vlaneseq
    %v2362 = vshrl.u32 %v2361, 7
    %v2363 = vsub.s32 3, %v2362
    %v2364 = vrot.slane %v2312, %v2363
    %v2365 = vlaneseq
    %v2366 = vshrl.u32 %v2365, 7
    %v2367 = vsub.s32 4, %v2366
    %v2368 = vrot.slane %v2312, %v2367
    %v2369 = vlaneseq
    %v2370 = vshrl.u32 %v2369, 7
    %v2371 = vsub.s32 5, %v2370
    %v2372 = vrot.slane %v2312, %v2371
    %v2373 = vlaneseq
    %v2374 = vshrl.u32 %v2373, 7
    %v2375 = vsub.s32 6, %v2374
    %v2376 = vrot.slane %v2312, %v2375
    %v2377 = vlaneseq
    %v2378 = vshrl.u32 %v2377, 7
    %v2379 = vsub.s32 7, %v2378
    %v2380 = vrot.slane %v2312, %v2379
    %v2381 = vlaneseq
    %v2382 = vshrl.u32 %v2381, 7
    %v2383 = vsub.s32 0, %v2382
    %v2384 = vrot.slane %v2313, %v2383
    %v2385 = vlaneseq
    %v2386 = vshrl.u32 %v2385, 7
    %v2387 = vsub.s32 1, %v2386
    %v2388 = vrot.slane %v2313, %v2387
    %v2389 = vlaneseq
    %v2390 = vshrl.u32 %v2389, 7
    %v2391 = vsub.s32 2, %v2390
    %v2392 = vrot.slane %v2313, %v2391
    %v2393 = vlaneseq
    %v2394 = vshrl.u32 %v2393, 7
    %v2395 = vsub.s32 3, %v2394
    %v2396 = vrot.slane %v2313, %v2395
    %v2397 = vlaneseq
    %v2398 = vshrl.u32 %v2397, 7
    %v2399 = vsub.s32 4, %v2398
    %v2400 = vrot.slane %v2313, %v2399
    %v2401 = vlaneseq
    %v2402 = vshrl.u32 %v2401, 7
    %v2403 = vsub.s32 5, %v2402
    %v2404 = vrot.slane %v2313, %v2403
    %v2427 = vmul.f32 %v1895, %v2320
    %v2428 = vmul.f32 %v1897, %v2324
    %v2429 = vmul.f32 %v1936, %v2328
    %v2430 = vmul.f32 %v1938, %v2332
    %v2431 = vmul.f32 %v1977, %v2336
    %v2432 = vmul.f32 %v1979, %v2340
    %v2433 = vmul.f32 %v2018, %v2344
    %v2434 = vmul.f32 %v2020, %v2348
    %v2435 = vmul.f32 %v2059, %v2352
    %v2436 = vmul.f32 %v2061, %v2356
    %v2437 = vmul.f32 %v2100, %v2360
    %v2438 = vmul.f32 %v2102, %v2364
    %v2439 = vmul.f32 %v2141, %v2368
    %v2440 = vmul.f32 %v2143, %v2372
    %v2441 = vmul.f32 %v2182, %v2376
    %v2442 = vmul.f32 %v2184, %v2380
    %v2443 = vmul.f32 %v2223, %v2384
    %v2444 = vmul.f32 %v2225, %v2388
    %v2445 = vmul.f32 %v2264, %v2392
    %v2446 = vmul.f32 %v2266, %v2396
    %v2447 = vmul.f32 %v2305, %v2400
    %v2448 = vmul.f32 %v2307, %v2404
    %v2449 = vmul.f32 %v2427, %v2427
    %v2450 = vmul.f32 %v2428, %v2428
    %v2451 = vmul.f32 %v2429, %v2429
    %v2452 = vmul.f32 %v2430, %v2430
    %v2453 = vmul.f32 %v2431, %v2431
    %v2454 = vmul.f32 %v2432, %v2432
    %v2455 = vmul.f32 %v2433, %v2433
    %v2456 = vmul.f32 %v2434, %v2434
    %v2457 = vmul.f32 %v2435, %v2435
    %v2458 = vmul.f32 %v2436, %v2436
    %v2459 = vmul.f32 %v2437, %v2437
    %v2460 = vmul.f32 %v2438, %v2438
    %v2461 = vmul.f32 %v2439, %v2439
    %v2462 = vmul.f32 %v2440, %v2440
    %v2463 = vmul.f32 %v2441, %v2441
    %v2464 = vmul.f32 %v2442, %v2442
    %v2465 = vmul.f32 %v2443, %v2443
    %v2466 = vmul.f32 %v2444, %v2444
    %v2467 = vmul.f32 %v2445, %v2445
    %v2468 = vmul.f32 %v2446, %v2446
    %v2469 = vmul.f32 %v2447, %v2447
    %v2470 = vmul.f32 %v2448, %v2448
    %v2471 = vsub.f32 1.0, %v2449
    %v2472 = vsub.f32 1.0, %v2450
    %v2473 = vsub.f32 1.0, %v2451
    %v2474 = vsub.f32 1.0, %v2452
    %v2475 = vsub.f32 1.0, %v2453
    %v2476 = vsub.f32 1.0, %v2454
    %v2477 = vsub.f32 1.0, %v2455
    %v2478 = vsub.f32 1.0, %v2456
    %v2479 = vsub.f32 1.0, %v2457
    %v2480 = vsub.f32 1.0, %v2458
    %v2481 = vsub.f32 1.0, %v2459
    %v2482 = vsub.f32 1.0, %v2460
    %v2483 = vsub.f32 1.0, %v2461
    %v2484 = vsub.f32 1.0, %v2462
    %v2485 = vsub.f32 1.0, %v2463
    %v2486 = vsub.f32 1.0, %v2464
    %v2487 = vsub.f32 1.0, %v2465
    %v2488 = vsub.f32 1.0, %v2466
    %v2489 = vsub.f32 1.0, %v2467
    %v2490 = vsub.f32 1.0, %v2468
    %v2491 = vsub.f32 1.0, %v2469
    %v2492 = vsub.f32 1.0, %v2470
    %v2493 = vmax.f32 %v2471, 0.0
    %v2494 = vmax.f32 %v2472, 0.0
    %v2495 = vmax.f32 %v2473, 0.0
    %v2496 = vmax.f32 %v2474, 0.0
    %v2497 = vmax.f32 %v2475, 0.0
    %v2498 = vmax.f32 %v2476, 0.0
    %v2499 = vmax.f32 %v2477, 0.0
    %v2500 = vmax.f32 %v2478, 0.0
    %v2501 = vmax.f32 %v2479, 0.0
    %v2502 = vmax.f32 %v2480, 0.0
    %v2503 = vmax.f32 %v2481, 0.0
    %v2504 = vmax.f32 %v2482, 0.0
    %v2505 = vmax.f32 %v2483, 0.0
    %v2506 = vmax.f32 %v2484, 0.0
    %v2507 = vmax.f32 %v2485, 0.0
    %v2508 = vmax.f32 %v2486, 0.0
    %v2509 = vmax.f32 %v2487, 0.0
    %v2510 = vmax.f32 %v2488, 0.0
    %v2511 = vmax.f32 %v2489, 0.0
    %v2512 = vmax.f32 %v2490, 0.0
    %v2513 = vmax.f32 %v2491, 0.0
    %v2514 = vmax.f32 %v2492, 0.0
    %v2515 = vmin.f32 %v2493, 1.0
    %v2516 = vmin.f32 %v2494, 1.0
    %v2517 = vmin.f32 %v2495, 1.0
    %v2518 = vmin.f32 %v2496, 1.0
    %v2519 = vmin.f32 %v2497, 1.0
    %v2520 = vmin.f32 %v2498, 1.0
    %v2521 = vmin.f32 %v2499, 1.0
    %v2522 = vmin.f32 %v2500, 1.0
    %v2523 = vmin.f32 %v2501, 1.0
    %v2524 = vmin.f32 %v2502, 1.0
    %v2525 = vmin.f32 %v2503, 1.0
    %v2526 = vmin.f32 %v2504, 1.0
    %v2527 = vmin.f32 %v2505, 1.0
    %v2528 = vmin.f32 %v2506, 1.0
    %v2529 = vmin.f32 %v2507, 1.0
    %v2530 = vmin.f32 %v2508, 1.0
    %v2531 = vmin.f32 %v2509, 1.0
    %v2532 = vmin.f32 %v2510, 1.0
    %v2533 = vmin.f32 %v2511, 1.0
    %v2534 = vmin.f32 %v2512, 1.0
    %v2535 = vmin.f32 %v2513, 1.0
    %v2536 = vmin.f32 %v2514, 1.0
    %v2537 = vrsqrt.pop %v2515
    %v2538 = vmul.f32 %v2515, %v2537
    %vm2539 = vcmp.eq.f32.partialorder %v2515, inf
    %v2540 = vsel %vm2539, %v2515, %v2538
    %vm2541 = vcmp.eq.f32.partialorder %v2515, 0.0
    %v2542 = vand.u32 %v2515, 2147483648
    %v2543 = vsel %vm2541, %v2542, %v2540
    %v2544 = vrsqrt.pop %v2516
    %v2545 = vmul.f32 %v2516, %v2544
    %vm2546 = vcmp.eq.f32.partialorder %v2516, inf
    %v2547 = vsel %vm2546, %v2516, %v2545
    %vm2548 = vcmp.eq.f32.partialorder %v2516, 0.0
    %v2549 = vand.u32 %v2516, 2147483648
    %v2550 = vsel %vm2548, %v2549, %v2547
    %v2551 = vrsqrt.pop %v2517
    %v2552 = vmul.f32 %v2517, %v2551
    %vm2553 = vcmp.eq.f32.partialorder %v2517, inf
    %v2554 = vsel %vm2553, %v2517, %v2552
    %vm2555 = vcmp.eq.f32.partialorder %v2517, 0.0
    %v2556 = vand.u32 %v2517, 2147483648
    %v2557 = vsel %vm2555, %v2556, %v2554
    %v2558 = vrsqrt.pop %v2518
    %v2559 = vmul.f32 %v2518, %v2558
    %vm2560 = vcmp.eq.f32.partialorder %v2518, inf
    %v2561 = vsel %vm2560, %v2518, %v2559
    %vm2562 = vcmp.eq.f32.partialorder %v2518, 0.0
    %v2563 = vand.u32 %v2518, 2147483648
    %v2564 = vsel %vm2562, %v2563, %v2561
    %v2565 = vrsqrt.pop %v2519
    %v2566 = vmul.f32 %v2519, %v2565
    %vm2567 = vcmp.eq.f32.partialorder %v2519, inf
    %v2568 = vsel %vm2567, %v2519, %v2566
    %vm2569 = vcmp.eq.f32.partialorder %v2519, 0.0
    %v2570 = vand.u32 %v2519, 2147483648
    %v2571 = vsel %vm2569, %v2570, %v2568
    %v2572 = vrsqrt.pop %v2520
    %v2573 = vmul.f32 %v2520, %v2572
    %vm2574 = vcmp.eq.f32.partialorder %v2520, inf
    %v2575 = vsel %vm2574, %v2520, %v2573
    %vm2576 = vcmp.eq.f32.partialorder %v2520, 0.0
    %v2577 = vand.u32 %v2520, 2147483648
    %v2578 = vsel %vm2576, %v2577, %v2575
    %v2579 = vrsqrt.pop %v2521
    %v2580 = vmul.f32 %v2521, %v2579
    %vm2581 = vcmp.eq.f32.partialorder %v2521, inf
    %v2582 = vsel %vm2581, %v2521, %v2580
    %vm2583 = vcmp.eq.f32.partialorder %v2521, 0.0
    %v2584 = vand.u32 %v2521, 2147483648
    %v2585 = vsel %vm2583, %v2584, %v2582
    %v2586 = vrsqrt.pop %v2522
    %v2587 = vmul.f32 %v2522, %v2586
    %vm2588 = vcmp.eq.f32.partialorder %v2522, inf
    %v2589 = vsel %vm2588, %v2522, %v2587
    %vm2590 = vcmp.eq.f32.partialorder %v2522, 0.0
    %v2591 = vand.u32 %v2522, 2147483648
    %v2592 = vsel %vm2590, %v2591, %v2589
    %v2593 = vrsqrt.pop %v2523
    %v2594 = vmul.f32 %v2523, %v2593
    %vm2595 = vcmp.eq.f32.partialorder %v2523, inf
    %v2596 = vsel %vm2595, %v2523, %v2594
    %vm2597 = vcmp.eq.f32.partialorder %v2523, 0.0
    %v2598 = vand.u32 %v2523, 2147483648
    %v2599 = vsel %vm2597, %v2598, %v2596
    %v2600 = vrsqrt.pop %v2524
    %v2601 = vmul.f32 %v2524, %v2600
    %vm2602 = vcmp.eq.f32.partialorder %v2524, inf
    %v2603 = vsel %vm2602, %v2524, %v2601
    %vm2604 = vcmp.eq.f32.partialorder %v2524, 0.0
    %v2605 = vand.u32 %v2524, 2147483648
    %v2606 = vsel %vm2604, %v2605, %v2603
    %v2607 = vrsqrt.pop %v2525
    %v2608 = vmul.f32 %v2525, %v2607
    %vm2609 = vcmp.eq.f32.partialorder %v2525, inf
    %v2610 = vsel %vm2609, %v2525, %v2608
    %vm2611 = vcmp.eq.f32.partialorder %v2525, 0.0
    %v2612 = vand.u32 %v2525, 2147483648
    %v2613 = vsel %vm2611, %v2612, %v2610
    %v2614 = vrsqrt.pop %v2526
    %v2615 = vmul.f32 %v2526, %v2614
    %vm2616 = vcmp.eq.f32.partialorder %v2526, inf
    %v2617 = vsel %vm2616, %v2526, %v2615
    %vm2618 = vcmp.eq.f32.partialorder %v2526, 0.0
    %v2619 = vand.u32 %v2526, 2147483648
    %v2620 = vsel %vm2618, %v2619, %v2617
    %v2621 = vrsqrt.pop %v2527
    %v2622 = vmul.f32 %v2527, %v2621
    %vm2623 = vcmp.eq.f32.partialorder %v2527, inf
    %v2624 = vsel %vm2623, %v2527, %v2622
    %vm2625 = vcmp.eq.f32.partialorder %v2527, 0.0
    %v2626 = vand.u32 %v2527, 2147483648
    %v2627 = vsel %vm2625, %v2626, %v2624
    %v2628 = vrsqrt.pop %v2528
    %v2629 = vmul.f32 %v2528, %v2628
    %vm2630 = vcmp.eq.f32.partialorder %v2528, inf
    %v2631 = vsel %vm2630, %v2528, %v2629
    %vm2632 = vcmp.eq.f32.partialorder %v2528, 0.0
    %v2633 = vand.u32 %v2528, 2147483648
    %v2634 = vsel %vm2632, %v2633, %v2631
    %v2635 = vrsqrt.pop %v2529
    %v2636 = vmul.f32 %v2529, %v2635
    %vm2637 = vcmp.eq.f32.partialorder %v2529, inf
    %v2638 = vsel %vm2637, %v2529, %v2636
    %vm2639 = vcmp.eq.f32.partialorder %v2529, 0.0
    %v2640 = vand.u32 %v2529, 2147483648
    %v2641 = vsel %vm2639, %v2640, %v2638
    %v2642 = vrsqrt.pop %v2530
    %v2643 = vmul.f32 %v2530, %v2642
    %vm2644 = vcmp.eq.f32.partialorder %v2530, inf
    %v2645 = vsel %vm2644, %v2530, %v2643
    %vm2646 = vcmp.eq.f32.partialorder %v2530, 0.0
    %v2647 = vand.u32 %v2530, 2147483648
    %v2648 = vsel %vm2646, %v2647, %v2645
    %v2649 = vrsqrt.pop %v2531
    %v2650 = vmul.f32 %v2531, %v2649
    %vm2651 = vcmp.eq.f32.partialorder %v2531, inf
    %v2652 = vsel %vm2651, %v2531, %v2650
    %vm2653 = vcmp.eq.f32.partialorder %v2531, 0.0
    %v2654 = vand.u32 %v2531, 2147483648
    %v2655 = vsel %vm2653, %v2654, %v2652
    %v2656 = vrsqrt.pop %v2532
    %v2657 = vmul.f32 %v2532, %v2656
    %vm2658 = vcmp.eq.f32.partialorder %v2532, inf
    %v2659 = vsel %vm2658, %v2532, %v2657
    %vm2660 = vcmp.eq.f32.partialorder %v2532, 0.0
    %v2661 = vand.u32 %v2532, 2147483648
    %v2662 = vsel %vm2660, %v2661, %v2659
    %v2663 = vrsqrt.pop %v2533
    %v2664 = vmul.f32 %v2533, %v2663
    %vm2665 = vcmp.eq.f32.partialorder %v2533, inf
    %v2666 = vsel %vm2665, %v2533, %v2664
    %vm2667 = vcmp.eq.f32.partialorder %v2533, 0.0
    %v2668 = vand.u32 %v2533, 2147483648
    %v2669 = vsel %vm2667, %v2668, %v2666
    %v2670 = vrsqrt.pop %v2534
    %v2671 = vmul.f32 %v2534, %v2670
    %vm2672 = vcmp.eq.f32.partialorder %v2534, inf
    %v2673 = vsel %vm2672, %v2534, %v2671
    %vm2674 = vcmp.eq.f32.partialorder %v2534, 0.0
    %v2675 = vand.u32 %v2534, 2147483648
    %v2676 = vsel %vm2674, %v2675, %v2673
    %v2677 = vrsqrt.pop %v2535
    %v2678 = vmul.f32 %v2535, %v2677
    %vm2679 = vcmp.eq.f32.partialorder %v2535, inf
    %v2680 = vsel %vm2679, %v2535, %v2678
    %vm2681 = vcmp.eq.f32.partialorder %v2535, 0.0
    %v2682 = vand.u32 %v2535, 2147483648
    %v2683 = vsel %vm2681, %v2682, %v2680
    %v2684 = vrsqrt.pop %v2536
    %v2685 = vmul.f32 %v2536, %v2684
    %vm2686 = vcmp.eq.f32.partialorder %v2536, inf
    %v2687 = vsel %vm2686, %v2536, %v2685
    %vm2688 = vcmp.eq.f32.partialorder %v2536, 0.0
    %v2689 = vand.u32 %v2536, 2147483648
    %v2690 = vsel %vm2688, %v2689, %v2687
    %v2691 = vmul.f32 %v2427, 0.9553365
    %v2692 = vmul.f32 %v2428, 0.9553365
    %v2693 = vmul.f32 %v2429, 0.9553365
    %v2694 = vmul.f32 %v2430, 0.9553365
    %v2695 = vmul.f32 %v2431, 0.9553365
    %v2696 = vmul.f32 %v2432, 0.9553365
    %v2697 = vmul.f32 %v2433, 0.9553365
    %v2698 = vmul.f32 %v2434, 0.9553365
    %v2699 = vmul.f32 %v2435, 0.9553365
    %v2700 = vmul.f32 %v2436, 0.9553365
    %v2701 = vmul.f32 %v2437, 0.9553365
    %v2702 = vmul.f32 %v2438, 0.9553365
    %v2703 = vmul.f32 %v2439, 0.9553365
    %v2704 = vmul.f32 %v2440, 0.9553365
    %v2705 = vmul.f32 %v2441, 0.9553365
    %v2706 = vmul.f32 %v2442, 0.9553365
    %v2707 = vmul.f32 %v2443, 0.9553365
    %v2708 = vmul.f32 %v2444, 0.9553365
    %v2709 = vmul.f32 %v2445, 0.9553365
    %v2710 = vmul.f32 %v2446, 0.9553365
    %v2711 = vmul.f32 %v2447, 0.9553365
    %v2712 = vmul.f32 %v2448, 0.9553365
    %v2713 = vmul.f32 %v2543, 0.29552022
    %v2714 = vmul.f32 %v2550, 0.29552022
    %v2715 = vmul.f32 %v2557, 0.29552022
    %v2716 = vmul.f32 %v2564, 0.29552022
    %v2717 = vmul.f32 %v2571, 0.29552022
    %v2718 = vmul.f32 %v2578, 0.29552022
    %v2719 = vmul.f32 %v2585, 0.29552022
    %v2720 = vmul.f32 %v2592, 0.29552022
    %v2721 = vmul.f32 %v2599, 0.29552022
    %v2722 = vmul.f32 %v2606, 0.29552022
    %v2723 = vmul.f32 %v2613, 0.29552022
    %v2724 = vmul.f32 %v2620, 0.29552022
    %v2725 = vmul.f32 %v2627, 0.29552022
    %v2726 = vmul.f32 %v2634, 0.29552022
    %v2727 = vmul.f32 %v2641, 0.29552022
    %v2728 = vmul.f32 %v2648, 0.29552022
    %v2729 = vmul.f32 %v2655, 0.29552022
    %v2730 = vmul.f32 %v2662, 0.29552022
    %v2731 = vmul.f32 %v2669, 0.29552022
    %v2732 = vmul.f32 %v2676, 0.29552022
    %v2733 = vmul.f32 %v2683, 0.29552022
    %v2734 = vmul.f32 %v2690, 0.29552022
    %v2735 = vsub.f32 %v2691, %v2713
    %v2736 = vsub.f32 %v2692, %v2714
    %v2737 = vsub.f32 %v2693, %v2715
    %v2738 = vsub.f32 %v2694, %v2716
    %v2739 = vsub.f32 %v2695, %v2717
    %v2740 = vsub.f32 %v2696, %v2718
    %v2741 = vsub.f32 %v2697, %v2719
    %v2742 = vsub.f32 %v2698, %v2720
    %v2743 = vsub.f32 %v2699, %v2721
    %v2744 = vsub.f32 %v2700, %v2722
    %v2745 = vsub.f32 %v2701, %v2723
    %v2746 = vsub.f32 %v2702, %v2724
    %v2747 = vsub.f32 %v2703, %v2725
    %v2748 = vsub.f32 %v2704, %v2726
    %v2749 = vsub.f32 %v2705, %v2727
    %v2750 = vsub.f32 %v2706, %v2728
    %v2751 = vsub.f32 %v2707, %v2729
    %v2752 = vsub.f32 %v2708, %v2730
    %v2753 = vsub.f32 %v2709, %v2731
    %v2754 = vsub.f32 %v2710, %v2732
    %v2755 = vsub.f32 %v2711, %v2733
    %v2756 = vsub.f32 %v2712, %v2734
    %v2757 = vsub.f32 %v2427, -0.9553365
    %v2758 = vsub.f32 %v2428, -0.9553365
    %v2759 = vsub.f32 %v2429, -0.9553365
    %v2760 = vsub.f32 %v2430, -0.9553365
    %v2761 = vsub.f32 %v2431, -0.9553365
    %v2762 = vsub.f32 %v2432, -0.9553365
    %v2763 = vsub.f32 %v2433, -0.9553365
    %v2764 = vsub.f32 %v2434, -0.9553365
    %v2765 = vsub.f32 %v2435, -0.9553365
    %v2766 = vsub.f32 %v2436, -0.9553365
    %v2767 = vsub.f32 %v2437, -0.9553365
    %v2768 = vsub.f32 %v2438, -0.9553365
    %v2769 = vsub.f32 %v2439, -0.9553365
    %v2770 = vsub.f32 %v2440, -0.9553365
    %v2771 = vsub.f32 %v2441, -0.9553365
    %v2772 = vsub.f32 %v2442, -0.9553365
    %v2773 = vsub.f32 %v2443, -0.9553365
    %v2774 = vsub.f32 %v2444, -0.9553365
    %v2775 = vsub.f32 %v2445, -0.9553365
    %v2776 = vsub.f32 %v2446, -0.9553365
    %v2777 = vsub.f32 %v2447, -0.9553365
    %v2778 = vsub.f32 %v2448, -0.9553365
    %vm2779 = vcmp.gt.f32.partialorder %v2757, 0.0
    %vm2780 = vcmp.gt.f32.partialorder %v2758, 0.0
    %vm2781 = vcmp.gt.f32.partialorder %v2759, 0.0
    %vm2782 = vcmp.gt.f32.partialorder %v2760, 0.0
    %vm2783 = vcmp.gt.f32.partialorder %v2761, 0.0
    %vm2784 = vcmp.gt.f32.partialorder %v2762, 0.0
    %vm2785 = vcmp.gt.f32.partialorder %v2763, 0.0
    %vm2786 = vcmp.gt.f32.partialorder %v2764, 0.0
    %vm2787 = vcmp.gt.f32.partialorder %v2765, 0.0
    %vm2788 = vcmp.gt.f32.partialorder %v2766, 0.0
    %vm2789 = vcmp.gt.f32.partialorder %v2767, 0.0
    %vm2790 = vcmp.gt.f32.partialorder %v2768, 0.0
    %vm2791 = vcmp.gt.f32.partialorder %v2769, 0.0
    %vm2792 = vcmp.gt.f32.partialorder %v2770, 0.0
    %vm2793 = vcmp.gt.f32.partialorder %v2771, 0.0
    %vm2794 = vcmp.gt.f32.partialorder %v2772, 0.0
    %vm2795 = vcmp.gt.f32.partialorder %v2773, 0.0
    %vm2796 = vcmp.gt.f32.partialorder %v2774, 0.0
    %vm2797 = vcmp.gt.f32.partialorder %v2775, 0.0
    %vm2798 = vcmp.gt.f32.partialorder %v2776, 0.0
    %vm2799 = vcmp.gt.f32.partialorder %v2777, 0.0
    %vm2800 = vcmp.gt.f32.partialorder %v2778, 0.0
    %v2801 = vsub.f32 %v2427, 0.08865606
    %v2802 = vsub.f32 %v2428, 0.08865606
    %v2803 = vsub.f32 %v2429, 0.08865606
    %v2804 = vsub.f32 %v2430, 0.08865606
    %v2805 = vsub.f32 %v2431, 0.08865606
    %v2806 = vsub.f32 %v2432, 0.08865606
    %v2807 = vsub.f32 %v2433, 0.08865606
    %v2808 = vsub.f32 %v2434, 0.08865606
    %v2809 = vsub.f32 %v2435, 0.08865606
    %v2810 = vsub.f32 %v2436, 0.08865606
    %v2811 = vsub.f32 %v2437, 0.08865606
    %v2812 = vsub.f32 %v2438, 0.08865606
    %v2813 = vsub.f32 %v2439, 0.08865606
    %v2814 = vsub.f32 %v2440, 0.08865606
    %v2815 = vsub.f32 %v2441, 0.08865606
    %v2816 = vsub.f32 %v2442, 0.08865606
    %v2817 = vsub.f32 %v2443, 0.08865606
    %v2818 = vsub.f32 %v2444, 0.08865606
    %v2819 = vsub.f32 %v2445, 0.08865606
    %v2820 = vsub.f32 %v2446, 0.08865606
    %v2821 = vsub.f32 %v2447, 0.08865606
    %v2822 = vsub.f32 %v2448, 0.08865606
    %v2823 = vsel %vm2779, %v2735, %v2801
    %v2824 = vsel %vm2780, %v2736, %v2802
    %v2825 = vsel %vm2781, %v2737, %v2803
    %v2826 = vsel %vm2782, %v2738, %v2804
    %v2827 = vsel %vm2783, %v2739, %v2805
    %v2828 = vsel %vm2784, %v2740, %v2806
    %v2829 = vsel %vm2785, %v2741, %v2807
    %v2830 = vsel %vm2786, %v2742, %v2808
    %v2831 = vsel %vm2787, %v2743, %v2809
    %v2832 = vsel %vm2788, %v2744, %v2810
    %v2833 = vsel %vm2789, %v2745, %v2811
    %v2834 = vsel %vm2790, %v2746, %v2812
    %v2835 = vsel %vm2791, %v2747, %v2813
    %v2836 = vsel %vm2792, %v2748, %v2814
    %v2837 = vsel %vm2793, %v2749, %v2815
    %v2838 = vsel %vm2794, %v2750, %v2816
    %v2839 = vsel %vm2795, %v2751, %v2817
    %v2840 = vsel %vm2796, %v2752, %v2818
    %v2841 = vsel %vm2797, %v2753, %v2819
    %v2842 = vsel %vm2798, %v2754, %v2820
    %v2843 = vsel %vm2799, %v2755, %v2821
    %v2844 = vsel %vm2800, %v2756, %v2822
    %v2845 = vld [vmem:[%s5] sm:$0xff]
    %v2846 = vadd.s32 %v205, 128
    %v2847 = vadd.s32 %v205, 256
    %v2848 = vadd.s32 %v205, 384
    %v2849 = vadd.s32 %v205, 512
    %v2850 = vadd.s32 %v205, 640
    %v2851 = vadd.s32 %v205, 768
    %v2852 = vadd.s32 %v205, 896
    %v2853 = vadd.s32 %v205, 1024
    %v2854 = vadd.s32 %v205, 1152
    %v2855 = vadd.s32 %v205, 1280
    %v2856 = vadd.s32 %v205, 1408
    %v2857 = vadd.s32 %v205, 1536
    %v2858 = vadd.s32 %v205, 1664
    %v2859 = vadd.s32 %v205, 1792
    %v2860 = vadd.s32 %v205, 1920
    %v2861 = vadd.s32 %v205, 2048
    %v2862 = vadd.s32 %v205, 2176
    %v2863 = vadd.s32 %v205, 2304
    %v2864 = vadd.s32 %v205, 2432
    %v2865 = vadd.s32 %v205, 2560
    %v2866 = vadd.s32 %v205, 2688
    %2867 = vset.pattern.permute.xlu0 0
    %2868 = vperm.xlu0 %2867, %v2845
    %v2869 = vpop.permute.xlu0 %2868
    %vm2870 = vcmp.eq.s32.totalorder %v205, %v2869
    %vm2871 = vcmp.eq.s32.totalorder %v2846, %v2869
    %vm2872 = vcmp.eq.s32.totalorder %v2847, %v2869
    %vm2873 = vcmp.eq.s32.totalorder %v2848, %v2869
    %vm2874 = vcmp.eq.s32.totalorder %v2849, %v2869
    %vm2875 = vcmp.eq.s32.totalorder %v2850, %v2869
    %vm2876 = vcmp.eq.s32.totalorder %v2851, %v2869
    %vm2877 = vcmp.eq.s32.totalorder %v2852, %v2869
    %vm2878 = vcmp.eq.s32.totalorder %v2853, %v2869
    %vm2879 = vcmp.eq.s32.totalorder %v2854, %v2869
    %vm2880 = vcmp.eq.s32.totalorder %v2855, %v2869
    %vm2881 = vcmp.eq.s32.totalorder %v2856, %v2869
    %vm2882 = vcmp.eq.s32.totalorder %v2857, %v2869
    %vm2883 = vcmp.eq.s32.totalorder %v2858, %v2869
    %vm2884 = vcmp.eq.s32.totalorder %v2859, %v2869
    %vm2885 = vcmp.eq.s32.totalorder %v2860, %v2869
    %vm2886 = vcmp.eq.s32.totalorder %v2861, %v2869
    %vm2887 = vcmp.eq.s32.totalorder %v2862, %v2869
    %vm2888 = vcmp.eq.s32.totalorder %v2863, %v2869
    %vm2889 = vcmp.eq.s32.totalorder %v2864, %v2869
    %vm2890 = vcmp.eq.s32.totalorder %v2865, %v2869
    %vm2891 = vcmp.eq.s32.totalorder %v2866, %v2869
    %v2892 = vsel %vm2870, 1, 0
    %v2893 = vsel %vm2871, 1, 0
    %v2894 = vsel %vm2872, 1, 0
    %v2895 = vsel %vm2873, 1, 0
    %v2896 = vsel %vm2874, 1, 0
    %v2897 = vsel %vm2875, 1, 0
    %v2898 = vsel %vm2876, 1, 0
    %v2899 = vsel %vm2877, 1, 0
    %v2900 = vsel %vm2878, 1, 0
    %v2901 = vsel %vm2879, 1, 0
    %v2902 = vsel %vm2880, 1, 0
    %v2903 = vsel %vm2881, 1, 0
    %v2904 = vsel %vm2882, 1, 0
    %v2905 = vsel %vm2883, 1, 0
    %v2906 = vsel %vm2884, 1, 0
    %v2907 = vsel %vm2885, 1, 0
    %v2908 = vsel %vm2886, 1, 0
    %v2909 = vsel %vm2887, 1, 0
    %v2910 = vsel %vm2888, 1, 0
    %v2911 = vsel %vm2889, 1, 0
    %v2912 = vsel %vm2890, 1, 0
    %v2913 = vsel %vm2891, 1, 0
    %v2914 = vcvt.s32.f32 %v2892
    %v2915 = vcvt.s32.f32 %v2893
    %v2916 = vcvt.s32.f32 %v2894
    %v2917 = vcvt.s32.f32 %v2895
    %v2918 = vcvt.s32.f32 %v2896
    %v2919 = vcvt.s32.f32 %v2897
    %v2920 = vcvt.s32.f32 %v2898
    %v2921 = vcvt.s32.f32 %v2899
    %v2922 = vcvt.s32.f32 %v2900
    %v2923 = vcvt.s32.f32 %v2901
    %v2924 = vcvt.s32.f32 %v2902
    %v2925 = vcvt.s32.f32 %v2903
    %v2926 = vcvt.s32.f32 %v2904
    %v2927 = vcvt.s32.f32 %v2905
    %v2928 = vcvt.s32.f32 %v2906
    %v2929 = vcvt.s32.f32 %v2907
    %v2930 = vcvt.s32.f32 %v2908
    %v2931 = vcvt.s32.f32 %v2909
    %v2932 = vcvt.s32.f32 %v2910
    %v2933 = vcvt.s32.f32 %v2911
    %v2934 = vcvt.s32.f32 %v2912
    %v2935 = vcvt.s32.f32 %v2913
    %v2936 = vmul.f32 %v2914, %v2823
    %v2937 = vmul.f32 %v2915, %v2824
    %v2938 = vmul.f32 %v2916, %v2825
    %v2939 = vmul.f32 %v2917, %v2826
    %v2940 = vmul.f32 %v2918, %v2827
    %v2941 = vmul.f32 %v2919, %v2828
    %v2942 = vmul.f32 %v2920, %v2829
    %v2943 = vmul.f32 %v2921, %v2830
    %v2944 = vmul.f32 %v2922, %v2831
    %v2945 = vmul.f32 %v2923, %v2832
    %v2946 = vmul.f32 %v2924, %v2833
    %v2947 = vmul.f32 %v2925, %v2834
    %v2948 = vmul.f32 %v2926, %v2835
    %v2949 = vmul.f32 %v2927, %v2836
    %v2950 = vmul.f32 %v2928, %v2837
    %v2951 = vmul.f32 %v2929, %v2838
    %v2952 = vmul.f32 %v2930, %v2839
    %v2953 = vmul.f32 %v2931, %v2840
    %v2954 = vmul.f32 %v2932, %v2841
    %v2955 = vmul.f32 %v2933, %v2842
    %v2956 = vmul.f32 %v2934, %v2843
    %v2957 = vmul.f32 %v2935, %v2844
    %v2958 = vsub.f32 1.0, %v2914
    %v2959 = vsub.f32 1.0, %v2915
    %v2960 = vsub.f32 1.0, %v2916
    %v2961 = vsub.f32 1.0, %v2917
    %v2962 = vsub.f32 1.0, %v2918
    %v2963 = vsub.f32 1.0, %v2919
    %v2964 = vsub.f32 1.0, %v2920
    %v2965 = vsub.f32 1.0, %v2921
    %v2966 = vsub.f32 1.0, %v2922
    %v2967 = vsub.f32 1.0, %v2923
    %v2968 = vsub.f32 1.0, %v2924
    %v2969 = vsub.f32 1.0, %v2925
    %v2970 = vsub.f32 1.0, %v2926
    %v2971 = vsub.f32 1.0, %v2927
    %v2972 = vsub.f32 1.0, %v2928
    %v2973 = vsub.f32 1.0, %v2929
    %v2974 = vsub.f32 1.0, %v2930
    %v2975 = vsub.f32 1.0, %v2931
    %v2976 = vsub.f32 1.0, %v2932
    %v2977 = vsub.f32 1.0, %v2933
    %v2978 = vsub.f32 1.0, %v2934
    %v2979 = vsub.f32 1.0, %v2935
    %v2980 = vmul.f32 %v2958, %v2427
    %v2981 = vmul.f32 %v2959, %v2428
    %v2982 = vmul.f32 %v2960, %v2429
    %v2983 = vmul.f32 %v2961, %v2430
    %v2984 = vmul.f32 %v2962, %v2431
    %v2985 = vmul.f32 %v2963, %v2432
    %v2986 = vmul.f32 %v2964, %v2433
    %v2987 = vmul.f32 %v2965, %v2434
    %v2988 = vmul.f32 %v2966, %v2435
    %v2989 = vmul.f32 %v2967, %v2436
    %v2990 = vmul.f32 %v2968, %v2437
    %v2991 = vmul.f32 %v2969, %v2438
    %v2992 = vmul.f32 %v2970, %v2439
    %v2993 = vmul.f32 %v2971, %v2440
    %v2994 = vmul.f32 %v2972, %v2441
    %v2995 = vmul.f32 %v2973, %v2442
    %v2996 = vmul.f32 %v2974, %v2443
    %v2997 = vmul.f32 %v2975, %v2444
    %v2998 = vmul.f32 %v2976, %v2445
    %v2999 = vmul.f32 %v2977, %v2446
    %v3000 = vmul.f32 %v2978, %v2447
    %v3001 = vmul.f32 %v2979, %v2448
    %v3002 = vadd.f32 %v2936, %v2980
    %v3003 = vadd.f32 %v2937, %v2981
    %v3004 = vadd.f32 %v2938, %v2982
    %v3005 = vadd.f32 %v2939, %v2983
    %v3006 = vadd.f32 %v2940, %v2984
    %v3007 = vadd.f32 %v2941, %v2985
    %v3008 = vadd.f32 %v2942, %v2986
    %v3009 = vadd.f32 %v2943, %v2987
    %v3010 = vadd.f32 %v2944, %v2988
    %v3011 = vadd.f32 %v2945, %v2989
    %v3012 = vadd.f32 %v2946, %v2990
    %v3013 = vadd.f32 %v2947, %v2991
    %v3014 = vadd.f32 %v2948, %v2992
    %v3015 = vadd.f32 %v2949, %v2993
    %v3016 = vadd.f32 %v2950, %v2994
    %v3017 = vadd.f32 %v2951, %v2995
    %v3018 = vadd.f32 %v2952, %v2996
    %v3019 = vadd.f32 %v2953, %v2997
    %v3020 = vadd.f32 %v2954, %v2998
    %v3021 = vadd.f32 %v2955, %v2999
    %v3022 = vadd.f32 %v2956, %v3000
    %v3023 = vadd.f32 %v2957, %v3001
    %v3024 = vmul.f32 %v3002, 32.0
    %v3025 = vmul.f32 %v3003, 32.0
    %v3026 = vmul.f32 %v3004, 32.0
    %v3027 = vmul.f32 %v3005, 32.0
    %v3028 = vmul.f32 %v3006, 32.0
    %v3029 = vmul.f32 %v3007, 32.0
    %v3030 = vmul.f32 %v3008, 32.0
    %v3031 = vmul.f32 %v3009, 32.0
    %v3032 = vmul.f32 %v3010, 32.0
    %v3033 = vmul.f32 %v3011, 32.0
    %v3034 = vmul.f32 %v3012, 32.0
    %v3035 = vmul.f32 %v3013, 32.0
    %v3036 = vmul.f32 %v3014, 32.0
    %v3037 = vmul.f32 %v3015, 32.0
    %v3038 = vmul.f32 %v3016, 32.0
    %v3039 = vmul.f32 %v3017, 32.0
    %v3040 = vmul.f32 %v3018, 32.0
    %v3041 = vmul.f32 %v3019, 32.0
    %v3042 = vmul.f32 %v3020, 32.0
    %v3043 = vmul.f32 %v3021, 32.0
    %v3044 = vmul.f32 %v3022, 32.0
    %v3045 = vmul.f32 %v3023, 32.0
    %vm3046 = vcmp.lt.s32.totalorder %v205, 2793
    %vm3047 = vcmp.lt.s32.totalorder %v2846, 2793
    %vm3048 = vcmp.lt.s32.totalorder %v2847, 2793
    %vm3049 = vcmp.lt.s32.totalorder %v2848, 2793
    %vm3050 = vcmp.lt.s32.totalorder %v2849, 2793
    %vm3051 = vcmp.lt.s32.totalorder %v2850, 2793
    %vm3052 = vcmp.lt.s32.totalorder %v2851, 2793
    %vm3053 = vcmp.lt.s32.totalorder %v2852, 2793
    %vm3054 = vcmp.lt.s32.totalorder %v2853, 2793
    %vm3055 = vcmp.lt.s32.totalorder %v2854, 2793
    %vm3056 = vcmp.lt.s32.totalorder %v2855, 2793
    %vm3057 = vcmp.lt.s32.totalorder %v2856, 2793
    %vm3058 = vcmp.lt.s32.totalorder %v2857, 2793
    %vm3059 = vcmp.lt.s32.totalorder %v2858, 2793
    %vm3060 = vcmp.lt.s32.totalorder %v2859, 2793
    %vm3061 = vcmp.lt.s32.totalorder %v2860, 2793
    %vm3062 = vcmp.lt.s32.totalorder %v2861, 2793
    %vm3063 = vcmp.lt.s32.totalorder %v2862, 2793
    %vm3064 = vcmp.lt.s32.totalorder %v2863, 2793
    %vm3065 = vcmp.lt.s32.totalorder %v2864, 2793
    %vm3066 = vcmp.lt.s32.totalorder %v2865, 2793
    %vm3067 = vcmp.lt.s32.totalorder %v2866, 2793
    %v3068 = vsel %vm3046, %v3024, -1e+30
    %v3069 = vsel %vm3047, %v3025, -1e+30
    %v3070 = vsel %vm3048, %v3026, -1e+30
    %v3071 = vsel %vm3049, %v3027, -1e+30
    %v3072 = vsel %vm3050, %v3028, -1e+30
    %v3073 = vsel %vm3051, %v3029, -1e+30
    %v3074 = vsel %vm3052, %v3030, -1e+30
    %v3075 = vsel %vm3053, %v3031, -1e+30
    %v3076 = vsel %vm3054, %v3032, -1e+30
    %v3077 = vsel %vm3055, %v3033, -1e+30
    %v3078 = vsel %vm3056, %v3034, -1e+30
    %v3079 = vsel %vm3057, %v3035, -1e+30
    %v3080 = vsel %vm3058, %v3036, -1e+30
    %v3081 = vsel %vm3059, %v3037, -1e+30
    %v3082 = vsel %vm3060, %v3038, -1e+30
    %v3083 = vsel %vm3061, %v3039, -1e+30
    %v3084 = vsel %vm3062, %v3040, -1e+30
    %v3085 = vsel %vm3063, %v3041, -1e+30
    %v3086 = vsel %vm3064, %v3042, -1e+30
    %v3087 = vsel %vm3065, %v3043, -1e+30
    %v3088 = vsel %vm3066, %v3044, -1e+30
    %v3089 = vsel %vm3067, %v3045, -1e+30
    %v3090 = vmax.f32 %v3068, %v3072
    %v3091 = vmax.f32 %v3069, %v3073
    %v3092 = vmax.f32 %v3070, %v3074
    %v3093 = vmax.f32 %v3071, %v3075
    %v3094 = vmax.f32 %v3090, %v3076
    %v3095 = vmax.f32 %v3091, %v3077
    %v3096 = vmax.f32 %v3092, %v3078
    %v3097 = vmax.f32 %v3093, %v3079
    %v3098 = vmax.f32 %v3094, %v3080
    %v3099 = vmax.f32 %v3095, %v3081
    %v3100 = vmax.f32 %v3096, %v3082
    %v3101 = vmax.f32 %v3097, %v3083
    %v3102 = vmax.f32 %v3098, %v3084
    %v3103 = vmax.f32 %v3099, %v3085
    %v3104 = vmax.f32 %v3100, %v3086
    %v3105 = vmax.f32 %v3101, %v3087
    %v3106 = vmax.f32 %v3102, %v3088
    %v3107 = vmax.f32 %v3103, %v3089
    %v3108 = vmax.f32 %v3106, %v3107
    %v3109 = vmax.f32 %v3104, %v3105
    %v3110 = vmax.f32 %v3108, %v3109
    %3111 = vmax.xlane.f32.xlu0 %v3110
    %v3112 = vpop.xlane.xlu0 %3111
    %v3113 = vsub.f32 %v3068, %v3112
    %v3114 = vsub.f32 %v3069, %v3112
    %v3115 = vsub.f32 %v3070, %v3112
    %v3116 = vsub.f32 %v3071, %v3112
    %v3117 = vsub.f32 %v3072, %v3112
    %v3118 = vsub.f32 %v3073, %v3112
    %v3119 = vsub.f32 %v3074, %v3112
    %v3120 = vsub.f32 %v3075, %v3112
    %v3121 = vsub.f32 %v3076, %v3112
    %v3122 = vsub.f32 %v3077, %v3112
    %v3123 = vsub.f32 %v3078, %v3112
    %v3124 = vsub.f32 %v3079, %v3112
    %v3125 = vsub.f32 %v3080, %v3112
    %v3126 = vsub.f32 %v3081, %v3112
    %v3127 = vsub.f32 %v3082, %v3112
    %v3128 = vsub.f32 %v3083, %v3112
    %v3129 = vsub.f32 %v3084, %v3112
    %v3130 = vsub.f32 %v3085, %v3112
    %v3131 = vsub.f32 %v3086, %v3112
    %v3132 = vsub.f32 %v3087, %v3112
    %v3133 = vsub.f32 %v3088, %v3112
    %v3134 = vsub.f32 %v3089, %v3112
    %v3135 = vmul.f32 %v3113, 1.442695
    %v3136 = vpow.pop %v3135
    %v3137 = vmul.f32 %v3114, 1.442695
    %v3138 = vpow.pop %v3137
    %v3139 = vmul.f32 %v3115, 1.442695
    %v3140 = vpow.pop %v3139
    %v3141 = vmul.f32 %v3116, 1.442695
    %v3142 = vpow.pop %v3141
    %v3143 = vmul.f32 %v3117, 1.442695
    %v3144 = vpow.pop %v3143
    %v3145 = vmul.f32 %v3118, 1.442695
    %v3146 = vpow.pop %v3145
    %v3147 = vmul.f32 %v3119, 1.442695
    %v3148 = vpow.pop %v3147
    %v3149 = vmul.f32 %v3120, 1.442695
    %v3150 = vpow.pop %v3149
    %v3151 = vmul.f32 %v3121, 1.442695
    %v3152 = vpow.pop %v3151
    %v3153 = vmul.f32 %v3122, 1.442695
    %v3154 = vpow.pop %v3153
    %v3155 = vmul.f32 %v3123, 1.442695
    %v3156 = vpow.pop %v3155
    %v3157 = vmul.f32 %v3124, 1.442695
    %v3158 = vpow.pop %v3157
    %v3159 = vmul.f32 %v3125, 1.442695
    %v3160 = vpow.pop %v3159
    %v3161 = vmul.f32 %v3126, 1.442695
    %v3162 = vpow.pop %v3161
    %v3163 = vmul.f32 %v3127, 1.442695
    %v3164 = vpow.pop %v3163
    %v3165 = vmul.f32 %v3128, 1.442695
    %v3166 = vpow.pop %v3165
    %v3167 = vmul.f32 %v3129, 1.442695
    %v3168 = vpow.pop %v3167
    %v3169 = vmul.f32 %v3130, 1.442695
    %v3170 = vpow.pop %v3169
    %v3171 = vmul.f32 %v3131, 1.442695
    %v3172 = vpow.pop %v3171
    %v3173 = vmul.f32 %v3132, 1.442695
    %v3174 = vpow.pop %v3173
    %v3175 = vmul.f32 %v3133, 1.442695
    %v3176 = vpow.pop %v3175
    %v3177 = vmul.f32 %v3134, 1.442695
    %v3178 = vpow.pop %v3177
    %v3179 = vadd.f32 %v3136, %v3138
    %v3180 = vadd.f32 %v3179, %v3140
    %v3181 = vadd.f32 %v3180, %v3142
    %v3182 = vadd.f32 %v3181, %v3144
    %v3183 = vadd.f32 %v3182, %v3146
    %v3184 = vadd.f32 %v3183, %v3148
    %v3185 = vadd.f32 %v3184, %v3150
    %v3186 = vadd.f32 %v3185, %v3152
    %v3187 = vadd.f32 %v3186, %v3154
    %v3188 = vadd.f32 %v3187, %v3156
    %v3189 = vadd.f32 %v3188, %v3158
    %v3190 = vadd.f32 %v3189, %v3160
    %v3191 = vadd.f32 %v3190, %v3162
    %v3192 = vadd.f32 %v3191, %v3164
    %v3193 = vadd.f32 %v3192, %v3166
    %v3194 = vadd.f32 %v3193, %v3168
    %v3195 = vadd.f32 %v3194, %v3170
    %v3196 = vadd.f32 %v3195, %v3172
    %v3197 = vadd.f32 %v3196, %v3174
    %v3198 = vadd.f32 %v3197, %v3176
    %v3199 = vadd.f32 %v3198, %v3178
    %3200 = vadd.xlane.f32.xlu0 %v3199
    %v3201 = vpop.xlane.xlu0 %3200
    %v3202 = vlog2.pop %v3201
    %v3203 = vmul.f32 %v3202, 0.6931472
    %v3204 = vsub.f32 %v3203, %v3113
    %v3205 = vsub.f32 %v3203, %v3114
    %v3206 = vsub.f32 %v3203, %v3115
    %v3207 = vsub.f32 %v3203, %v3116
    %v3208 = vsub.f32 %v3203, %v3117
    %v3209 = vsub.f32 %v3203, %v3118
    %v3210 = vsub.f32 %v3203, %v3119
    %v3211 = vsub.f32 %v3203, %v3120
    %v3212 = vsub.f32 %v3203, %v3121
    %v3213 = vsub.f32 %v3203, %v3122
    %v3214 = vsub.f32 %v3203, %v3123
    %v3215 = vsub.f32 %v3203, %v3124
    %v3216 = vsub.f32 %v3203, %v3125
    %v3217 = vsub.f32 %v3203, %v3126
    %v3218 = vsub.f32 %v3203, %v3127
    %v3219 = vsub.f32 %v3203, %v3128
    %v3220 = vsub.f32 %v3203, %v3129
    %v3221 = vsub.f32 %v3203, %v3130
    %v3222 = vsub.f32 %v3203, %v3131
    %v3223 = vsub.f32 %v3203, %v3132
    %v3224 = vsub.f32 %v3203, %v3133
    %v3225 = vsub.f32 %v3203, %v3134
    %v3226 = vmul.f32 %v2914, %v3204
    %v3227 = vmul.f32 %v2915, %v3205
    %v3228 = vmul.f32 %v2916, %v3206
    %v3229 = vmul.f32 %v2917, %v3207
    %v3230 = vmul.f32 %v2918, %v3208
    %v3231 = vmul.f32 %v2919, %v3209
    %v3232 = vmul.f32 %v2920, %v3210
    %v3233 = vmul.f32 %v2921, %v3211
    %v3234 = vmul.f32 %v2922, %v3212
    %v3235 = vmul.f32 %v2923, %v3213
    %v3236 = vmul.f32 %v2924, %v3214
    %v3237 = vmul.f32 %v2925, %v3215
    %v3238 = vmul.f32 %v2926, %v3216
    %v3239 = vmul.f32 %v2927, %v3217
    %v3240 = vmul.f32 %v2928, %v3218
    %v3241 = vmul.f32 %v2929, %v3219
    %v3242 = vmul.f32 %v2930, %v3220
    %v3243 = vmul.f32 %v2931, %v3221
    %v3244 = vmul.f32 %v2932, %v3222
    %v3245 = vmul.f32 %v2933, %v3223
    %v3246 = vmul.f32 %v2934, %v3224
    %v3247 = vmul.f32 %v2935, %v3225
    %v3248 = vadd.f32 %v3226, %v3227
    %v3249 = vadd.f32 %v3248, %v3228
    %v3250 = vadd.f32 %v3249, %v3229
    %v3251 = vadd.f32 %v3250, %v3230
    %v3252 = vadd.f32 %v3251, %v3231
    %v3253 = vadd.f32 %v3252, %v3232
    %v3254 = vadd.f32 %v3253, %v3233
    %v3255 = vadd.f32 %v3254, %v3234
    %v3256 = vadd.f32 %v3255, %v3235
    %v3257 = vadd.f32 %v3256, %v3236
    %v3258 = vadd.f32 %v3257, %v3237
    %v3259 = vadd.f32 %v3258, %v3238
    %v3260 = vadd.f32 %v3259, %v3239
    %v3261 = vadd.f32 %v3260, %v3240
    %v3262 = vadd.f32 %v3261, %v3241
    %v3263 = vadd.f32 %v3262, %v3242
    %v3264 = vadd.f32 %v3263, %v3243
    %v3265 = vadd.f32 %v3264, %v3244
    %v3266 = vadd.f32 %v3265, %v3245
    %v3267 = vadd.f32 %v3266, %v3246
    %v3268 = vadd.f32 %v3267, %v3247
    %3269 = vadd.xlane.f32.xlu0 %v3268
    %v3270 = vpop.xlane.xlu0 %3269
    %v3271 = vrot.slane %v3270, 4
    %v3272 = vadd.f32 %v3270, %v3271
    %v3273 = vrot.slane %v3272, 2
    %v3274 = vadd.f32 %v3272, %v3273
    %v3275 = vrot.slane %v3274, 1
    %v3276 = vadd.f32 %v3274, %v3275
    %v3277 = vmul.f32 %v3276, 0.125
    %vm3278 = vcmp.eq.f32.partialorder %v3068, %v3112
    %vm3279 = vcmp.eq.f32.partialorder %v3069, %v3112
    %vm3280 = vcmp.eq.f32.partialorder %v3070, %v3112
    %vm3281 = vcmp.eq.f32.partialorder %v3071, %v3112
    %vm3282 = vcmp.eq.f32.partialorder %v3072, %v3112
    %vm3283 = vcmp.eq.f32.partialorder %v3073, %v3112
    %vm3284 = vcmp.eq.f32.partialorder %v3074, %v3112
    %vm3285 = vcmp.eq.f32.partialorder %v3075, %v3112
    %vm3286 = vcmp.eq.f32.partialorder %v3076, %v3112
    %vm3287 = vcmp.eq.f32.partialorder %v3077, %v3112
    %vm3288 = vcmp.eq.f32.partialorder %v3078, %v3112
    %vm3289 = vcmp.eq.f32.partialorder %v3079, %v3112
    %vm3290 = vcmp.eq.f32.partialorder %v3080, %v3112
    %vm3291 = vcmp.eq.f32.partialorder %v3081, %v3112
    %vm3292 = vcmp.eq.f32.partialorder %v3082, %v3112
    %vm3293 = vcmp.eq.f32.partialorder %v3083, %v3112
    %vm3294 = vcmp.eq.f32.partialorder %v3084, %v3112
    %vm3295 = vcmp.eq.f32.partialorder %v3085, %v3112
    %vm3296 = vcmp.eq.f32.partialorder %v3086, %v3112
    %vm3297 = vcmp.eq.f32.partialorder %v3087, %v3112
    %vm3298 = vcmp.eq.f32.partialorder %v3088, %v3112
    %vm3299 = vcmp.eq.f32.partialorder %v3089, %v3112
    %v3300 = vsel %vm3278, %v205, 2816
    %v3301 = vsel %vm3279, %v2846, 2816
    %v3302 = vsel %vm3280, %v2847, 2816
    %v3303 = vsel %vm3281, %v2848, 2816
    %v3304 = vsel %vm3282, %v2849, 2816
    %v3305 = vsel %vm3283, %v2850, 2816
    %v3306 = vsel %vm3284, %v2851, 2816
    %v3307 = vsel %vm3285, %v2852, 2816
    %v3308 = vsel %vm3286, %v2853, 2816
    %v3309 = vsel %vm3287, %v2854, 2816
    %v3310 = vsel %vm3288, %v2855, 2816
    %v3311 = vsel %vm3289, %v2856, 2816
    %v3312 = vsel %vm3290, %v2857, 2816
    %v3313 = vsel %vm3291, %v2858, 2816
    %v3314 = vsel %vm3292, %v2859, 2816
    %v3315 = vsel %vm3293, %v2860, 2816
    %v3316 = vsel %vm3294, %v2861, 2816
    %v3317 = vsel %vm3295, %v2862, 2816
    %v3318 = vsel %vm3296, %v2863, 2816
    %v3319 = vsel %vm3297, %v2864, 2816
    %v3320 = vsel %vm3298, %v2865, 2816
    %v3321 = vsel %vm3299, %v2866, 2816
    %vm3322 = vcmp.lt.s32.totalorder %v3300, %v3304
    %v3323 = vsel %vm3322, %v3300, %v3304
    %vm3324 = vcmp.lt.s32.totalorder %v3301, %v3305
    %v3325 = vsel %vm3324, %v3301, %v3305
    %vm3326 = vcmp.lt.s32.totalorder %v3302, %v3306
    %v3327 = vsel %vm3326, %v3302, %v3306
    %vm3328 = vcmp.lt.s32.totalorder %v3303, %v3307
    %v3329 = vsel %vm3328, %v3303, %v3307
    %vm3330 = vcmp.lt.s32.totalorder %v3323, %v3308
    %v3331 = vsel %vm3330, %v3323, %v3308
    %vm3332 = vcmp.lt.s32.totalorder %v3325, %v3309
    %v3333 = vsel %vm3332, %v3325, %v3309
    %vm3334 = vcmp.lt.s32.totalorder %v3327, %v3310
    %v3335 = vsel %vm3334, %v3327, %v3310
    %vm3336 = vcmp.lt.s32.totalorder %v3329, %v3311
    %v3337 = vsel %vm3336, %v3329, %v3311
    %vm3338 = vcmp.lt.s32.totalorder %v3331, %v3312
    %v3339 = vsel %vm3338, %v3331, %v3312
    %vm3340 = vcmp.lt.s32.totalorder %v3333, %v3313
    %v3341 = vsel %vm3340, %v3333, %v3313
    %vm3342 = vcmp.lt.s32.totalorder %v3335, %v3314
    %v3343 = vsel %vm3342, %v3335, %v3314
    %vm3344 = vcmp.lt.s32.totalorder %v3337, %v3315
    %v3345 = vsel %vm3344, %v3337, %v3315
    %vm3346 = vcmp.lt.s32.totalorder %v3339, %v3316
    %v3347 = vsel %vm3346, %v3339, %v3316
    %vm3348 = vcmp.lt.s32.totalorder %v3341, %v3317
    %v3349 = vsel %vm3348, %v3341, %v3317
    %vm3350 = vcmp.lt.s32.totalorder %v3343, %v3318
    %v3351 = vsel %vm3350, %v3343, %v3318
    %vm3352 = vcmp.lt.s32.totalorder %v3345, %v3319
    %v3353 = vsel %vm3352, %v3345, %v3319
    %vm3354 = vcmp.lt.s32.totalorder %v3347, %v3320
    %v3355 = vsel %vm3354, %v3347, %v3320
    %vm3356 = vcmp.lt.s32.totalorder %v3349, %v3321
    %v3357 = vsel %vm3356, %v3349, %v3321
    %vm3358 = vcmp.lt.s32.totalorder %v3355, %v3357
    %v3359 = vsel %vm3358, %v3355, %v3357
    %vm3360 = vcmp.lt.s32.totalorder %v3351, %v3353
    %v3361 = vsel %vm3360, %v3351, %v3353
    %vm3362 = vcmp.lt.s32.totalorder %v3359, %v3361
    %v3363 = vsel %vm3362, %v3359, %v3361
    %v3364 = vand.u32 %v3363, 65535
    %v3365 = vshra.s32 %v3363, 16
    %v3366 = vcvt.s32.f32 %v3364
    %v3367 = vcvt.s32.f32 %v3365
    %3368 = vmin.xlane.f32.xlu0 %v3367
    %v3369 = vpop.xlane.xlu0 %3368
    %vm3370 = vcmp.eq.f32.partialorder %v3367, %v3369
    %v3371 = vsel %vm3370, %v3366, inf
    %3372 = vmin.xlane.f32.xlu0 %v3371
    %v3373 = vpop.xlane.xlu0 %3372
    %v3374 = vcvt.f32.s32 %v3373
    %v3375 = vcvt.f32.s32 %v3369
    %v3376 = vshll.u32 %v3375, 16
    %v3377 = vadd.s32 %v3376, %v3374
    %vm3378 = vcmp.eq.s32.totalorder %v3377, %v2845
    %v3379 = vsel %vm3378, 1, 0
    %v3380 = vcvt.s32.f32 %v3379
    %vm3381 = vcmask 7168
    %v3382 = vsel %vm3381, %v3380, 0.0
    %v3383 = vrot.slane %v3382, 4
    %v3384 = vadd.f32 %v3382, %v3383
    %v3385 = vrot.slane %v3384, 2
    %v3386 = vadd.f32 %v3384, %v3385
    %v3387 = vrot.slane %v3386, 1
    %v3388 = vadd.f32 %v3386, %v3387
    %v3389 = vmul.f32 %v3388, 12.5
    %v3390 = vadd.f32 %v257, %v3277
    %vm3391 = vcmask 0
    %3392 = vst.msk [vmem:[#allocation11] sm:$0x1] %vm3391, %v3390
    %3393 = vst.msk [vmem:[#allocation12] sm:$0x1] %vm3391, %v3389
    // Predicated region
    $region46: #{tpu_custom_call.1} parent=1 // pred_check
      _
    $region47: #{tpu_custom_call.1} parent=1 // pred_check_branch
      %3395 = sbr.rel (0) target = $region49
    $region48: #{tpu_custom_call.1} parent=1 // pred_region
      %s3397 = ssub.s32 16, 16
      %3398 = vsyncadd [#allocation4], %s3397
      %s3400 = sshll.u32 [#allocation11], 4
      %s3401 = int_to_ptr.vmem [resolvable:$true] %s3400
      %3403 = dma.vmem_to_hbm [thread:$0]  %s3401, 16, %s6, [#allocation4]
    $region49: #{tpu_custom_call.1} parent=1 // pred_fallthru
      _
    // Predicated region
    $region50: #{tpu_custom_call.1} parent=1 // pred_check
      _
    $region51: #{tpu_custom_call.1} parent=1 // pred_check_branch
      %3405 = sbr.rel (0) target = $region53
    $region52: #{tpu_custom_call.1} parent=1 // pred_region
      %s3407 = ssub.s32 16, 16
      %3408 = vsyncadd [#allocation13], %s3407
      %s3410 = sshll.u32 [#allocation12], 4
      %s3411 = int_to_ptr.vmem [resolvable:$true] %s3410
      %3413 = dma.vmem_to_hbm [thread:$0]  %s3411, 16, %s7, [#allocation13]
    $region53: #{tpu_custom_call.1} parent=1 // pred_fallthru
      _
    // Predicated region
    $region54: #{tpu_custom_call.1} parent=1 // pred_check
      _
    $region55: #{tpu_custom_call.1} parent=1 // pred_check_branch
      %3415 = sbr.rel (0) target = $region57
    $region56: #{tpu_custom_call.1} parent=1 // pred_region
      %3416 = dma.done [#allocation4], 16
    $region57: #{tpu_custom_call.1} parent=1 // pred_fallthru
      _
    // Predicated region
    $region58: #{tpu_custom_call.1} parent=1 // pred_check
      _
    $region59: #{tpu_custom_call.1} parent=1 // pred_check_branch
      %3418 = sbr.rel (0) target = $region61
    $region60: #{tpu_custom_call.1} parent=1 // pred_region
      %3419 = dma.done [#allocation13], 16
    $region61: #{tpu_custom_call.1} parent=1 // pred_fallthru
      _
    %3420 = vsyncpa [#allocation3], 1
    %3421 = vsyncpa [#allocation6], 1
    %3422 = vsyncpa [#allocation9], 1
    %3423 = vsyncpa [#allocation4], 1
    %3424 = vsyncpa [#allocation13], 1

</llo_original>
